<compile_context>
chip_gen: v5e
topology: v5e:2x2
jax: 0.10.0
libtpu: 0.0.40
codegen_flags: <defaults>
</compile_context>

<pallas_src>
import functools

import jax
import jax.numpy as jnp
from jax.experimental import pallas as pl
from jax.experimental.pallas import tpu as pltpu

D_IN = 28 * 28        # 784
D_IN_PAD = 896        # 7 * 128: lane-dense K for the first matmul
D_HID = 512
D_OUT = 10
D_OUT_PAD = 128       # lane-dense head width; sliced to 10 outside the kernel


def _ln_relu(h, gamma, beta, eps=1e-5):
    """One-pass LayerNorm (sum & sum-of-squares) + ReLU, computed in f32."""
    n = h.shape[-1]
    s = jnp.sum(h, axis=-1, keepdims=True)
    ss = jnp.sum(h * h, axis=-1, keepdims=True)
    mu = s * (1.0 / n)
    var = ss * (1.0 / n) - mu * mu
    inv = jax.lax.rsqrt(var + eps)            # EUP op: effectively free
    return jnp.maximum((h - mu) * inv * gamma + beta, 0.0)


def mlp_kernel(x_ref,
               w1_ref, b1_ref, g1_ref, be1_ref,
               w2_ref, b2_ref, g2_ref, be2_ref,
               w3_ref, b3_ref, g3_ref, be3_ref,
               w4_ref, b4_ref,
               o_ref):
    # block 1: Linear(784->512, K padded to 896) -> LN -> ReLU -> (Dropout = id)
    h = jnp.dot(x_ref[...], w1_ref[...],
                preferred_element_type=jnp.float32) + b1_ref[...]
    h = _ln_relu(h, g1_ref[...], be1_ref[...])

    # block 2: Linear(512,512) -> LN -> ReLU -> (Dropout = id)
    h = jnp.dot(h.astype(jnp.bfloat16), w2_ref[...],
                preferred_element_type=jnp.float32) + b2_ref[...]
    h = _ln_relu(h, g2_ref[...], be2_ref[...])

    # block 3: Linear(512,512) -> LN -> ReLU
    h = jnp.dot(h.astype(jnp.bfloat16), w3_ref[...],
                preferred_element_type=jnp.float32) + b3_ref[...]
    h = _ln_relu(h, g3_ref[...], be3_ref[...])

    # head: Linear(512, 10) padded to 128 lanes (unmasked vst)
    out = jnp.dot(h.astype(jnp.bfloat16), w4_ref[...],
                  preferred_element_type=jnp.float32) + b4_ref[...]
    o_ref[...] = out.astype(o_ref.dtype)


def _pick_batch_tile(batch):
    """128 on v5e (4x128 MXU, 1 vst slot); up to 256 on v6e/v7x, but keep
    >= 2 grid steps when the batch allows so both v7x TensorCores get work."""
    try:
        kind = jax.devices()[0].device_kind.lower()
    except Exception:  # pragma: no cover - defensive
        kind = ""
    cap = 128 if "v5" in kind else 256
    tb = min(cap, max(8, batch))
    tb = max(8, (tb // 8) * 8)                       # sublane multiple
    if batch > 8 and pl.cdiv(batch, tb) < 2:         # prefer >= 2 grid steps
        tb = max(8, ((batch // 2) // 8) * 8)
    return tb


@functools.partial(jax.jit, static_argnames=("tb", "b_pad"))
def _mlp_pallas(x, params, tb, b_pad):
    (w1, b1, g1, be1, w2, b2, g2, be2, w3, b3, g3, be3, w4, b4) = params
    B = x.shape[0]

    # pad batch to a tile multiple and K to 896; cast activations to bf16
    xp = jnp.pad(x, ((0, b_pad - B), (0, D_IN_PAD - D_IN))).astype(jnp.bfloat16)

    def full_spec(arr):
        # grid-invariant parameter block: same block every step (not re-DMA'd)
        return pl.BlockSpec(arr.shape, lambda i, n=arr.ndim: (0,) * n)

    grid = (b_pad // tb,)
    out = pl.pallas_call(
        mlp_kernel,
        out_shape=jax.ShapeDtypeStruct((b_pad, D_OUT_PAD), jnp.float32),
        grid_spec=pltpu.PrefetchScalarGridSpec(
            num_scalar_prefetch=0,
            grid=grid,
            in_specs=[
                pl.BlockSpec((tb, D_IN_PAD), lambda i: (i, 0)),   # x batch tile
                full_spec(w1), full_spec(b1), full_spec(g1), full_spec(be1),
                full_spec(w2), full_spec(b2), full_spec(g2), full_spec(be2),
                full_spec(w3), full_spec(b3), full_spec(g3), full_spec(be3),
                full_spec(w4), full_spec(b4),
            ],
            out_specs=pl.BlockSpec((tb, D_OUT_PAD), lambda i: (i, 0)),
        ),
        compiler_params=pltpu.CompilerParams(
            dimension_semantics=("parallel",),
        ),
    )(xp, w1, b1, g1, be1, w2, b2, g2, be2, w3, b3, g3, be3, w4, b4)
    return out


def mlp_forward(x, params, tb=None):
    B = x.shape[0]
    if tb is None:
        tb = _pick_batch_tile(B)
    b_pad = ((B + tb - 1) // tb) * tb
    out = _mlp_pallas(x, params, tb, b_pad)
    return out[:B, :D_OUT]


def init_params(key):
    """Deterministic synthetic params. Weights stored as (in, out) in bf16;
    biases / LayerNorm params in f32 as (1, F) rows for lane broadcast."""
    ks = jax.random.split(key, 8)

    def linear(kw, kb, fan_in, fan_out):
        bound = 1.0 / (fan_in ** 0.5)
        w = jax.random.uniform(kw, (fan_in, fan_out), jnp.float32, -bound, bound)
        b = jax.random.uniform(kb, (1, fan_out), jnp.float32, -bound, bound)
        return w, b

    w1, b1 = linear(ks[0], ks[1], D_IN, D_HID)
    w2, b2 = linear(ks[2], ks[3], D_HID, D_HID)
    w3, b3 = linear(ks[4], ks[5], D_HID, D_HID)
    w4, b4 = linear(ks[6], ks[7], D_HID, D_OUT)

    # LayerNorm affine params (PyTorch default init: ones / zeros)
    g1 = jnp.ones((1, D_HID), jnp.float32); be1 = jnp.zeros((1, D_HID), jnp.float32)
    g2 = jnp.ones((1, D_HID), jnp.float32); be2 = jnp.zeros((1, D_HID), jnp.float32)
    g3 = jnp.ones((1, D_HID), jnp.float32); be3 = jnp.zeros((1, D_HID), jnp.float32)

    # zero-pad w1 rows (K: 784 -> 896) and head columns (10 -> 128); cast to bf16
    w1p = jnp.zeros((D_IN_PAD, D_HID), jnp.float32).at[:D_IN, :].set(w1)
    w4p = jnp.zeros((D_HID, D_OUT_PAD), jnp.float32).at[:, :D_OUT].set(w4)
    b4p = jnp.zeros((1, D_OUT_PAD), jnp.float32).at[:, :D_OUT].set(b4)

    to_bf16 = lambda w: w.astype(jnp.bfloat16)
    return (to_bf16(w1p), b1, g1, be1,
            to_bf16(w2), b2, g2, be2,
            to_bf16(w3), b3, g3, be3,
            to_bf16(w4p), b4p)


def reference_forward(x, params):
    """Pure-JAX reference mirroring the kernel's bf16-matmul / f32-accumulate
    numerics (LayerNorm in the standard two-pass form)."""
    (w1, b1, g1, be1, w2, b2, g2, be2, w3, b3, g3, be3, w4, b4) = params

    def ln(h, g, b, eps=1e-5):
        mu = jnp.mean(h, -1, keepdims=True)
        var = jnp.mean((h - mu) ** 2, -1, keepdims=True)
        return (h - mu) / jnp.sqrt(var + eps) * g + b

    xb = jnp.pad(x, ((0, 0), (0, D_IN_PAD - D_IN))).astype(jnp.bfloat16)
    h = jnp.maximum(ln(jnp.dot(xb, w1, preferred_element_type=jnp.float32) + b1,
                       g1, be1), 0.0)
    h = jnp.maximum(ln(jnp.dot(h.astype(jnp.bfloat16), w2,
                               preferred_element_type=jnp.float32) + b2,
                       g2, be2), 0.0)
    h = jnp.maximum(ln(jnp.dot(h.astype(jnp.bfloat16), w3,
                               preferred_element_type=jnp.float32) + b3,
                       g3, be3), 0.0)
    out = jnp.dot(h.astype(jnp.bfloat16), w4,
                  preferred_element_type=jnp.float32) + b4
    return out[:, :D_OUT]


if __name__ == "__main__":
    key = jax.random.PRNGKey(0)
    k_x, k_p = jax.random.split(key)

    B = 16  # small batch; tile picker still yields a 2-step grid here
    x = jax.random.normal(k_x, (B, D_IN), jnp.float32)
    params = init_params(k_p)

    out = mlp_forward(x, params)
    out = jax.block_until_ready(out)

    ref = reference_forward(x, params)
    assert out.shape == (B, D_OUT), out.shape
    assert jnp.allclose(out, ref, atol=2e-2, rtol=2e-2), float(
        jnp.max(jnp.abs(out - ref))
    )
    print("KERNEL_OK")
</pallas_src>

<mosaic_0001>
module attributes {stable_mosaic.version = 11 : i64} {
  func.func @mlp_kernel(%arg0: i32, %arg1: memref<8x896xbf16, #tpu.memory_space<vmem>>, %arg2: memref<896x512xbf16, #tpu.memory_space<vmem>>, %arg3: memref<1x512xf32, #tpu.memory_space<vmem>>, %arg4: memref<1x512xf32, #tpu.memory_space<vmem>>, %arg5: memref<1x512xf32, #tpu.memory_space<vmem>>, %arg6: memref<512x512xbf16, #tpu.memory_space<vmem>>, %arg7: memref<1x512xf32, #tpu.memory_space<vmem>>, %arg8: memref<1x512xf32, #tpu.memory_space<vmem>>, %arg9: memref<1x512xf32, #tpu.memory_space<vmem>>, %arg10: memref<512x512xbf16, #tpu.memory_space<vmem>>, %arg11: memref<1x512xf32, #tpu.memory_space<vmem>>, %arg12: memref<1x512xf32, #tpu.memory_space<vmem>>, %arg13: memref<1x512xf32, #tpu.memory_space<vmem>>, %arg14: memref<512x128xbf16, #tpu.memory_space<vmem>>, %arg15: memref<1x128xf32, #tpu.memory_space<vmem>>, %arg16: memref<8x128xf32, #tpu.memory_space<vmem>>) attributes {dimension_semantics = [#tpu.dimension_semantics<parallel>], iteration_bounds = array<i64: 2>, scalar_prefetch = 0 : i64, scratch_operands = 0 : i64, tpu.core_type = #tpu.core_type<tc>, window_params = [{transform_indices = @transform_0, window_bounds = array<i64: 8, 896>}, {pipeline_mode = #tpu.pipeline_mode<synchronous>, transform_indices = @transform_1, window_bounds = array<i64: 896, 512>}, {pipeline_mode = #tpu.pipeline_mode<synchronous>, transform_indices = @transform_2, window_bounds = array<i64: 1, 512>}, {pipeline_mode = #tpu.pipeline_mode<synchronous>, transform_indices = @transform_3, window_bounds = array<i64: 1, 512>}, {pipeline_mode = #tpu.pipeline_mode<synchronous>, transform_indices = @transform_4, window_bounds = array<i64: 1, 512>}, {pipeline_mode = #tpu.pipeline_mode<synchronous>, transform_indices = @transform_5, window_bounds = array<i64: 512, 512>}, {pipeline_mode = #tpu.pipeline_mode<synchronous>, transform_indices = @transform_6, window_bounds = array<i64: 1, 512>}, {pipeline_mode = #tpu.pipeline_mode<synchronous>, transform_indices = @transform_7, window_bounds = array<i64: 1, 512>}, {pipeline_mode = #tpu.pipeline_mode<synchronous>, transform_indices = @transform_8, window_bounds = array<i64: 1, 512>}, {pipeline_mode = #tpu.pipeline_mode<synchronous>, transform_indices = @transform_9, window_bounds = array<i64: 512, 512>}, {pipeline_mode = #tpu.pipeline_mode<synchronous>, transform_indices = @transform_10, window_bounds = array<i64: 1, 512>}, {pipeline_mode = #tpu.pipeline_mode<synchronous>, transform_indices = @transform_11, window_bounds = array<i64: 1, 512>}, {pipeline_mode = #tpu.pipeline_mode<synchronous>, transform_indices = @transform_12, window_bounds = array<i64: 1, 512>}, {pipeline_mode = #tpu.pipeline_mode<synchronous>, transform_indices = @transform_13, window_bounds = array<i64: 512, 128>}, {pipeline_mode = #tpu.pipeline_mode<synchronous>, transform_indices = @transform_14, window_bounds = array<i64: 1, 128>}, {transform_indices = @transform_15, window_bounds = array<i64: 8, 128>}]} {
    %c0 = arith.constant 0 : index
    %c0_0 = arith.constant 0 : index
    %0 = vector.load %arg1[%c0, %c0_0] : memref<8x896xbf16, #tpu.memory_space<vmem>>, vector<8x896xbf16>
    %c0_1 = arith.constant 0 : index
    %c0_2 = arith.constant 0 : index
    %1 = vector.load %arg2[%c0_1, %c0_2] : memref<896x512xbf16, #tpu.memory_space<vmem>>, vector<896x512xbf16>
    %cst = arith.constant dense<0.000000e+00> : vector<8x512xf32>
    %2 = tpu.matmul %0, %1, %cst {dimension_numbers = #tpu.dot_dimension_numbers<[1], [0], [0], [1], [0, 0, 1, 1], [], []>} : vector<8x896xbf16>, vector<896x512xbf16>, vector<8x512xf32> -> vector<8x512xf32>
    %c0_3 = arith.constant 0 : index
    %c0_4 = arith.constant 0 : index
    %3 = vector.load %arg3[%c0_3, %c0_4] : memref<1x512xf32, #tpu.memory_space<vmem>>, vector<1x512xf32>
    %4 = vector.broadcast %3 : vector<1x512xf32> to vector<8x512xf32>
    %5 = arith.addf %2, %4 : vector<8x512xf32>
    %c0_5 = arith.constant 0 : index
    %c0_6 = arith.constant 0 : index
    %6 = vector.load %arg4[%c0_5, %c0_6] : memref<1x512xf32, #tpu.memory_space<vmem>>, vector<1x512xf32>
    %c0_7 = arith.constant 0 : index
    %c0_8 = arith.constant 0 : index
    %7 = vector.load %arg5[%c0_7, %c0_8] : memref<1x512xf32, #tpu.memory_space<vmem>>, vector<1x512xf32>
    %cst_9 = arith.constant dense<0.000000e+00> : vector<8xf32>
    %8 = vector.multi_reduction <add>, %5, %cst_9 [1] : vector<8x512xf32> to vector<8xf32>
    %9 = vector.shape_cast %8 : vector<8xf32> to vector<8x1xf32>
    %10 = arith.mulf %5, %5 : vector<8x512xf32>
    %cst_10 = arith.constant dense<0.000000e+00> : vector<8xf32>
    %11 = vector.multi_reduction <add>, %10, %cst_10 [1] : vector<8x512xf32> to vector<8xf32>
    %12 = vector.shape_cast %11 : vector<8xf32> to vector<8x1xf32>
    %cst_11 = arith.constant 0.001953125 : f32
    %13 = vector.broadcast %cst_11 : f32 to vector<8x1xf32>
    %14 = arith.mulf %9, %13 : vector<8x1xf32>
    %cst_12 = arith.constant 0.001953125 : f32
    %15 = vector.broadcast %cst_12 : f32 to vector<8x1xf32>
    %16 = arith.mulf %12, %15 : vector<8x1xf32>
    %17 = arith.mulf %14, %14 : vector<8x1xf32>
    %18 = arith.subf %16, %17 : vector<8x1xf32>
    %cst_13 = arith.constant 9.99999974E-6 : f32
    %19 = vector.broadcast %cst_13 : f32 to vector<8x1xf32>
    %20 = arith.addf %18, %19 : vector<8x1xf32>
    %21 = math.rsqrt %20 : vector<8x1xf32>
    %22 = vector.broadcast %14 : vector<8x1xf32> to vector<8x512xf32>
    %23 = arith.subf %5, %22 : vector<8x512xf32>
    %24 = vector.broadcast %21 : vector<8x1xf32> to vector<8x512xf32>
    %25 = arith.mulf %23, %24 : vector<8x512xf32>
    %26 = vector.broadcast %6 : vector<1x512xf32> to vector<8x512xf32>
    %27 = arith.mulf %25, %26 : vector<8x512xf32>
    %28 = vector.broadcast %7 : vector<1x512xf32> to vector<8x512xf32>
    %29 = arith.addf %27, %28 : vector<8x512xf32>
    %cst_14 = arith.constant 0.000000e+00 : f32
    %30 = vector.broadcast %cst_14 : f32 to vector<8x512xf32>
    %31 = arith.maximumf %29, %30 : vector<8x512xf32>
    %32 = arith.truncf %31 : vector<8x512xf32> to vector<8x512xbf16>
    %c0_15 = arith.constant 0 : index
    %c0_16 = arith.constant 0 : index
    %33 = vector.load %arg6[%c0_15, %c0_16] : memref<512x512xbf16, #tpu.memory_space<vmem>>, vector<512x512xbf16>
    %cst_17 = arith.constant dense<0.000000e+00> : vector<8x512xf32>
    %34 = tpu.matmul %32, %33, %cst_17 {dimension_numbers = #tpu.dot_dimension_numbers<[1], [0], [0], [1], [0, 0, 1, 1], [], []>} : vector<8x512xbf16>, vector<512x512xbf16>, vector<8x512xf32> -> vector<8x512xf32>
    %c0_18 = arith.constant 0 : index
    %c0_19 = arith.constant 0 : index
    %35 = vector.load %arg7[%c0_18, %c0_19] : memref<1x512xf32, #tpu.memory_space<vmem>>, vector<1x512xf32>
    %36 = vector.broadcast %35 : vector<1x512xf32> to vector<8x512xf32>
    %37 = arith.addf %34, %36 : vector<8x512xf32>
    %c0_20 = arith.constant 0 : index
    %c0_21 = arith.constant 0 : index
    %38 = vector.load %arg8[%c0_20, %c0_21] : memref<1x512xf32, #tpu.memory_space<vmem>>, vector<1x512xf32>
    %c0_22 = arith.constant 0 : index
    %c0_23 = arith.constant 0 : index
    %39 = vector.load %arg9[%c0_22, %c0_23] : memref<1x512xf32, #tpu.memory_space<vmem>>, vector<1x512xf32>
    %cst_24 = arith.constant dense<0.000000e+00> : vector<8xf32>
    %40 = vector.multi_reduction <add>, %37, %cst_24 [1] : vector<8x512xf32> to vector<8xf32>
    %41 = vector.shape_cast %40 : vector<8xf32> to vector<8x1xf32>
    %42 = arith.mulf %37, %37 : vector<8x512xf32>
    %cst_25 = arith.constant dense<0.000000e+00> : vector<8xf32>
    %43 = vector.multi_reduction <add>, %42, %cst_25 [1] : vector<8x512xf32> to vector<8xf32>
    %44 = vector.shape_cast %43 : vector<8xf32> to vector<8x1xf32>
    %cst_26 = arith.constant 0.001953125 : f32
    %45 = vector.broadcast %cst_26 : f32 to vector<8x1xf32>
    %46 = arith.mulf %41, %45 : vector<8x1xf32>
    %cst_27 = arith.constant 0.001953125 : f32
    %47 = vector.broadcast %cst_27 : f32 to vector<8x1xf32>
    %48 = arith.mulf %44, %47 : vector<8x1xf32>
    %49 = arith.mulf %46, %46 : vector<8x1xf32>
    %50 = arith.subf %48, %49 : vector<8x1xf32>
    %cst_28 = arith.constant 9.99999974E-6 : f32
    %51 = vector.broadcast %cst_28 : f32 to vector<8x1xf32>
    %52 = arith.addf %50, %51 : vector<8x1xf32>
    %53 = math.rsqrt %52 : vector<8x1xf32>
    %54 = vector.broadcast %46 : vector<8x1xf32> to vector<8x512xf32>
    %55 = arith.subf %37, %54 : vector<8x512xf32>
    %56 = vector.broadcast %53 : vector<8x1xf32> to vector<8x512xf32>
    %57 = arith.mulf %55, %56 : vector<8x512xf32>
    %58 = vector.broadcast %38 : vector<1x512xf32> to vector<8x512xf32>
    %59 = arith.mulf %57, %58 : vector<8x512xf32>
    %60 = vector.broadcast %39 : vector<1x512xf32> to vector<8x512xf32>
    %61 = arith.addf %59, %60 : vector<8x512xf32>
    %cst_29 = arith.constant 0.000000e+00 : f32
    %62 = vector.broadcast %cst_29 : f32 to vector<8x512xf32>
    %63 = arith.maximumf %61, %62 : vector<8x512xf32>
    %64 = arith.truncf %63 : vector<8x512xf32> to vector<8x512xbf16>
    %c0_30 = arith.constant 0 : index
    %c0_31 = arith.constant 0 : index
    %65 = vector.load %arg10[%c0_30, %c0_31] : memref<512x512xbf16, #tpu.memory_space<vmem>>, vector<512x512xbf16>
    %cst_32 = arith.constant dense<0.000000e+00> : vector<8x512xf32>
    %66 = tpu.matmul %64, %65, %cst_32 {dimension_numbers = #tpu.dot_dimension_numbers<[1], [0], [0], [1], [0, 0, 1, 1], [], []>} : vector<8x512xbf16>, vector<512x512xbf16>, vector<8x512xf32> -> vector<8x512xf32>
    %c0_33 = arith.constant 0 : index
    %c0_34 = arith.constant 0 : index
    %67 = vector.load %arg11[%c0_33, %c0_34] : memref<1x512xf32, #tpu.memory_space<vmem>>, vector<1x512xf32>
    %68 = vector.broadcast %67 : vector<1x512xf32> to vector<8x512xf32>
    %69 = arith.addf %66, %68 : vector<8x512xf32>
    %c0_35 = arith.constant 0 : index
    %c0_36 = arith.constant 0 : index
    %70 = vector.load %arg12[%c0_35, %c0_36] : memref<1x512xf32, #tpu.memory_space<vmem>>, vector<1x512xf32>
    %c0_37 = arith.constant 0 : index
    %c0_38 = arith.constant 0 : index
    %71 = vector.load %arg13[%c0_37, %c0_38] : memref<1x512xf32, #tpu.memory_space<vmem>>, vector<1x512xf32>
    %cst_39 = arith.constant dense<0.000000e+00> : vector<8xf32>
    %72 = vector.multi_reduction <add>, %69, %cst_39 [1] : vector<8x512xf32> to vector<8xf32>
    %73 = vector.shape_cast %72 : vector<8xf32> to vector<8x1xf32>
    %74 = arith.mulf %69, %69 : vector<8x512xf32>
    %cst_40 = arith.constant dense<0.000000e+00> : vector<8xf32>
    %75 = vector.multi_reduction <add>, %74, %cst_40 [1] : vector<8x512xf32> to vector<8xf32>
    %76 = vector.shape_cast %75 : vector<8xf32> to vector<8x1xf32>
    %cst_41 = arith.constant 0.001953125 : f32
    %77 = vector.broadcast %cst_41 : f32 to vector<8x1xf32>
    %78 = arith.mulf %73, %77 : vector<8x1xf32>
    %cst_42 = arith.constant 0.001953125 : f32
    %79 = vector.broadcast %cst_42 : f32 to vector<8x1xf32>
    %80 = arith.mulf %76, %79 : vector<8x1xf32>
    %81 = arith.mulf %78, %78 : vector<8x1xf32>
    %82 = arith.subf %80, %81 : vector<8x1xf32>
    %cst_43 = arith.constant 9.99999974E-6 : f32
    %83 = vector.broadcast %cst_43 : f32 to vector<8x1xf32>
    %84 = arith.addf %82, %83 : vector<8x1xf32>
    %85 = math.rsqrt %84 : vector<8x1xf32>
    %86 = vector.broadcast %78 : vector<8x1xf32> to vector<8x512xf32>
    %87 = arith.subf %69, %86 : vector<8x512xf32>
    %88 = vector.broadcast %85 : vector<8x1xf32> to vector<8x512xf32>
    %89 = arith.mulf %87, %88 : vector<8x512xf32>
    %90 = vector.broadcast %70 : vector<1x512xf32> to vector<8x512xf32>
    %91 = arith.mulf %89, %90 : vector<8x512xf32>
    %92 = vector.broadcast %71 : vector<1x512xf32> to vector<8x512xf32>
    %93 = arith.addf %91, %92 : vector<8x512xf32>
    %cst_44 = arith.constant 0.000000e+00 : f32
    %94 = vector.broadcast %cst_44 : f32 to vector<8x512xf32>
    %95 = arith.maximumf %93, %94 : vector<8x512xf32>
    %96 = arith.truncf %95 : vector<8x512xf32> to vector<8x512xbf16>
    %c0_45 = arith.constant 0 : index
    %c0_46 = arith.constant 0 : index
    %97 = vector.load %arg14[%c0_45, %c0_46] : memref<512x128xbf16, #tpu.memory_space<vmem>>, vector<512x128xbf16>
    %cst_47 = arith.constant dense<0.000000e+00> : vector<8x128xf32>
    %98 = tpu.matmul %96, %97, %cst_47 {dimension_numbers = #tpu.dot_dimension_numbers<[1], [0], [0], [1], [0, 0, 1, 1], [], []>} : vector<8x512xbf16>, vector<512x128xbf16>, vector<8x128xf32> -> vector<8x128xf32>
    %c0_48 = arith.constant 0 : index
    %c0_49 = arith.constant 0 : index
    %99 = vector.load %arg15[%c0_48, %c0_49] : memref<1x128xf32, #tpu.memory_space<vmem>>, vector<1x128xf32>
    %100 = vector.broadcast %99 : vector<1x128xf32> to vector<8x128xf32>
    %101 = arith.addf %98, %100 : vector<8x128xf32>
    %c0_50 = arith.constant 0 : index
    %c0_51 = arith.constant 0 : index
    %102 = vector.load %arg16[%c0_50, %c0_51] : memref<8x128xf32, #tpu.memory_space<vmem>>, vector<8x128xf32>
    tpu.vector_store %arg16[%c0_50, %c0_51], %101 {strides = array<i32>} : memref<8x128xf32, #tpu.memory_space<vmem>>, vector<8x128xf32>,
    return
  }
  func.func @transform_0(%arg0: i32) -> (i32, i32) {
    %c0_i32 = arith.constant 0 : i32
    %c0_i32_0 = arith.constant 0 : i32
    return %arg0, %c0_i32 : i32, i32
  }
  func.func @transform_1(%arg0: i32) -> (i32, i32) {
    %c0_i32 = arith.constant 0 : i32
    %c0_i32_0 = arith.constant 0 : i32
    %c0_i32_1 = arith.constant 0 : i32
    return %c0_i32, %c0_i32_0 : i32, i32
  }
  func.func @transform_2(%arg0: i32) -> (i32, i32) {
    %c0_i32 = arith.constant 0 : i32
    %c0_i32_0 = arith.constant 0 : i32
    %c0_i32_1 = arith.constant 0 : i32
    return %c0_i32, %c0_i32_0 : i32, i32
  }
  func.func @transform_3(%arg0: i32) -> (i32, i32) {
    %c0_i32 = arith.constant 0 : i32
    %c0_i32_0 = arith.constant 0 : i32
    %c0_i32_1 = arith.constant 0 : i32
    return %c0_i32, %c0_i32_0 : i32, i32
  }
  func.func @transform_4(%arg0: i32) -> (i32, i32) {
    %c0_i32 = arith.constant 0 : i32
    %c0_i32_0 = arith.constant 0 : i32
    %c0_i32_1 = arith.constant 0 : i32
    return %c0_i32, %c0_i32_0 : i32, i32
  }
  func.func @transform_5(%arg0: i32) -> (i32, i32) {
    %c0_i32 = arith.constant 0 : i32
    %c0_i32_0 = arith.constant 0 : i32
    %c0_i32_1 = arith.constant 0 : i32
    return %c0_i32, %c0_i32_0 : i32, i32
  }
  func.func @transform_6(%arg0: i32) -> (i32, i32) {
    %c0_i32 = arith.constant 0 : i32
    %c0_i32_0 = arith.constant 0 : i32
    %c0_i32_1 = arith.constant 0 : i32
    return %c0_i32, %c0_i32_0 : i32, i32
  }
  func.func @transform_7(%arg0: i32) -> (i32, i32) {
    %c0_i32 = arith.constant 0 : i32
    %c0_i32_0 = arith.constant 0 : i32
    %c0_i32_1 = arith.constant 0 : i32
    return %c0_i32, %c0_i32_0 : i32, i32
  }
  func.func @transform_8(%arg0: i32) -> (i32, i32) {
    %c0_i32 = arith.constant 0 : i32
    %c0_i32_0 = arith.constant 0 : i32
    %c0_i32_1 = arith.constant 0 : i32
    return %c0_i32, %c0_i32_0 : i32, i32
  }
  func.func @transform_9(%arg0: i32) -> (i32, i32) {
    %c0_i32 = arith.constant 0 : i32
    %c0_i32_0 = arith.constant 0 : i32
    %c0_i32_1 = arith.constant 0 : i32
    return %c0_i32, %c0_i32_0 : i32, i32
  }
  func.func @transform_10(%arg0: i32) -> (i32, i32) {
    %c0_i32 = arith.constant 0 : i32
    %c0_i32_0 = arith.constant 0 : i32
    %c0_i32_1 = arith.constant 0 : i32
    return %c0_i32, %c0_i32_0 : i32, i32
  }
  func.func @transform_11(%arg0: i32) -> (i32, i32) {
    %c0_i32 = arith.constant 0 : i32
    %c0_i32_0 = arith.constant 0 : i32
    %c0_i32_1 = arith.constant 0 : i32
    return %c0_i32, %c0_i32_0 : i32, i32
  }
  func.func @transform_12(%arg0: i32) -> (i32, i32) {
    %c0_i32 = arith.constant 0 : i32
    %c0_i32_0 = arith.constant 0 : i32
    %c0_i32_1 = arith.constant 0 : i32
    return %c0_i32, %c0_i32_0 : i32, i32
  }
  func.func @transform_13(%arg0: i32) -> (i32, i32) {
    %c0_i32 = arith.constant 0 : i32
    %c0_i32_0 = arith.constant 0 : i32
    %c0_i32_1 = arith.constant 0 : i32
    return %c0_i32, %c0_i32_0 : i32, i32
  }
  func.func @transform_14(%arg0: i32) -> (i32, i32) {
    %c0_i32 = arith.constant 0 : i32
    %c0_i32_0 = arith.constant 0 : i32
    %c0_i32_1 = arith.constant 0 : i32
    return %c0_i32, %c0_i32_0 : i32, i32
  }
  func.func @transform_15(%arg0: i32) -> (i32, i32) {
    %c0_i32 = arith.constant 0 : i32
    %c0_i32_0 = arith.constant 0 : i32
    return %arg0, %c0_i32 : i32, i32
  }
}

</mosaic_0001>

<llo_original>
// kernel: _mlp_pallas.1
$region0: #{_mlp_pallas.1}
  #allocation0 [shape = 'u32[]', space=smem, size = 0x4, offset = 0x4, fixed_abs, tag = 'smem constant byte address 0x4 - core index']
  #allocation1 [shape = 'u32[72,128]{1,0:T(1,128)}', space=vmem, size = 0x9000, scoped, tag = 'internal scratch']
  %s0 = inlined_call_operand.vmem [shape: bf16[16,896], index: 0, kind: input, shape index: {}]
  %s1 = inlined_call_operand.hbm [shape: bf16[896,512], index: 1, kind: input, shape index: {}]
  %s2 = inlined_call_operand.vmem [shape: f32[1,512], index: 2, kind: input, shape index: {}]
  %s3 = inlined_call_operand.vmem [shape: f32[1,512], index: 3, kind: input, shape index: {}]
  %s4 = inlined_call_operand.vmem [shape: f32[1,512], index: 4, kind: input, shape index: {}]
  %s5 = inlined_call_operand.hbm [shape: bf16[512,512], index: 5, kind: input, shape index: {}]
  %s6 = inlined_call_operand.vmem [shape: f32[1,512], index: 6, kind: input, shape index: {}]
  %s7 = inlined_call_operand.vmem [shape: f32[1,512], index: 7, kind: input, shape index: {}]
  %s8 = inlined_call_operand.vmem [shape: f32[1,512], index: 8, kind: input, shape index: {}]
  %s9 = inlined_call_operand.hbm [shape: bf16[512,512], index: 9, kind: input, shape index: {}]
  %s10 = inlined_call_operand.vmem [shape: f32[1,512], index: 10, kind: input, shape index: {}]
  %s11 = inlined_call_operand.vmem [shape: f32[1,512], index: 11, kind: input, shape index: {}]
  %s12 = inlined_call_operand.vmem [shape: f32[1,512], index: 12, kind: input, shape index: {}]
  %s13 = inlined_call_operand.vmem [shape: bf16[512,128], index: 13, kind: input, shape index: {}]
  %s14 = inlined_call_operand.vmem [shape: f32[1,128], index: 14, kind: input, shape index: {}]
  %s15 = inlined_call_operand.hbm [shape: f32[16,128], index: 15, kind: output, shape index: {}]
  %s16 = sld [smem:[#allocation0]]
  $region105: #{_mlp_pallas.1} parent=0
    _
  %s18 = ssub.s32 1, %s16
  %s19 = scalar_select 0, %s18, %s16
  $region1: #{_mlp_pallas.1} parent=0
    #allocation2 [shape = 'u8[917504]{0}', space=vmem, size = 0xe0000, scoped, tag = 'input window, operand 1, single buffered']
    #allocation3 [shape = 's32[2]{0}', space=sflag, size = 0x8, scoped, tag = 'scoped memory for _mlp_pallas.1']
    #allocation4 [shape = 's32[2]{0}', space=sflag, size = 0x8, scoped, tag = 'scoped memory for _mlp_pallas.1']
    #allocation5 [shape = 'u8[524288]{0}', space=vmem, size = 0x80000, scoped, tag = 'input window, operand 5, single buffered']
    #allocation6 [shape = 's32[1]{0}', space=sflag, size = 0x4, scoped, tag = 'scoped memory for _mlp_pallas.1']
    #allocation7 [shape = 'u8[524288]{0}', space=vmem, size = 0x80000, scoped, tag = 'input window, operand 9, single buffered']
    #allocation8 [shape = 'u8[8192]{0}', space=vmem, size = 0x2000, scoped, tag = 'output window, operand 0']
    %20 = vsyncpa [#allocation3], 0
    %21 = vsyncpa [#allocation6], 0
    %22 = vsyncpa [#allocation4], 0
    %s23 = scalar_lea.sflag [#allocation4], 1
    %24 = vsyncpa %s23, 0
    loop: start=0, step=1, limit=4
    $region2: #{_mlp_pallas.1} parent=1 // loop_pre_header
      _
    $region3: #{_mlp_pallas.1} parent=1 // loop_header
      %s26 = sphi 0, %s30
      %p27 = scmp.ge.s32.totalorder %s26, 4
      %s36 = sphi 0, %s38
      %s39 = sphi 0, %s36
      %s40 = sphi 0, %s39
      %s56 = sphi 0, %s40
      %s60 = sphi 0, %s60
      %s62 = sphi 0, %s60
      %s63 = sphi 0, %s62
      %s77 = sphi 0, %s63
      %s81 = sphi 0, %s81
      %s83 = sphi 0, %s81
      %s84 = sphi 0, %s83
      %s98 = sphi 0, %s84
      %s102 = sphi 0, %s102
      %s104 = sphi 0, %s102
      %s105 = sphi 0, %s104
      %s119 = sphi 0, %s105
      %s123 = sphi 0, %s123
      %s125 = sphi 0, %s123
      %s126 = sphi 0, %s125
      %s140 = sphi 0, %s126
      %s144 = sphi 0, %s144
      %s146 = sphi 0, %s144
      %s147 = sphi 0, %s146
      %s161 = sphi 0, %s147
      %s165 = sphi 0, %s165
      %s167 = sphi 0, %s165
      %s168 = sphi 0, %s167
      %s182 = sphi 0, %s168
      %s186 = sphi 0, %s186
      %s188 = sphi 0, %s186
      %s189 = sphi 0, %s188
      %s203 = sphi 0, %s189
      %s207 = sphi 0, %s207
      %s209 = sphi 0, %s207
      %s210 = sphi 0, %s209
      %s224 = sphi 0, %s210
      %s228 = sphi 0, %s228
      %s230 = sphi 0, %s228
      %s231 = sphi 0, %s230
      %s245 = sphi 0, %s231
      %s249 = sphi 0, %s249
      %s251 = sphi 0, %s249
      %s252 = sphi 0, %s251
      %s266 = sphi 0, %s252
      %s270 = sphi 0, %s270
      %s272 = sphi 0, %s270
      %s273 = sphi 0, %s272
      %s287 = sphi 0, %s273
      %s291 = sphi 0, %s291
      %s293 = sphi 0, %s291
      %s294 = sphi 0, %s293
      %s308 = sphi 0, %s294
      %s312 = sphi 0, %s312
      %s314 = sphi 0, %s312
      %s315 = sphi 0, %s314
      %s329 = sphi 0, %s315
      %s333 = sphi 0, %s333
      %s335 = sphi 0, %s333
      %s336 = sphi 0, %s335
      %s350 = sphi 0, %s336
      %s356 = sphi 0, %s358
      %s359 = sphi 0, %s356
      %s360 = sphi 0, %s359
      %s376 = sphi 0, %s360
    $region4: #{_mlp_pallas.1} parent=1 // loop_header_branch
      %29 = sbr.rel (%p27) target = $region8
    $region5: #{_mlp_pallas.1} parent=1 // loop_body
      %s31 = ssub.s32 %s26, 1
      %s32 = ssub.s32 %s26, 2
      %s33 = sadd.s32 %s26, 1
      %s34 = ssub.s32 %s26, %s33
      %p35 = scmp.eq.s32.totalorder %s34, 0
      %s37 = sadd.s32 %s36, 1
      %s38 = scalar_select %p35, %s36, %s37
      %p41 = pneg %p35
      %p42 = scmp.eq.s32.totalorder %s26, 1
      %p43 = por %p41, %p42
      %p44 = scmp.ne.s32.totalorder %s36, %s39
      %p45 = scmp.eq.s32.totalorder %s26, 0
      %p46 = por %p44, %p45
      %p47 = scmp.ne.s32.totalorder %s36, %s39
      %p48 = scmp.eq.s32.totalorder %s31, 1
      %p49 = por %p47, %p48
      %p50 = scmp.ne.s32.totalorder %s39, %s40
      %p51 = scmp.eq.s32.totalorder %s31, 0
      %p52 = por %p50, %p51
      %p53 = scmp.ne.s32.totalorder %s39, %s40
      %p54 = scmp.eq.s32.totalorder %s32, 1
      %p55 = por %p53, %p54
      %p57 = scmp.ne.s32.totalorder %s40, %s56
      %p58 = scmp.eq.s32.totalorder %s32, 0
      %p59 = por %p57, %p58
      %s61 = sadd.s32 %s60, 1
      %p64 = scmp.eq.s32.totalorder %s26, 1
      %p65 = scmp.ne.s32.totalorder %s60, %s62
      %p66 = scmp.eq.s32.totalorder %s26, 0
      %p67 = por %p65, %p66
      %p68 = scmp.ne.s32.totalorder %s60, %s62
      %p69 = scmp.eq.s32.totalorder %s31, 1
      %p70 = por %p68, %p69
      %p71 = scmp.ne.s32.totalorder %s62, %s63
      %p72 = scmp.eq.s32.totalorder %s31, 0
      %p73 = por %p71, %p72
      %p74 = scmp.ne.s32.totalorder %s62, %s63
      %p75 = scmp.eq.s32.totalorder %s32, 1
      %p76 = por %p74, %p75
      %p78 = scmp.ne.s32.totalorder %s63, %s77
      %p79 = scmp.eq.s32.totalorder %s32, 0
      %p80 = por %p78, %p79
      %s82 = sadd.s32 %s81, 1
      %p85 = scmp.eq.s32.totalorder %s26, 1
      %p86 = scmp.ne.s32.totalorder %s81, %s83
      %p87 = scmp.eq.s32.totalorder %s26, 0
      %p88 = por %p86, %p87
      %p89 = scmp.ne.s32.totalorder %s81, %s83
      %p90 = scmp.eq.s32.totalorder %s31, 1
      %p91 = por %p89, %p90
      %p92 = scmp.ne.s32.totalorder %s83, %s84
      %p93 = scmp.eq.s32.totalorder %s31, 0
      %p94 = por %p92, %p93
      %p95 = scmp.ne.s32.totalorder %s83, %s84
      %p96 = scmp.eq.s32.totalorder %s32, 1
      %p97 = por %p95, %p96
      %p99 = scmp.ne.s32.totalorder %s84, %s98
      %p100 = scmp.eq.s32.totalorder %s32, 0
      %p101 = por %p99, %p100
      %s103 = sadd.s32 %s102, 1
      %p106 = scmp.eq.s32.totalorder %s26, 1
      %p107 = scmp.ne.s32.totalorder %s102, %s104
      %p108 = scmp.eq.s32.totalorder %s26, 0
      %p109 = por %p107, %p108
      %p110 = scmp.ne.s32.totalorder %s102, %s104
      %p111 = scmp.eq.s32.totalorder %s31, 1
      %p112 = por %p110, %p111
      %p113 = scmp.ne.s32.totalorder %s104, %s105
      %p114 = scmp.eq.s32.totalorder %s31, 0
      %p115 = por %p113, %p114
      %p116 = scmp.ne.s32.totalorder %s104, %s105
      %p117 = scmp.eq.s32.totalorder %s32, 1
      %p118 = por %p116, %p117
      %p120 = scmp.ne.s32.totalorder %s105, %s119
      %p121 = scmp.eq.s32.totalorder %s32, 0
      %p122 = por %p120, %p121
      %s124 = sadd.s32 %s123, 1
      %p127 = scmp.eq.s32.totalorder %s26, 1
      %p128 = scmp.ne.s32.totalorder %s123, %s125
      %p129 = scmp.eq.s32.totalorder %s26, 0
      %p130 = por %p128, %p129
      %p131 = scmp.ne.s32.totalorder %s123, %s125
      %p132 = scmp.eq.s32.totalorder %s31, 1
      %p133 = por %p131, %p132
      %p134 = scmp.ne.s32.totalorder %s125, %s126
      %p135 = scmp.eq.s32.totalorder %s31, 0
      %p136 = por %p134, %p135
      %p137 = scmp.ne.s32.totalorder %s125, %s126
      %p138 = scmp.eq.s32.totalorder %s32, 1
      %p139 = por %p137, %p138
      %p141 = scmp.ne.s32.totalorder %s126, %s140
      %p142 = scmp.eq.s32.totalorder %s32, 0
      %p143 = por %p141, %p142
      %s145 = sadd.s32 %s144, 1
      %p148 = scmp.eq.s32.totalorder %s26, 1
      %p149 = scmp.ne.s32.totalorder %s144, %s146
      %p150 = scmp.eq.s32.totalorder %s26, 0
      %p151 = por %p149, %p150
      %p152 = scmp.ne.s32.totalorder %s144, %s146
      %p153 = scmp.eq.s32.totalorder %s31, 1
      %p154 = por %p152, %p153
      %p155 = scmp.ne.s32.totalorder %s146, %s147
      %p156 = scmp.eq.s32.totalorder %s31, 0
      %p157 = por %p155, %p156
      %p158 = scmp.ne.s32.totalorder %s146, %s147
      %p159 = scmp.eq.s32.totalorder %s32, 1
      %p160 = por %p158, %p159
      %p162 = scmp.ne.s32.totalorder %s147, %s161
      %p163 = scmp.eq.s32.totalorder %s32, 0
      %p164 = por %p162, %p163
      %s166 = sadd.s32 %s165, 1
      %p169 = scmp.eq.s32.totalorder %s26, 1
      %p170 = scmp.ne.s32.totalorder %s165, %s167
      %p171 = scmp.eq.s32.totalorder %s26, 0
      %p172 = por %p170, %p171
      %p173 = scmp.ne.s32.totalorder %s165, %s167
      %p174 = scmp.eq.s32.totalorder %s31, 1
      %p175 = por %p173, %p174
      %p176 = scmp.ne.s32.totalorder %s167, %s168
      %p177 = scmp.eq.s32.totalorder %s31, 0
      %p178 = por %p176, %p177
      %p179 = scmp.ne.s32.totalorder %s167, %s168
      %p180 = scmp.eq.s32.totalorder %s32, 1
      %p181 = por %p179, %p180
      %p183 = scmp.ne.s32.totalorder %s168, %s182
      %p184 = scmp.eq.s32.totalorder %s32, 0
      %p185 = por %p183, %p184
      %s187 = sadd.s32 %s186, 1
      %p190 = scmp.eq.s32.totalorder %s26, 1
      %p191 = scmp.ne.s32.totalorder %s186, %s188
      %p192 = scmp.eq.s32.totalorder %s26, 0
      %p193 = por %p191, %p192
      %p194 = scmp.ne.s32.totalorder %s186, %s188
      %p195 = scmp.eq.s32.totalorder %s31, 1
      %p196 = por %p194, %p195
      %p197 = scmp.ne.s32.totalorder %s188, %s189
      %p198 = scmp.eq.s32.totalorder %s31, 0
      %p199 = por %p197, %p198
      %p200 = scmp.ne.s32.totalorder %s188, %s189
      %p201 = scmp.eq.s32.totalorder %s32, 1
      %p202 = por %p200, %p201
      %p204 = scmp.ne.s32.totalorder %s189, %s203
      %p205 = scmp.eq.s32.totalorder %s32, 0
      %p206 = por %p204, %p205
      %s208 = sadd.s32 %s207, 1
      %p211 = scmp.eq.s32.totalorder %s26, 1
      %p212 = scmp.ne.s32.totalorder %s207, %s209
      %p213 = scmp.eq.s32.totalorder %s26, 0
      %p214 = por %p212, %p213
      %p215 = scmp.ne.s32.totalorder %s207, %s209
      %p216 = scmp.eq.s32.totalorder %s31, 1
      %p217 = por %p215, %p216
      %p218 = scmp.ne.s32.totalorder %s209, %s210
      %p219 = scmp.eq.s32.totalorder %s31, 0
      %p220 = por %p218, %p219
      %p221 = scmp.ne.s32.totalorder %s209, %s210
      %p222 = scmp.eq.s32.totalorder %s32, 1
      %p223 = por %p221, %p222
      %p225 = scmp.ne.s32.totalorder %s210, %s224
      %p226 = scmp.eq.s32.totalorder %s32, 0
      %p227 = por %p225, %p226
      %s229 = sadd.s32 %s228, 1
      %p232 = scmp.eq.s32.totalorder %s26, 1
      %p233 = scmp.ne.s32.totalorder %s228, %s230
      %p234 = scmp.eq.s32.totalorder %s26, 0
      %p235 = por %p233, %p234
      %p236 = scmp.ne.s32.totalorder %s228, %s230
      %p237 = scmp.eq.s32.totalorder %s31, 1
      %p238 = por %p236, %p237
      %p239 = scmp.ne.s32.totalorder %s230, %s231
      %p240 = scmp.eq.s32.totalorder %s31, 0
      %p241 = por %p239, %p240
      %p242 = scmp.ne.s32.totalorder %s230, %s231
      %p243 = scmp.eq.s32.totalorder %s32, 1
      %p244 = por %p242, %p243
      %p246 = scmp.ne.s32.totalorder %s231, %s245
      %p247 = scmp.eq.s32.totalorder %s32, 0
      %p248 = por %p246, %p247
      %s250 = sadd.s32 %s249, 1
      %p253 = scmp.eq.s32.totalorder %s26, 1
      %p254 = scmp.ne.s32.totalorder %s249, %s251
      %p255 = scmp.eq.s32.totalorder %s26, 0
      %p256 = por %p254, %p255
      %p257 = scmp.ne.s32.totalorder %s249, %s251
      %p258 = scmp.eq.s32.totalorder %s31, 1
      %p259 = por %p257, %p258
      %p260 = scmp.ne.s32.totalorder %s251, %s252
      %p261 = scmp.eq.s32.totalorder %s31, 0
      %p262 = por %p260, %p261
      %p263 = scmp.ne.s32.totalorder %s251, %s252
      %p264 = scmp.eq.s32.totalorder %s32, 1
      %p265 = por %p263, %p264
      %p267 = scmp.ne.s32.totalorder %s252, %s266
      %p268 = scmp.eq.s32.totalorder %s32, 0
      %p269 = por %p267, %p268
      %s271 = sadd.s32 %s270, 1
      %p274 = scmp.eq.s32.totalorder %s26, 1
      %p275 = scmp.ne.s32.totalorder %s270, %s272
      %p276 = scmp.eq.s32.totalorder %s26, 0
      %p277 = por %p275, %p276
      %p278 = scmp.ne.s32.totalorder %s270, %s272
      %p279 = scmp.eq.s32.totalorder %s31, 1
      %p280 = por %p278, %p279
      %p281 = scmp.ne.s32.totalorder %s272, %s273
      %p282 = scmp.eq.s32.totalorder %s31, 0
      %p283 = por %p281, %p282
      %p284 = scmp.ne.s32.totalorder %s272, %s273
      %p285 = scmp.eq.s32.totalorder %s32, 1
      %p286 = por %p284, %p285
      %p288 = scmp.ne.s32.totalorder %s273, %s287
      %p289 = scmp.eq.s32.totalorder %s32, 0
      %p290 = por %p288, %p289
      %s292 = sadd.s32 %s291, 1
      %p295 = scmp.eq.s32.totalorder %s26, 1
      %p296 = scmp.ne.s32.totalorder %s291, %s293
      %p297 = scmp.eq.s32.totalorder %s26, 0
      %p298 = por %p296, %p297
      %p299 = scmp.ne.s32.totalorder %s291, %s293
      %p300 = scmp.eq.s32.totalorder %s31, 1
      %p301 = por %p299, %p300
      %p302 = scmp.ne.s32.totalorder %s293, %s294
      %p303 = scmp.eq.s32.totalorder %s31, 0
      %p304 = por %p302, %p303
      %p305 = scmp.ne.s32.totalorder %s293, %s294
      %p306 = scmp.eq.s32.totalorder %s32, 1
      %p307 = por %p305, %p306
      %p309 = scmp.ne.s32.totalorder %s294, %s308
      %p310 = scmp.eq.s32.totalorder %s32, 0
      %p311 = por %p309, %p310
      %s313 = sadd.s32 %s312, 1
      %p316 = scmp.eq.s32.totalorder %s26, 1
      %p317 = scmp.ne.s32.totalorder %s312, %s314
      %p318 = scmp.eq.s32.totalorder %s26, 0
      %p319 = por %p317, %p318
      %p320 = scmp.ne.s32.totalorder %s312, %s314
      %p321 = scmp.eq.s32.totalorder %s31, 1
      %p322 = por %p320, %p321
      %p323 = scmp.ne.s32.totalorder %s314, %s315
      %p324 = scmp.eq.s32.totalorder %s31, 0
      %p325 = por %p323, %p324
      %p326 = scmp.ne.s32.totalorder %s314, %s315
      %p327 = scmp.eq.s32.totalorder %s32, 1
      %p328 = por %p326, %p327
      %p330 = scmp.ne.s32.totalorder %s315, %s329
      %p331 = scmp.eq.s32.totalorder %s32, 0
      %p332 = por %p330, %p331
      %s334 = sadd.s32 %s333, 1
      %p337 = scmp.eq.s32.totalorder %s26, 1
      %p338 = scmp.ne.s32.totalorder %s333, %s335
      %p339 = scmp.eq.s32.totalorder %s26, 0
      %p340 = por %p338, %p339
      %p341 = scmp.ne.s32.totalorder %s333, %s335
      %p342 = scmp.eq.s32.totalorder %s31, 1
      %p343 = por %p341, %p342
      %p344 = scmp.ne.s32.totalorder %s335, %s336
      %p345 = scmp.eq.s32.totalorder %s31, 0
      %p346 = por %p344, %p345
      %p347 = scmp.ne.s32.totalorder %s335, %s336
      %p348 = scmp.eq.s32.totalorder %s32, 1
      %p349 = por %p347, %p348
      %p351 = scmp.ne.s32.totalorder %s336, %s350
      %p352 = scmp.eq.s32.totalorder %s32, 0
      %p353 = por %p351, %p352
      %s354 = ssub.s32 %s26, %s33
      %p355 = scmp.eq.s32.totalorder %s354, 0
      %s357 = sadd.s32 %s356, 1
      %s358 = scalar_select %p355, %s356, %s357
      %p361 = pneg %p355
      %p362 = scmp.eq.s32.totalorder %s26, 1
      %p363 = por %p361, %p362
      %p364 = scmp.ne.s32.totalorder %s356, %s359
      %p365 = scmp.eq.s32.totalorder %s26, 0
      %p366 = por %p364, %p365
      %p367 = scmp.ne.s32.totalorder %s356, %s359
      %p368 = scmp.eq.s32.totalorder %s31, 1
      %p369 = por %p367, %p368
      %p370 = scmp.ne.s32.totalorder %s359, %s360
      %p371 = scmp.eq.s32.totalorder %s31, 0
      %p372 = por %p370, %p371
      %p373 = scmp.ne.s32.totalorder %s359, %s360
      %p374 = scmp.eq.s32.totalorder %s32, 1
      %p375 = por %p373, %p374
      %p377 = scmp.ne.s32.totalorder %s360, %s376
      %p378 = scmp.eq.s32.totalorder %s32, 0
      %p379 = por %p377, %p378
      %p380 = scmp.le.s32.totalorder 1, %s26
      %p381 = scmp.lt.s32.totalorder %s26, 3
      %p382 = pnand %p380, %p381
      %p383 = pneg %p382
      // Predicated region
      $region9: #{_mlp_pallas.1} parent=5 // pred_check
        _
      $region10: #{_mlp_pallas.1} parent=5 // pred_check_branch
        %385 = sbr.rel (%p382) target = $region12
      $region11: #{_mlp_pallas.1} parent=5 // pred_region
        %s386 = ssub.s32 %s26, 1
        // Predicated region
        $region13: #{_mlp_pallas.1} parent=11 // pred_check
          %p387 = pneg %p73
        $region14: #{_mlp_pallas.1} parent=11 // pred_check_branch
          %389 = sbr.rel (%p387) target = $region16
        $region15: #{_mlp_pallas.1} parent=11 // pred_region
          %391 = vsyncadd [#allocation3], 0
          %s392 = sshll.u32 %s1, 4
          %s393 = int_to_ptr.hbm [resolvable:$true] %s392
          %s394 = sshll.u32 [#allocation2], 4
          %s395 = int_to_ptr.vmem [resolvable:$true] %s394
          %400 = dma.hbm_to_vmem [thread:$0]  %s393, 28672, %s395, [#allocation3], 256, 256, 16
        $region16: #{_mlp_pallas.1} parent=11 // pred_fallthru
          _
        // Predicated region
        $region17: #{_mlp_pallas.1} parent=11 // pred_check
          %p401 = pneg %p94
        $region18: #{_mlp_pallas.1} parent=11 // pred_check_branch
          %403 = sbr.rel (%p401) target = $region20
        $region19: #{_mlp_pallas.1} parent=11 // pred_region
          _
        $region20: #{_mlp_pallas.1} parent=11 // pred_fallthru
          _
        // Predicated region
        $region21: #{_mlp_pallas.1} parent=11 // pred_check
          %p404 = pneg %p115
        $region22: #{_mlp_pallas.1} parent=11 // pred_check_branch
          %406 = sbr.rel (%p404) target = $region24
        $region23: #{_mlp_pallas.1} parent=11 // pred_region
          _
        $region24: #{_mlp_pallas.1} parent=11 // pred_fallthru
          _
        // Predicated region
        $region25: #{_mlp_pallas.1} parent=11 // pred_check
          %p407 = pneg %p136
        $region26: #{_mlp_pallas.1} parent=11 // pred_check_branch
          %409 = sbr.rel (%p407) target = $region28
        $region27: #{_mlp_pallas.1} parent=11 // pred_region
          _
        $region28: #{_mlp_pallas.1} parent=11 // pred_fallthru
          _
        // Predicated region
        $region29: #{_mlp_pallas.1} parent=11 // pred_check
          %p410 = pneg %p157
        $region30: #{_mlp_pallas.1} parent=11 // pred_check_branch
          %412 = sbr.rel (%p410) target = $region32
        $region31: #{_mlp_pallas.1} parent=11 // pred_region
          %414 = vsyncadd [#allocation6], 0
          %s415 = sshll.u32 %s5, 4
          %s416 = int_to_ptr.hbm [resolvable:$true] %s415
          %s417 = sshll.u32 [#allocation5], 4
          %s418 = int_to_ptr.vmem [resolvable:$true] %s417
          %423 = dma.hbm_to_vmem [thread:$0]  %s416, 16384, %s418, [#allocation6], 256, 256, 16
        $region32: #{_mlp_pallas.1} parent=11 // pred_fallthru
          _
        // Predicated region
        $region33: #{_mlp_pallas.1} parent=11 // pred_check
          %p424 = pneg %p178
        $region34: #{_mlp_pallas.1} parent=11 // pred_check_branch
          %426 = sbr.rel (%p424) target = $region36
        $region35: #{_mlp_pallas.1} parent=11 // pred_region
          _
        $region36: #{_mlp_pallas.1} parent=11 // pred_fallthru
          _
        // Predicated region
        $region37: #{_mlp_pallas.1} parent=11 // pred_check
          %p427 = pneg %p199
        $region38: #{_mlp_pallas.1} parent=11 // pred_check_branch
          %429 = sbr.rel (%p427) target = $region40
        $region39: #{_mlp_pallas.1} parent=11 // pred_region
          _
        $region40: #{_mlp_pallas.1} parent=11 // pred_fallthru
          _
        // Predicated region
        $region41: #{_mlp_pallas.1} parent=11 // pred_check
          %p430 = pneg %p220
        $region42: #{_mlp_pallas.1} parent=11 // pred_check_branch
          %432 = sbr.rel (%p430) target = $region44
        $region43: #{_mlp_pallas.1} parent=11 // pred_region
          _
        $region44: #{_mlp_pallas.1} parent=11 // pred_fallthru
          _
        // Predicated region
        $region45: #{_mlp_pallas.1} parent=11 // pred_check
          %p433 = pneg %p241
        $region46: #{_mlp_pallas.1} parent=11 // pred_check_branch
          %435 = sbr.rel (%p433) target = $region48
        $region47: #{_mlp_pallas.1} parent=11 // pred_region
          %437 = vsyncadd [#allocation6], 0
          %s438 = sshll.u32 %s9, 4
          %s439 = int_to_ptr.hbm [resolvable:$true] %s438
          %s440 = sshll.u32 [#allocation7], 4
          %s441 = int_to_ptr.vmem [resolvable:$true] %s440
          %446 = dma.hbm_to_vmem [thread:$0]  %s439, 16384, %s441, [#allocation6], 256, 256, 16
        $region48: #{_mlp_pallas.1} parent=11 // pred_fallthru
          _
        // Predicated region
        $region49: #{_mlp_pallas.1} parent=11 // pred_check
          %p447 = pneg %p262
        $region50: #{_mlp_pallas.1} parent=11 // pred_check_branch
          %449 = sbr.rel (%p447) target = $region52
        $region51: #{_mlp_pallas.1} parent=11 // pred_region
          _
        $region52: #{_mlp_pallas.1} parent=11 // pred_fallthru
          _
        // Predicated region
        $region53: #{_mlp_pallas.1} parent=11 // pred_check
          %p450 = pneg %p283
        $region54: #{_mlp_pallas.1} parent=11 // pred_check_branch
          %452 = sbr.rel (%p450) target = $region56
        $region55: #{_mlp_pallas.1} parent=11 // pred_region
          _
        $region56: #{_mlp_pallas.1} parent=11 // pred_fallthru
          _
        // Predicated region
        $region57: #{_mlp_pallas.1} parent=11 // pred_check
          %p453 = pneg %p304
        $region58: #{_mlp_pallas.1} parent=11 // pred_check_branch
          %455 = sbr.rel (%p453) target = $region60
        $region59: #{_mlp_pallas.1} parent=11 // pred_region
          _
        $region60: #{_mlp_pallas.1} parent=11 // pred_fallthru
          _
        // Predicated region
        $region61: #{_mlp_pallas.1} parent=11 // pred_check
          %p456 = pneg %p325
        $region62: #{_mlp_pallas.1} parent=11 // pred_check_branch
          %458 = sbr.rel (%p456) target = $region64
        $region63: #{_mlp_pallas.1} parent=11 // pred_region
          _
        $region64: #{_mlp_pallas.1} parent=11 // pred_fallthru
          _
        // Predicated region
        $region65: #{_mlp_pallas.1} parent=11 // pred_check
          %p459 = pneg %p346
        $region66: #{_mlp_pallas.1} parent=11 // pred_check_branch
          %461 = sbr.rel (%p459) target = $region68
        $region67: #{_mlp_pallas.1} parent=11 // pred_region
          _
        $region68: #{_mlp_pallas.1} parent=11 // pred_fallthru
          _
      $region12: #{_mlp_pallas.1} parent=5 // pred_fallthru
        _
      %p462 = scmp.lt.s32.totalorder %s26, 2
      // Predicated region
      $region69: #{_mlp_pallas.1} parent=5 // pred_check
        %p463 = pneg %p462
      $region70: #{_mlp_pallas.1} parent=5 // pred_check_branch
        %465 = sbr.rel (%p463) target = $region72
      $region71: #{_mlp_pallas.1} parent=5 // pred_region
        // Predicated region
        $region73: #{_mlp_pallas.1} parent=71 // pred_check
          %p466 = pneg %p46
        $region74: #{_mlp_pallas.1} parent=71 // pred_check_branch
          %468 = sbr.rel (%p466) target = $region76
        $region75: #{_mlp_pallas.1} parent=71 // pred_region
          %p469 = scmp.lt.s32.totalorder %s26, 1
          %s470 = scalar_select %p469, %s26, 1
          %s471 = smul.addr %s470, 7
          %s472 = smul.addr %s471, 4
          %s473 = scalar_lea.vmem %s0, %s472
        $region76: #{_mlp_pallas.1} parent=71 // pred_fallthru
          _
      $region72: #{_mlp_pallas.1} parent=5 // pred_fallthru
        _
      %p474 = scmp.le.s32.totalorder 1, %s26
      %p475 = scmp.lt.s32.totalorder %s26, 3
      %p476 = pnand %p474, %p475
      %p477 = pneg %p476
      // Predicated region
      $region77: #{_mlp_pallas.1} parent=5 // pred_check
        _
      $region78: #{_mlp_pallas.1} parent=5 // pred_check_branch
        %479 = sbr.rel (%p476) target = $region80
      $region79: #{_mlp_pallas.1} parent=5 // pred_region
        %s480 = ssub.s32 %s26, 1
        // Predicated region
        $region81: #{_mlp_pallas.1} parent=79 // pred_check
          %p481 = pneg %p73
        $region82: #{_mlp_pallas.1} parent=79 // pred_check_branch
          %483 = sbr.rel (%p481) target = $region84
        $region83: #{_mlp_pallas.1} parent=79 // pred_region
          %485 = dma.done [#allocation3], 28672
        $region84: #{_mlp_pallas.1} parent=79 // pred_fallthru
          _
        // Predicated region
        $region85: #{_mlp_pallas.1} parent=79 // pred_check
          %p486 = pneg %p157
        $region86: #{_mlp_pallas.1} parent=79 // pred_check_branch
          %488 = sbr.rel (%p486) target = $region88
        $region87: #{_mlp_pallas.1} parent=79 // pred_region
          %490 = dma.done [#allocation6], 16384
        $region88: #{_mlp_pallas.1} parent=79 // pred_fallthru
          _
        // Predicated region
        $region89: #{_mlp_pallas.1} parent=79 // pred_check
          %p491 = pneg %p241
        $region90: #{_mlp_pallas.1} parent=79 // pred_check_branch
          %493 = sbr.rel (%p491) target = $region92
        $region91: #{_mlp_pallas.1} parent=79 // pred_region
          %495 = dma.done [#allocation6], 16384
        $region92: #{_mlp_pallas.1} parent=79 // pred_fallthru
          _
        %p496 = scmp.lt.s32.totalorder %s31, 1
        %s497 = scalar_select %p496, %s31, 1
        %s498 = smul.addr %s497, 7
        %s499 = smul.addr %s498, 4
        %s500 = scalar_lea.vmem %s0, %s499
        %p501 = pneg %p52
        %p502 = pneg %p49
        %p503 = pneg %p73
        %p504 = pneg %p70
        %p505 = pneg %p94
        %p506 = pneg %p91
        %p507 = pneg %p115
        %p508 = pneg %p112
        %p509 = pneg %p136
        %p510 = pneg %p133
        %p511 = pneg %p157
        %p512 = pneg %p154
        %p513 = pneg %p178
        %p514 = pneg %p175
        %p515 = pneg %p199
        %p516 = pneg %p196
        %p517 = pneg %p220
        %p518 = pneg %p217
        %p519 = pneg %p241
        %p520 = pneg %p238
        %p521 = pneg %p262
        %p522 = pneg %p259
        %p523 = pneg %p283
        %p524 = pneg %p280
        %p525 = pneg %p304
        %p526 = pneg %p301
        %p527 = pneg %p325
        %p528 = pneg %p322
        %p529 = pneg %p346
        %p530 = pneg %p343
        %p531 = pneg %p372
        %p532 = pneg %p369
        %s533 = sand.u32 %s359, 1
        %s534 = scalar_lea.sflag [#allocation4], %s533
        %s535 = sand.u32 %s359, 1
        %s536 = smul.addr %s535, 8
        %s537 = scalar_lea.vmem [#allocation8], %s536
        %p538 = scmp.lt.s32.totalorder %s31, 1
        %s539 = scalar_select %p538, %s31, 1
        %s540 = smul.addr %s539, 7
        %s541 = smul.addr %s540, 4
        %s542 = scalar_lea.vmem %s0, %s541
        %v543 = vld [vmem:[%s542] sm:$0xff]
        %v544 = vld [vmem:[%s542 + $0x8] sm:$0xff]
        %v545 = vld [vmem:[%s542 + $0x10] sm:$0xff]
        %v546 = vld [vmem:[%s542 + $0x18] sm:$0xf]
        %v547 = vld [vmem:[#allocation2] sm:$0xff]
        %v548 = vld [vmem:[#allocation2 + $0x8] sm:$0xff]
        %v549 = vld [vmem:[#allocation2 + $0x10] sm:$0xff]
        %v550 = vld [vmem:[#allocation2 + $0x18] sm:$0xff]
        %v551 = vld [vmem:[#allocation2 + $0x20] sm:$0xff]
        %v552 = vld [vmem:[#allocation2 + $0x28] sm:$0xff]
        %v553 = vld [vmem:[#allocation2 + $0x30] sm:$0xff]
        %v554 = vld [vmem:[#allocation2 + $0x38] sm:$0xff]
        %v555 = vld [vmem:[#allocation2 + $0x40] sm:$0xff]
        %v556 = vld [vmem:[#allocation2 + $0x48] sm:$0xff]
        %v557 = vld [vmem:[#allocation2 + $0x50] sm:$0xff]
        %v558 = vld [vmem:[#allocation2 + $0x58] sm:$0xff]
        %v559 = vld [vmem:[#allocation2 + $0x60] sm:$0xff]
        %v560 = vld [vmem:[#allocation2 + $0x68] sm:$0xff]
        %v561 = vld [vmem:[#allocation2 + $0x70] sm:$0xff]
        %v562 = vld [vmem:[#allocation2 + $0x78] sm:$0xff]
        %v563 = vld [vmem:[#allocation2 + $0x80] sm:$0xff]
        %v564 = vld [vmem:[#allocation2 + $0x88] sm:$0xff]
        %v565 = vld [vmem:[#allocation2 + $0x90] sm:$0xff]
        %v566 = vld [vmem:[#allocation2 + $0x98] sm:$0xff]
        %v567 = vld [vmem:[#allocation2 + $0xa0] sm:$0xff]
        %v568 = vld [vmem:[#allocation2 + $0xa8] sm:$0xff]
        %v569 = vld [vmem:[#allocation2 + $0xb0] sm:$0xff]
        %v570 = vld [vmem:[#allocation2 + $0xb8] sm:$0xff]
        %v571 = vld [vmem:[#allocation2 + $0xc0] sm:$0xff]
        %v572 = vld [vmem:[#allocation2 + $0xc8] sm:$0xff]
        %v573 = vld [vmem:[#allocation2 + $0xd0] sm:$0xff]
        %v574 = vld [vmem:[#allocation2 + $0xd8] sm:$0xff]
        %v575 = vld [vmem:[#allocation2 + $0xe0] sm:$0xff]
        %v576 = vld [vmem:[#allocation2 + $0xe8] sm:$0xff]
        %v577 = vld [vmem:[#allocation2 + $0xf0] sm:$0xff]
        %v578 = vld [vmem:[#allocation2 + $0xf8] sm:$0xff]
        %v579 = vld [vmem:[#allocation2 + $0x100] sm:$0xff]
        %v580 = vld [vmem:[#allocation2 + $0x108] sm:$0xff]
        %v581 = vld [vmem:[#allocation2 + $0x110] sm:$0xff]
        %v582 = vld [vmem:[#allocation2 + $0x118] sm:$0xff]
        %v583 = vld [vmem:[#allocation2 + $0x120] sm:$0xff]
        %v584 = vld [vmem:[#allocation2 + $0x128] sm:$0xff]
        %v585 = vld [vmem:[#allocation2 + $0x130] sm:$0xff]
        %v586 = vld [vmem:[#allocation2 + $0x138] sm:$0xff]
        %v587 = vld [vmem:[#allocation2 + $0x140] sm:$0xff]
        %v588 = vld [vmem:[#allocation2 + $0x148] sm:$0xff]
        %v589 = vld [vmem:[#allocation2 + $0x150] sm:$0xff]
        %v590 = vld [vmem:[#allocation2 + $0x158] sm:$0xff]
        %v591 = vld [vmem:[#allocation2 + $0x160] sm:$0xff]
        %v592 = vld [vmem:[#allocation2 + $0x168] sm:$0xff]
        %v593 = vld [vmem:[#allocation2 + $0x170] sm:$0xff]
        %v594 = vld [vmem:[#allocation2 + $0x178] sm:$0xff]
        %v595 = vld [vmem:[#allocation2 + $0x180] sm:$0xff]
        %v596 = vld [vmem:[#allocation2 + $0x188] sm:$0xff]
        %v597 = vld [vmem:[#allocation2 + $0x190] sm:$0xff]
        %v598 = vld [vmem:[#allocation2 + $0x198] sm:$0xff]
        %v599 = vld [vmem:[#allocation2 + $0x1a0] sm:$0xff]
        %v600 = vld [vmem:[#allocation2 + $0x1a8] sm:$0xff]
        %v601 = vld [vmem:[#allocation2 + $0x1b0] sm:$0xff]
        %v602 = vld [vmem:[#allocation2 + $0x1b8] sm:$0xff]
        %v603 = vld [vmem:[#allocation2 + $0x1c0] sm:$0xff]
        %v604 = vld [vmem:[#allocation2 + $0x1c8] sm:$0xff]
        %v605 = vld [vmem:[#allocation2 + $0x1d0] sm:$0xff]
        %v606 = vld [vmem:[#allocation2 + $0x1d8] sm:$0xff]
        %v607 = vld [vmem:[#allocation2 + $0x1e0] sm:$0xff]
        %v608 = vld [vmem:[#allocation2 + $0x1e8] sm:$0xff]
        %v609 = vld [vmem:[#allocation2 + $0x1f0] sm:$0xff]
        %v610 = vld [vmem:[#allocation2 + $0x1f8] sm:$0xff]
        %v611 = vld [vmem:[#allocation2 + $0x200] sm:$0xff]
        %v612 = vld [vmem:[#allocation2 + $0x208] sm:$0xff]
        %v613 = vld [vmem:[#allocation2 + $0x210] sm:$0xff]
        %v614 = vld [vmem:[#allocation2 + $0x218] sm:$0xff]
        %v615 = vld [vmem:[#allocation2 + $0x220] sm:$0xff]
        %v616 = vld [vmem:[#allocation2 + $0x228] sm:$0xff]
        %v617 = vld [vmem:[#allocation2 + $0x230] sm:$0xff]
        %v618 = vld [vmem:[#allocation2 + $0x238] sm:$0xff]
        %v619 = vld [vmem:[#allocation2 + $0x240] sm:$0xff]
        %v620 = vld [vmem:[#allocation2 + $0x248] sm:$0xff]
        %v621 = vld [vmem:[#allocation2 + $0x250] sm:$0xff]
        %v622 = vld [vmem:[#allocation2 + $0x258] sm:$0xff]
        %v623 = vld [vmem:[#allocation2 + $0x260] sm:$0xff]
        %v624 = vld [vmem:[#allocation2 + $0x268] sm:$0xff]
        %v625 = vld [vmem:[#allocation2 + $0x270] sm:$0xff]
        %v626 = vld [vmem:[#allocation2 + $0x278] sm:$0xff]
        %v627 = vld [vmem:[#allocation2 + $0x280] sm:$0xff]
        %v628 = vld [vmem:[#allocation2 + $0x288] sm:$0xff]
        %v629 = vld [vmem:[#allocation2 + $0x290] sm:$0xff]
        %v630 = vld [vmem:[#allocation2 + $0x298] sm:$0xff]
        %v631 = vld [vmem:[#allocation2 + $0x2a0] sm:$0xff]
        %v632 = vld [vmem:[#allocation2 + $0x2a8] sm:$0xff]
        %v633 = vld [vmem:[#allocation2 + $0x2b0] sm:$0xff]
        %v634 = vld [vmem:[#allocation2 + $0x2b8] sm:$0xff]
        %v635 = vld [vmem:[#allocation2 + $0x2c0] sm:$0xff]
        %v636 = vld [vmem:[#allocation2 + $0x2c8] sm:$0xff]
        %v637 = vld [vmem:[#allocation2 + $0x2d0] sm:$0xff]
        %v638 = vld [vmem:[#allocation2 + $0x2d8] sm:$0xff]
        %v639 = vld [vmem:[#allocation2 + $0x2e0] sm:$0xff]
        %v640 = vld [vmem:[#allocation2 + $0x2e8] sm:$0xff]
        %v641 = vld [vmem:[#allocation2 + $0x2f0] sm:$0xff]
        %v642 = vld [vmem:[#allocation2 + $0x2f8] sm:$0xff]
        %v643 = vld [vmem:[#allocation2 + $0x300] sm:$0xff]
        %v644 = vld [vmem:[#allocation2 + $0x308] sm:$0xff]
        %v645 = vld [vmem:[#allocation2 + $0x310] sm:$0xff]
        %v646 = vld [vmem:[#allocation2 + $0x318] sm:$0xff]
        %v647 = vld [vmem:[#allocation2 + $0x320] sm:$0xff]
        %v648 = vld [vmem:[#allocation2 + $0x328] sm:$0xff]
        %v649 = vld [vmem:[#allocation2 + $0x330] sm:$0xff]
        %v650 = vld [vmem:[#allocation2 + $0x338] sm:$0xff]
        %v651 = vld [vmem:[#allocation2 + $0x340] sm:$0xff]
        %v652 = vld [vmem:[#allocation2 + $0x348] sm:$0xff]
        %v653 = vld [vmem:[#allocation2 + $0x350] sm:$0xff]
        %v654 = vld [vmem:[#allocation2 + $0x358] sm:$0xff]
        %v655 = vld [vmem:[#allocation2 + $0x360] sm:$0xff]
        %v656 = vld [vmem:[#allocation2 + $0x368] sm:$0xff]
        %v657 = vld [vmem:[#allocation2 + $0x370] sm:$0xff]
        %v658 = vld [vmem:[#allocation2 + $0x378] sm:$0xff]
        %v659 = vld [vmem:[#allocation2 + $0x380] sm:$0xff]
        %v660 = vld [vmem:[#allocation2 + $0x388] sm:$0xff]
        %v661 = vld [vmem:[#allocation2 + $0x390] sm:$0xff]
        %v662 = vld [vmem:[#allocation2 + $0x398] sm:$0xff]
        %v663 = vld [vmem:[#allocation2 + $0x3a0] sm:$0xff]
        %v664 = vld [vmem:[#allocation2 + $0x3a8] sm:$0xff]
        %v665 = vld [vmem:[#allocation2 + $0x3b0] sm:$0xff]
        %v666 = vld [vmem:[#allocation2 + $0x3b8] sm:$0xff]
        %v667 = vld [vmem:[#allocation2 + $0x3c0] sm:$0xff]
        %v668 = vld [vmem:[#allocation2 + $0x3c8] sm:$0xff]
        %v669 = vld [vmem:[#allocation2 + $0x3d0] sm:$0xff]
        %v670 = vld [vmem:[#allocation2 + $0x3d8] sm:$0xff]
        %v671 = vld [vmem:[#allocation2 + $0x3e0] sm:$0xff]
        %v672 = vld [vmem:[#allocation2 + $0x3e8] sm:$0xff]
        %v673 = vld [vmem:[#allocation2 + $0x3f0] sm:$0xff]
        %v674 = vld [vmem:[#allocation2 + $0x3f8] sm:$0xff]
        %v675 = vld [vmem:[#allocation2 + $0x400] sm:$0xff]
        %v676 = vld [vmem:[#allocation2 + $0x408] sm:$0xff]
        %v677 = vld [vmem:[#allocation2 + $0x410] sm:$0xff]
        %v678 = vld [vmem:[#allocation2 + $0x418] sm:$0xff]
        %v679 = vld [vmem:[#allocation2 + $0x420] sm:$0xff]
        %v680 = vld [vmem:[#allocation2 + $0x428] sm:$0xff]
        %v681 = vld [vmem:[#allocation2 + $0x430] sm:$0xff]
        %v682 = vld [vmem:[#allocation2 + $0x438] sm:$0xff]
        %v683 = vld [vmem:[#allocation2 + $0x440] sm:$0xff]
        %v684 = vld [vmem:[#allocation2 + $0x448] sm:$0xff]
        %v685 = vld [vmem:[#allocation2 + $0x450] sm:$0xff]
        %v686 = vld [vmem:[#allocation2 + $0x458] sm:$0xff]
        %v687 = vld [vmem:[#allocation2 + $0x460] sm:$0xff]
        %v688 = vld [vmem:[#allocation2 + $0x468] sm:$0xff]
        %v689 = vld [vmem:[#allocation2 + $0x470] sm:$0xff]
        %v690 = vld [vmem:[#allocation2 + $0x478] sm:$0xff]
        %v691 = vld [vmem:[#allocation2 + $0x480] sm:$0xff]
        %v692 = vld [vmem:[#allocation2 + $0x488] sm:$0xff]
        %v693 = vld [vmem:[#allocation2 + $0x490] sm:$0xff]
        %v694 = vld [vmem:[#allocation2 + $0x498] sm:$0xff]
        %v695 = vld [vmem:[#allocation2 + $0x4a0] sm:$0xff]
        %v696 = vld [vmem:[#allocation2 + $0x4a8] sm:$0xff]
        %v697 = vld [vmem:[#allocation2 + $0x4b0] sm:$0xff]
        %v698 = vld [vmem:[#allocation2 + $0x4b8] sm:$0xff]
        %v699 = vld [vmem:[#allocation2 + $0x4c0] sm:$0xff]
        %v700 = vld [vmem:[#allocation2 + $0x4c8] sm:$0xff]
        %v701 = vld [vmem:[#allocation2 + $0x4d0] sm:$0xff]
        %v702 = vld [vmem:[#allocation2 + $0x4d8] sm:$0xff]
        %v703 = vld [vmem:[#allocation2 + $0x4e0] sm:$0xff]
        %v704 = vld [vmem:[#allocation2 + $0x4e8] sm:$0xff]
        %v705 = vld [vmem:[#allocation2 + $0x4f0] sm:$0xff]
        %v706 = vld [vmem:[#allocation2 + $0x4f8] sm:$0xff]
        %v707 = vld [vmem:[#allocation2 + $0x500] sm:$0xff]
        %v708 = vld [vmem:[#allocation2 + $0x508] sm:$0xff]
        %v709 = vld [vmem:[#allocation2 + $0x510] sm:$0xff]
        %v710 = vld [vmem:[#allocation2 + $0x518] sm:$0xff]
        %v711 = vld [vmem:[#allocation2 + $0x520] sm:$0xff]
        %v712 = vld [vmem:[#allocation2 + $0x528] sm:$0xff]
        %v713 = vld [vmem:[#allocation2 + $0x530] sm:$0xff]
        %v714 = vld [vmem:[#allocation2 + $0x538] sm:$0xff]
        %v715 = vld [vmem:[#allocation2 + $0x540] sm:$0xff]
        %v716 = vld [vmem:[#allocation2 + $0x548] sm:$0xff]
        %v717 = vld [vmem:[#allocation2 + $0x550] sm:$0xff]
        %v718 = vld [vmem:[#allocation2 + $0x558] sm:$0xff]
        %v719 = vld [vmem:[#allocation2 + $0x560] sm:$0xff]
        %v720 = vld [vmem:[#allocation2 + $0x568] sm:$0xff]
        %v721 = vld [vmem:[#allocation2 + $0x570] sm:$0xff]
        %v722 = vld [vmem:[#allocation2 + $0x578] sm:$0xff]
        %v723 = vld [vmem:[#allocation2 + $0x580] sm:$0xff]
        %v724 = vld [vmem:[#allocation2 + $0x588] sm:$0xff]
        %v725 = vld [vmem:[#allocation2 + $0x590] sm:$0xff]
        %v726 = vld [vmem:[#allocation2 + $0x598] sm:$0xff]
        %v727 = vld [vmem:[#allocation2 + $0x5a0] sm:$0xff]
        %v728 = vld [vmem:[#allocation2 + $0x5a8] sm:$0xff]
        %v729 = vld [vmem:[#allocation2 + $0x5b0] sm:$0xff]
        %v730 = vld [vmem:[#allocation2 + $0x5b8] sm:$0xff]
        %v731 = vld [vmem:[#allocation2 + $0x5c0] sm:$0xff]
        %v732 = vld [vmem:[#allocation2 + $0x5c8] sm:$0xff]
        %v733 = vld [vmem:[#allocation2 + $0x5d0] sm:$0xff]
        %v734 = vld [vmem:[#allocation2 + $0x5d8] sm:$0xff]
        %v735 = vld [vmem:[#allocation2 + $0x5e0] sm:$0xff]
        %v736 = vld [vmem:[#allocation2 + $0x5e8] sm:$0xff]
        %v737 = vld [vmem:[#allocation2 + $0x5f0] sm:$0xff]
        %v738 = vld [vmem:[#allocation2 + $0x5f8] sm:$0xff]
        %v739 = vld [vmem:[#allocation2 + $0x600] sm:$0xff]
        %v740 = vld [vmem:[#allocation2 + $0x608] sm:$0xff]
        %v741 = vld [vmem:[#allocation2 + $0x610] sm:$0xff]
        %v742 = vld [vmem:[#allocation2 + $0x618] sm:$0xff]
        %v743 = vld [vmem:[#allocation2 + $0x620] sm:$0xff]
        %v744 = vld [vmem:[#allocation2 + $0x628] sm:$0xff]
        %v745 = vld [vmem:[#allocation2 + $0x630] sm:$0xff]
        %v746 = vld [vmem:[#allocation2 + $0x638] sm:$0xff]
        %v747 = vld [vmem:[#allocation2 + $0x640] sm:$0xff]
        %v748 = vld [vmem:[#allocation2 + $0x648] sm:$0xff]
        %v749 = vld [vmem:[#allocation2 + $0x650] sm:$0xff]
        %v750 = vld [vmem:[#allocation2 + $0x658] sm:$0xff]
        %v751 = vld [vmem:[#allocation2 + $0x660] sm:$0xff]
        %v752 = vld [vmem:[#allocation2 + $0x668] sm:$0xff]
        %v753 = vld [vmem:[#allocation2 + $0x670] sm:$0xff]
        %v754 = vld [vmem:[#allocation2 + $0x678] sm:$0xff]
        %v755 = vld [vmem:[#allocation2 + $0x680] sm:$0xff]
        %v756 = vld [vmem:[#allocation2 + $0x688] sm:$0xff]
        %v757 = vld [vmem:[#allocation2 + $0x690] sm:$0xff]
        %v758 = vld [vmem:[#allocation2 + $0x698] sm:$0xff]
        %v759 = vld [vmem:[#allocation2 + $0x6a0] sm:$0xff]
        %v760 = vld [vmem:[#allocation2 + $0x6a8] sm:$0xff]
        %v761 = vld [vmem:[#allocation2 + $0x6b0] sm:$0xff]
        %v762 = vld [vmem:[#allocation2 + $0x6b8] sm:$0xff]
        %v763 = vld [vmem:[#allocation2 + $0x6c0] sm:$0xff]
        %v764 = vld [vmem:[#allocation2 + $0x6c8] sm:$0xff]
        %v765 = vld [vmem:[#allocation2 + $0x6d0] sm:$0xff]
        %v766 = vld [vmem:[#allocation2 + $0x6d8] sm:$0xff]
        %v767 = vld [vmem:[#allocation2 + $0x6e0] sm:$0xff]
        %v768 = vld [vmem:[#allocation2 + $0x6e8] sm:$0xff]
        %v769 = vld [vmem:[#allocation2 + $0x6f0] sm:$0xff]
        %v770 = vld [vmem:[#allocation2 + $0x6f8] sm:$0xff]
        %v771 = vld [vmem:[%s2] sm:$0xf]
        %v773 = vperm.slane %v771, 0
        %v774 = vperm.slane %v771, 1
        %v775 = vperm.slane %v771, 2
        %v776 = vperm.slane %v771, 3
        %v785 = vunpack.c.l.b16 %v543
        %v786 = vunpack.c.h.b16 %v543
        %v787 = vunpack.c.l.b16 %v544
        %v788 = vunpack.c.h.b16 %v544
        %v789 = vunpack.c.l.b16 %v545
        %v790 = vunpack.c.h.b16 %v545
        %v791 = vunpack.c.l.b16 %v546
        %v792 = vpack.c.b16 %v785, %v785
        %v793 = vpack.c.b16 %v786, %v786
        %v794 = vpack.c.b16 %v787, %v787
        %v795 = vpack.c.b16 %v788, %v788
        %v796 = vpack.c.b16 %v789, %v789
        %v797 = vpack.c.b16 %v790, %v790
        %v798 = vpack.c.b16 %v791, %v791
        %v1030 = vunpack.c.l.b16 %v547
        %v1031 = vunpack.c.h.b16 %v547
        %v1032 = vunpack.c.l.b16 %v548
        %v1033 = vunpack.c.h.b16 %v548
        %v1034 = vunpack.c.l.b16 %v549
        %v1035 = vunpack.c.h.b16 %v549
        %v1036 = vunpack.c.l.b16 %v550
        %v1037 = vunpack.c.h.b16 %v550
        %v1038 = vunpack.c.l.b16 %v551
        %v1039 = vunpack.c.h.b16 %v551
        %v1040 = vunpack.c.l.b16 %v552
        %v1041 = vunpack.c.h.b16 %v552
        %v1042 = vunpack.c.l.b16 %v553
        %v1043 = vunpack.c.h.b16 %v553
        %v1044 = vunpack.c.l.b16 %v554
        %v1045 = vunpack.c.h.b16 %v554
        %v1046 = vunpack.c.l.b16 %v555
        %v1047 = vunpack.c.h.b16 %v555
        %v1048 = vunpack.c.l.b16 %v556
        %v1049 = vunpack.c.h.b16 %v556
        %v1050 = vunpack.c.l.b16 %v557
        %v1051 = vunpack.c.h.b16 %v557
        %v1052 = vunpack.c.l.b16 %v558
        %v1053 = vunpack.c.h.b16 %v558
        %v1054 = vunpack.c.l.b16 %v559
        %v1055 = vunpack.c.h.b16 %v559
        %v1056 = vunpack.c.l.b16 %v560
        %v1057 = vunpack.c.h.b16 %v560
        %v1058 = vunpack.c.l.b16 %v561
        %v1059 = vunpack.c.h.b16 %v561
        %v1060 = vunpack.c.l.b16 %v562
        %v1061 = vunpack.c.h.b16 %v562
        %v1062 = vunpack.c.l.b16 %v563
        %v1063 = vunpack.c.h.b16 %v563
        %v1064 = vunpack.c.l.b16 %v564
        %v1065 = vunpack.c.h.b16 %v564
        %v1066 = vunpack.c.l.b16 %v565
        %v1067 = vunpack.c.h.b16 %v565
        %v1068 = vunpack.c.l.b16 %v566
        %v1069 = vunpack.c.h.b16 %v566
        %v1070 = vunpack.c.l.b16 %v567
        %v1071 = vunpack.c.h.b16 %v567
        %v1072 = vunpack.c.l.b16 %v568
        %v1073 = vunpack.c.h.b16 %v568
        %v1074 = vunpack.c.l.b16 %v569
        %v1075 = vunpack.c.h.b16 %v569
        %v1076 = vunpack.c.l.b16 %v570
        %v1077 = vunpack.c.h.b16 %v570
        %v1078 = vunpack.c.l.b16 %v571
        %v1079 = vunpack.c.h.b16 %v571
        %v1080 = vunpack.c.l.b16 %v572
        %v1081 = vunpack.c.h.b16 %v572
        %v1082 = vunpack.c.l.b16 %v573
        %v1083 = vunpack.c.h.b16 %v573
        %v1084 = vunpack.c.l.b16 %v574
        %v1085 = vunpack.c.h.b16 %v574
        %v1086 = vunpack.c.l.b16 %v575
        %v1087 = vunpack.c.h.b16 %v575
        %v1088 = vunpack.c.l.b16 %v576
        %v1089 = vunpack.c.h.b16 %v576
        %v1090 = vunpack.c.l.b16 %v577
        %v1091 = vunpack.c.h.b16 %v577
        %v1092 = vunpack.c.l.b16 %v578
        %v1093 = vunpack.c.h.b16 %v578
        %v1094 = vunpack.c.l.b16 %v579
        %v1095 = vunpack.c.h.b16 %v579
        %v1096 = vunpack.c.l.b16 %v580
        %v1097 = vunpack.c.h.b16 %v580
        %v1098 = vunpack.c.l.b16 %v581
        %v1099 = vunpack.c.h.b16 %v581
        %v1100 = vunpack.c.l.b16 %v582
        %v1101 = vunpack.c.h.b16 %v582
        %v1102 = vunpack.c.l.b16 %v583
        %v1103 = vunpack.c.h.b16 %v583
        %v1104 = vunpack.c.l.b16 %v584
        %v1105 = vunpack.c.h.b16 %v584
        %v1106 = vunpack.c.l.b16 %v585
        %v1107 = vunpack.c.h.b16 %v585
        %v1108 = vunpack.c.l.b16 %v586
        %v1109 = vunpack.c.h.b16 %v586
        %v1110 = vunpack.c.l.b16 %v587
        %v1111 = vunpack.c.h.b16 %v587
        %v1112 = vunpack.c.l.b16 %v588
        %v1113 = vunpack.c.h.b16 %v588
        %v1114 = vunpack.c.l.b16 %v589
        %v1115 = vunpack.c.h.b16 %v589
        %v1116 = vunpack.c.l.b16 %v590
        %v1117 = vunpack.c.h.b16 %v590
        %v1118 = vunpack.c.l.b16 %v591
        %v1119 = vunpack.c.h.b16 %v591
        %v1120 = vunpack.c.l.b16 %v592
        %v1121 = vunpack.c.h.b16 %v592
        %v1122 = vunpack.c.l.b16 %v593
        %v1123 = vunpack.c.h.b16 %v593
        %v1124 = vunpack.c.l.b16 %v594
        %v1125 = vunpack.c.h.b16 %v594
        %v1126 = vunpack.c.l.b16 %v595
        %v1127 = vunpack.c.h.b16 %v595
        %v1128 = vunpack.c.l.b16 %v596
        %v1129 = vunpack.c.h.b16 %v596
        %v1130 = vunpack.c.l.b16 %v597
        %v1131 = vunpack.c.h.b16 %v597
        %v1132 = vunpack.c.l.b16 %v598
        %v1133 = vunpack.c.h.b16 %v598
        %v1134 = vunpack.c.l.b16 %v599
        %v1135 = vunpack.c.h.b16 %v599
        %v1136 = vunpack.c.l.b16 %v600
        %v1137 = vunpack.c.h.b16 %v600
        %v1138 = vunpack.c.l.b16 %v601
        %v1139 = vunpack.c.h.b16 %v601
        %v1140 = vunpack.c.l.b16 %v602
        %v1141 = vunpack.c.h.b16 %v602
        %v1142 = vunpack.c.l.b16 %v603
        %v1143 = vunpack.c.h.b16 %v603
        %v1144 = vunpack.c.l.b16 %v604
        %v1145 = vunpack.c.h.b16 %v604
        %v1146 = vunpack.c.l.b16 %v605
        %v1147 = vunpack.c.h.b16 %v605
        %v1148 = vunpack.c.l.b16 %v606
        %v1149 = vunpack.c.h.b16 %v606
        %v1150 = vunpack.c.l.b16 %v607
        %v1151 = vunpack.c.h.b16 %v607
        %v1152 = vunpack.c.l.b16 %v608
        %v1153 = vunpack.c.h.b16 %v608
        %v1154 = vunpack.c.l.b16 %v609
        %v1155 = vunpack.c.h.b16 %v609
        %v1156 = vunpack.c.l.b16 %v610
        %v1157 = vunpack.c.h.b16 %v610
        %v1158 = vunpack.c.l.b16 %v611
        %v1159 = vunpack.c.h.b16 %v611
        %v1160 = vunpack.c.l.b16 %v612
        %v1161 = vunpack.c.h.b16 %v612
        %v1162 = vunpack.c.l.b16 %v613
        %v1163 = vunpack.c.h.b16 %v613
        %v1164 = vunpack.c.l.b16 %v614
        %v1165 = vunpack.c.h.b16 %v614
        %v1166 = vunpack.c.l.b16 %v615
        %v1167 = vunpack.c.h.b16 %v615
        %v1168 = vunpack.c.l.b16 %v616
        %v1169 = vunpack.c.h.b16 %v616
        %v1170 = vunpack.c.l.b16 %v617
        %v1171 = vunpack.c.h.b16 %v617
        %v1172 = vunpack.c.l.b16 %v618
        %v1173 = vunpack.c.h.b16 %v618
        %v1174 = vunpack.c.l.b16 %v619
        %v1175 = vunpack.c.h.b16 %v619
        %v1176 = vunpack.c.l.b16 %v620
        %v1177 = vunpack.c.h.b16 %v620
        %v1178 = vunpack.c.l.b16 %v621
        %v1179 = vunpack.c.h.b16 %v621
        %v1180 = vunpack.c.l.b16 %v622
        %v1181 = vunpack.c.h.b16 %v622
        %v1182 = vunpack.c.l.b16 %v623
        %v1183 = vunpack.c.h.b16 %v623
        %v1184 = vunpack.c.l.b16 %v624
        %v1185 = vunpack.c.h.b16 %v624
        %v1186 = vunpack.c.l.b16 %v625
        %v1187 = vunpack.c.h.b16 %v625
        %v1188 = vunpack.c.l.b16 %v626
        %v1189 = vunpack.c.h.b16 %v626
        %v1190 = vunpack.c.l.b16 %v627
        %v1191 = vunpack.c.h.b16 %v627
        %v1192 = vunpack.c.l.b16 %v628
        %v1193 = vunpack.c.h.b16 %v628
        %v1194 = vunpack.c.l.b16 %v629
        %v1195 = vunpack.c.h.b16 %v629
        %v1196 = vunpack.c.l.b16 %v630
        %v1197 = vunpack.c.h.b16 %v630
        %v1198 = vunpack.c.l.b16 %v631
        %v1199 = vunpack.c.h.b16 %v631
        %v1200 = vunpack.c.l.b16 %v632
        %v1201 = vunpack.c.h.b16 %v632
        %v1202 = vunpack.c.l.b16 %v633
        %v1203 = vunpack.c.h.b16 %v633
        %v1204 = vunpack.c.l.b16 %v634
        %v1205 = vunpack.c.h.b16 %v634
        %v1206 = vunpack.c.l.b16 %v635
        %v1207 = vunpack.c.h.b16 %v635
        %v1208 = vunpack.c.l.b16 %v636
        %v1209 = vunpack.c.h.b16 %v636
        %v1210 = vunpack.c.l.b16 %v637
        %v1211 = vunpack.c.h.b16 %v637
        %v1212 = vunpack.c.l.b16 %v638
        %v1213 = vunpack.c.h.b16 %v638
        %v1214 = vunpack.c.l.b16 %v639
        %v1215 = vunpack.c.h.b16 %v639
        %v1216 = vunpack.c.l.b16 %v640
        %v1217 = vunpack.c.h.b16 %v640
        %v1218 = vunpack.c.l.b16 %v641
        %v1219 = vunpack.c.h.b16 %v641
        %v1220 = vunpack.c.l.b16 %v642
        %v1221 = vunpack.c.h.b16 %v642
        %v1222 = vunpack.c.l.b16 %v643
        %v1223 = vunpack.c.h.b16 %v643
        %v1224 = vunpack.c.l.b16 %v644
        %v1225 = vunpack.c.h.b16 %v644
        %v1226 = vunpack.c.l.b16 %v645
        %v1227 = vunpack.c.h.b16 %v645
        %v1228 = vunpack.c.l.b16 %v646
        %v1229 = vunpack.c.h.b16 %v646
        %v1230 = vunpack.c.l.b16 %v647
        %v1231 = vunpack.c.h.b16 %v647
        %v1232 = vunpack.c.l.b16 %v648
        %v1233 = vunpack.c.h.b16 %v648
        %v1234 = vunpack.c.l.b16 %v649
        %v1235 = vunpack.c.h.b16 %v649
        %v1236 = vunpack.c.l.b16 %v650
        %v1237 = vunpack.c.h.b16 %v650
        %v1238 = vunpack.c.l.b16 %v651
        %v1239 = vunpack.c.h.b16 %v651
        %v1240 = vunpack.c.l.b16 %v652
        %v1241 = vunpack.c.h.b16 %v652
        %v1242 = vunpack.c.l.b16 %v653
        %v1243 = vunpack.c.h.b16 %v653
        %v1244 = vunpack.c.l.b16 %v654
        %v1245 = vunpack.c.h.b16 %v654
        %v1246 = vunpack.c.l.b16 %v655
        %v1247 = vunpack.c.h.b16 %v655
        %v1248 = vunpack.c.l.b16 %v656
        %v1249 = vunpack.c.h.b16 %v656
        %v1250 = vunpack.c.l.b16 %v657
        %v1251 = vunpack.c.h.b16 %v657
        %v1252 = vunpack.c.l.b16 %v658
        %v1253 = vunpack.c.h.b16 %v658
        %v1254 = vunpack.c.l.b16 %v659
        %v1255 = vunpack.c.h.b16 %v659
        %v1256 = vunpack.c.l.b16 %v660
        %v1257 = vunpack.c.h.b16 %v660
        %v1258 = vunpack.c.l.b16 %v661
        %v1259 = vunpack.c.h.b16 %v661
        %v1260 = vunpack.c.l.b16 %v662
        %v1261 = vunpack.c.h.b16 %v662
        %v1262 = vunpack.c.l.b16 %v663
        %v1263 = vunpack.c.h.b16 %v663
        %v1264 = vunpack.c.l.b16 %v664
        %v1265 = vunpack.c.h.b16 %v664
        %v1266 = vunpack.c.l.b16 %v665
        %v1267 = vunpack.c.h.b16 %v665
        %v1268 = vunpack.c.l.b16 %v666
        %v1269 = vunpack.c.h.b16 %v666
        %v1270 = vunpack.c.l.b16 %v667
        %v1271 = vunpack.c.h.b16 %v667
        %v1272 = vunpack.c.l.b16 %v668
        %v1273 = vunpack.c.h.b16 %v668
        %v1274 = vunpack.c.l.b16 %v669
        %v1275 = vunpack.c.h.b16 %v669
        %v1276 = vunpack.c.l.b16 %v670
        %v1277 = vunpack.c.h.b16 %v670
        %v1278 = vunpack.c.l.b16 %v671
        %v1279 = vunpack.c.h.b16 %v671
        %v1280 = vunpack.c.l.b16 %v672
        %v1281 = vunpack.c.h.b16 %v672
        %v1282 = vunpack.c.l.b16 %v673
        %v1283 = vunpack.c.h.b16 %v673
        %v1284 = vunpack.c.l.b16 %v674
        %v1285 = vunpack.c.h.b16 %v674
        %v1286 = vunpack.c.l.b16 %v675
        %v1287 = vunpack.c.h.b16 %v675
        %v1288 = vunpack.c.l.b16 %v676
        %v1289 = vunpack.c.h.b16 %v676
        %v1290 = vunpack.c.l.b16 %v677
        %v1291 = vunpack.c.h.b16 %v677
        %v1292 = vunpack.c.l.b16 %v678
        %v1293 = vunpack.c.h.b16 %v678
        %v1294 = vunpack.c.l.b16 %v679
        %v1295 = vunpack.c.h.b16 %v679
        %v1296 = vunpack.c.l.b16 %v680
        %v1297 = vunpack.c.h.b16 %v680
        %v1298 = vunpack.c.l.b16 %v681
        %v1299 = vunpack.c.h.b16 %v681
        %v1300 = vunpack.c.l.b16 %v682
        %v1301 = vunpack.c.h.b16 %v682
        %v1302 = vunpack.c.l.b16 %v683
        %v1303 = vunpack.c.h.b16 %v683
        %v1304 = vunpack.c.l.b16 %v684
        %v1305 = vunpack.c.h.b16 %v684
        %v1306 = vunpack.c.l.b16 %v685
        %v1307 = vunpack.c.h.b16 %v685
        %v1308 = vunpack.c.l.b16 %v686
        %v1309 = vunpack.c.h.b16 %v686
        %v1310 = vunpack.c.l.b16 %v687
        %v1311 = vunpack.c.h.b16 %v687
        %v1312 = vunpack.c.l.b16 %v688
        %v1313 = vunpack.c.h.b16 %v688
        %v1314 = vunpack.c.l.b16 %v689
        %v1315 = vunpack.c.h.b16 %v689
        %v1316 = vunpack.c.l.b16 %v690
        %v1317 = vunpack.c.h.b16 %v690
        %v1318 = vunpack.c.l.b16 %v691
        %v1319 = vunpack.c.h.b16 %v691
        %v1320 = vunpack.c.l.b16 %v692
        %v1321 = vunpack.c.h.b16 %v692
        %v1322 = vunpack.c.l.b16 %v693
        %v1323 = vunpack.c.h.b16 %v693
        %v1324 = vunpack.c.l.b16 %v694
        %v1325 = vunpack.c.h.b16 %v694
        %v1326 = vunpack.c.l.b16 %v695
        %v1327 = vunpack.c.h.b16 %v695
        %v1328 = vunpack.c.l.b16 %v696
        %v1329 = vunpack.c.h.b16 %v696
        %v1330 = vunpack.c.l.b16 %v697
        %v1331 = vunpack.c.h.b16 %v697
        %v1332 = vunpack.c.l.b16 %v698
        %v1333 = vunpack.c.h.b16 %v698
        %v1334 = vunpack.c.l.b16 %v699
        %v1335 = vunpack.c.h.b16 %v699
        %v1336 = vunpack.c.l.b16 %v700
        %v1337 = vunpack.c.h.b16 %v700
        %v1338 = vunpack.c.l.b16 %v701
        %v1339 = vunpack.c.h.b16 %v701
        %v1340 = vunpack.c.l.b16 %v702
        %v1341 = vunpack.c.h.b16 %v702
        %v1342 = vunpack.c.l.b16 %v703
        %v1343 = vunpack.c.h.b16 %v703
        %v1344 = vunpack.c.l.b16 %v704
        %v1345 = vunpack.c.h.b16 %v704
        %v1346 = vunpack.c.l.b16 %v705
        %v1347 = vunpack.c.h.b16 %v705
        %v1348 = vunpack.c.l.b16 %v706
        %v1349 = vunpack.c.h.b16 %v706
        %v1350 = vunpack.c.l.b16 %v707
        %v1351 = vunpack.c.h.b16 %v707
        %v1352 = vunpack.c.l.b16 %v708
        %v1353 = vunpack.c.h.b16 %v708
        %v1354 = vunpack.c.l.b16 %v709
        %v1355 = vunpack.c.h.b16 %v709
        %v1356 = vunpack.c.l.b16 %v710
        %v1357 = vunpack.c.h.b16 %v710
        %v1358 = vunpack.c.l.b16 %v711
        %v1359 = vunpack.c.h.b16 %v711
        %v1360 = vunpack.c.l.b16 %v712
        %v1361 = vunpack.c.h.b16 %v712
        %v1362 = vunpack.c.l.b16 %v713
        %v1363 = vunpack.c.h.b16 %v713
        %v1364 = vunpack.c.l.b16 %v714
        %v1365 = vunpack.c.h.b16 %v714
        %v1366 = vunpack.c.l.b16 %v715
        %v1367 = vunpack.c.h.b16 %v715
        %v1368 = vunpack.c.l.b16 %v716
        %v1369 = vunpack.c.h.b16 %v716
        %v1370 = vunpack.c.l.b16 %v717
        %v1371 = vunpack.c.h.b16 %v717
        %v1372 = vunpack.c.l.b16 %v718
        %v1373 = vunpack.c.h.b16 %v718
        %v1374 = vunpack.c.l.b16 %v719
        %v1375 = vunpack.c.h.b16 %v719
        %v1376 = vunpack.c.l.b16 %v720
        %v1377 = vunpack.c.h.b16 %v720
        %v1378 = vunpack.c.l.b16 %v721
        %v1379 = vunpack.c.h.b16 %v721
        %v1380 = vunpack.c.l.b16 %v722
        %v1381 = vunpack.c.h.b16 %v722
        %v1382 = vunpack.c.l.b16 %v723
        %v1383 = vunpack.c.h.b16 %v723
        %v1384 = vunpack.c.l.b16 %v724
        %v1385 = vunpack.c.h.b16 %v724
        %v1386 = vunpack.c.l.b16 %v725
        %v1387 = vunpack.c.h.b16 %v725
        %v1388 = vunpack.c.l.b16 %v726
        %v1389 = vunpack.c.h.b16 %v726
        %v1390 = vunpack.c.l.b16 %v727
        %v1391 = vunpack.c.h.b16 %v727
        %v1392 = vunpack.c.l.b16 %v728
        %v1393 = vunpack.c.h.b16 %v728
        %v1394 = vunpack.c.l.b16 %v729
        %v1395 = vunpack.c.h.b16 %v729
        %v1396 = vunpack.c.l.b16 %v730
        %v1397 = vunpack.c.h.b16 %v730
        %v1398 = vunpack.c.l.b16 %v731
        %v1399 = vunpack.c.h.b16 %v731
        %v1400 = vunpack.c.l.b16 %v732
        %v1401 = vunpack.c.h.b16 %v732
        %v1402 = vunpack.c.l.b16 %v733
        %v1403 = vunpack.c.h.b16 %v733
        %v1404 = vunpack.c.l.b16 %v734
        %v1405 = vunpack.c.h.b16 %v734
        %v1406 = vunpack.c.l.b16 %v735
        %v1407 = vunpack.c.h.b16 %v735
        %v1408 = vunpack.c.l.b16 %v736
        %v1409 = vunpack.c.h.b16 %v736
        %v1410 = vunpack.c.l.b16 %v737
        %v1411 = vunpack.c.h.b16 %v737
        %v1412 = vunpack.c.l.b16 %v738
        %v1413 = vunpack.c.h.b16 %v738
        %v1414 = vunpack.c.l.b16 %v739
        %v1415 = vunpack.c.h.b16 %v739
        %v1416 = vunpack.c.l.b16 %v740
        %v1417 = vunpack.c.h.b16 %v740
        %v1418 = vunpack.c.l.b16 %v741
        %v1419 = vunpack.c.h.b16 %v741
        %v1420 = vunpack.c.l.b16 %v742
        %v1421 = vunpack.c.h.b16 %v742
        %v1422 = vunpack.c.l.b16 %v743
        %v1423 = vunpack.c.h.b16 %v743
        %v1424 = vunpack.c.l.b16 %v744
        %v1425 = vunpack.c.h.b16 %v744
        %v1426 = vunpack.c.l.b16 %v745
        %v1427 = vunpack.c.h.b16 %v745
        %v1428 = vunpack.c.l.b16 %v746
        %v1429 = vunpack.c.h.b16 %v746
        %v1430 = vunpack.c.l.b16 %v747
        %v1431 = vunpack.c.h.b16 %v747
        %v1432 = vunpack.c.l.b16 %v748
        %v1433 = vunpack.c.h.b16 %v748
        %v1434 = vunpack.c.l.b16 %v749
        %v1435 = vunpack.c.h.b16 %v749
        %v1436 = vunpack.c.l.b16 %v750
        %v1437 = vunpack.c.h.b16 %v750
        %v1438 = vunpack.c.l.b16 %v751
        %v1439 = vunpack.c.h.b16 %v751
        %v1440 = vunpack.c.l.b16 %v752
        %v1441 = vunpack.c.h.b16 %v752
        %v1442 = vunpack.c.l.b16 %v753
        %v1443 = vunpack.c.h.b16 %v753
        %v1444 = vunpack.c.l.b16 %v754
        %v1445 = vunpack.c.h.b16 %v754
        %v1446 = vunpack.c.l.b16 %v755
        %v1447 = vunpack.c.h.b16 %v755
        %v1448 = vunpack.c.l.b16 %v756
        %v1449 = vunpack.c.h.b16 %v756
        %v1450 = vunpack.c.l.b16 %v757
        %v1451 = vunpack.c.h.b16 %v757
        %v1452 = vunpack.c.l.b16 %v758
        %v1453 = vunpack.c.h.b16 %v758
        %v1454 = vunpack.c.l.b16 %v759
        %v1455 = vunpack.c.h.b16 %v759
        %v1456 = vunpack.c.l.b16 %v760
        %v1457 = vunpack.c.h.b16 %v760
        %v1458 = vunpack.c.l.b16 %v761
        %v1459 = vunpack.c.h.b16 %v761
        %v1460 = vunpack.c.l.b16 %v762
        %v1461 = vunpack.c.h.b16 %v762
        %v1462 = vunpack.c.l.b16 %v763
        %v1463 = vunpack.c.h.b16 %v763
        %v1464 = vunpack.c.l.b16 %v764
        %v1465 = vunpack.c.h.b16 %v764
        %v1466 = vunpack.c.l.b16 %v765
        %v1467 = vunpack.c.h.b16 %v765
        %v1468 = vunpack.c.l.b16 %v766
        %v1469 = vunpack.c.h.b16 %v766
        %v1470 = vunpack.c.l.b16 %v767
        %v1471 = vunpack.c.h.b16 %v767
        %v1472 = vunpack.c.l.b16 %v768
        %v1473 = vunpack.c.h.b16 %v768
        %v1474 = vunpack.c.l.b16 %v769
        %v1475 = vunpack.c.h.b16 %v769
        %v1476 = vunpack.c.l.b16 %v770
        %v1477 = vunpack.c.h.b16 %v770
        %v1478 = vpack.c.b16 %v1034, %v1030
        %v1479 = vpack.c.b16 %v1035, %v1031
        %v1480 = vpack.c.b16 %v1036, %v1032
        %v1481 = vpack.c.b16 %v1037, %v1033
        %v1482 = vpack.c.b16 %v1042, %v1038
        %v1483 = vpack.c.b16 %v1043, %v1039
        %v1484 = vpack.c.b16 %v1044, %v1040
        %v1485 = vpack.c.b16 %v1045, %v1041
        %v1486 = vpack.c.b16 %v1050, %v1046
        %v1487 = vpack.c.b16 %v1051, %v1047
        %v1488 = vpack.c.b16 %v1052, %v1048
        %v1489 = vpack.c.b16 %v1053, %v1049
        %v1490 = vpack.c.b16 %v1058, %v1054
        %v1491 = vpack.c.b16 %v1059, %v1055
        %v1492 = vpack.c.b16 %v1060, %v1056
        %v1493 = vpack.c.b16 %v1061, %v1057
        %v1494 = vpack.c.b16 %v1066, %v1062
        %v1495 = vpack.c.b16 %v1067, %v1063
        %v1496 = vpack.c.b16 %v1068, %v1064
        %v1497 = vpack.c.b16 %v1069, %v1065
        %v1498 = vpack.c.b16 %v1074, %v1070
        %v1499 = vpack.c.b16 %v1075, %v1071
        %v1500 = vpack.c.b16 %v1076, %v1072
        %v1501 = vpack.c.b16 %v1077, %v1073
        %v1502 = vpack.c.b16 %v1082, %v1078
        %v1503 = vpack.c.b16 %v1083, %v1079
        %v1504 = vpack.c.b16 %v1084, %v1080
        %v1505 = vpack.c.b16 %v1085, %v1081
        %v1506 = vpack.c.b16 %v1090, %v1086
        %v1507 = vpack.c.b16 %v1091, %v1087
        %v1508 = vpack.c.b16 %v1092, %v1088
        %v1509 = vpack.c.b16 %v1093, %v1089
        %v1510 = vpack.c.b16 %v1098, %v1094
        %v1511 = vpack.c.b16 %v1099, %v1095
        %v1512 = vpack.c.b16 %v1100, %v1096
        %v1513 = vpack.c.b16 %v1101, %v1097
        %v1514 = vpack.c.b16 %v1106, %v1102
        %v1515 = vpack.c.b16 %v1107, %v1103
        %v1516 = vpack.c.b16 %v1108, %v1104
        %v1517 = vpack.c.b16 %v1109, %v1105
        %v1518 = vpack.c.b16 %v1114, %v1110
        %v1519 = vpack.c.b16 %v1115, %v1111
        %v1520 = vpack.c.b16 %v1116, %v1112
        %v1521 = vpack.c.b16 %v1117, %v1113
        %v1522 = vpack.c.b16 %v1122, %v1118
        %v1523 = vpack.c.b16 %v1123, %v1119
        %v1524 = vpack.c.b16 %v1124, %v1120
        %v1525 = vpack.c.b16 %v1125, %v1121
        %v1526 = vpack.c.b16 %v1130, %v1126
        %v1527 = vpack.c.b16 %v1131, %v1127
        %v1528 = vpack.c.b16 %v1132, %v1128
        %v1529 = vpack.c.b16 %v1133, %v1129
        %v1530 = vpack.c.b16 %v1138, %v1134
        %v1531 = vpack.c.b16 %v1139, %v1135
        %v1532 = vpack.c.b16 %v1140, %v1136
        %v1533 = vpack.c.b16 %v1141, %v1137
        %v1534 = vpack.c.b16 %v1146, %v1142
        %v1535 = vpack.c.b16 %v1147, %v1143
        %v1536 = vpack.c.b16 %v1148, %v1144
        %v1537 = vpack.c.b16 %v1149, %v1145
        %v1538 = vpack.c.b16 %v1154, %v1150
        %v1539 = vpack.c.b16 %v1155, %v1151
        %v1540 = vpack.c.b16 %v1156, %v1152
        %v1541 = vpack.c.b16 %v1157, %v1153
        %v1542 = vpack.c.b16 %v1162, %v1158
        %v1543 = vpack.c.b16 %v1163, %v1159
        %v1544 = vpack.c.b16 %v1164, %v1160
        %v1545 = vpack.c.b16 %v1165, %v1161
        %v1546 = vpack.c.b16 %v1170, %v1166
        %v1547 = vpack.c.b16 %v1171, %v1167
        %v1548 = vpack.c.b16 %v1172, %v1168
        %v1549 = vpack.c.b16 %v1173, %v1169
        %v1550 = vpack.c.b16 %v1178, %v1174
        %v1551 = vpack.c.b16 %v1179, %v1175
        %v1552 = vpack.c.b16 %v1180, %v1176
        %v1553 = vpack.c.b16 %v1181, %v1177
        %v1554 = vpack.c.b16 %v1186, %v1182
        %v1555 = vpack.c.b16 %v1187, %v1183
        %v1556 = vpack.c.b16 %v1188, %v1184
        %v1557 = vpack.c.b16 %v1189, %v1185
        %v1558 = vpack.c.b16 %v1194, %v1190
        %v1559 = vpack.c.b16 %v1195, %v1191
        %v1560 = vpack.c.b16 %v1196, %v1192
        %v1561 = vpack.c.b16 %v1197, %v1193
        %v1562 = vpack.c.b16 %v1202, %v1198
        %v1563 = vpack.c.b16 %v1203, %v1199
        %v1564 = vpack.c.b16 %v1204, %v1200
        %v1565 = vpack.c.b16 %v1205, %v1201
        %v1566 = vpack.c.b16 %v1210, %v1206
        %v1567 = vpack.c.b16 %v1211, %v1207
        %v1568 = vpack.c.b16 %v1212, %v1208
        %v1569 = vpack.c.b16 %v1213, %v1209
        %v1570 = vpack.c.b16 %v1218, %v1214
        %v1571 = vpack.c.b16 %v1219, %v1215
        %v1572 = vpack.c.b16 %v1220, %v1216
        %v1573 = vpack.c.b16 %v1221, %v1217
        %v1574 = vpack.c.b16 %v1226, %v1222
        %v1575 = vpack.c.b16 %v1227, %v1223
        %v1576 = vpack.c.b16 %v1228, %v1224
        %v1577 = vpack.c.b16 %v1229, %v1225
        %v1578 = vpack.c.b16 %v1234, %v1230
        %v1579 = vpack.c.b16 %v1235, %v1231
        %v1580 = vpack.c.b16 %v1236, %v1232
        %v1581 = vpack.c.b16 %v1237, %v1233
        %v1582 = vpack.c.b16 %v1242, %v1238
        %v1583 = vpack.c.b16 %v1243, %v1239
        %v1584 = vpack.c.b16 %v1244, %v1240
        %v1585 = vpack.c.b16 %v1245, %v1241
        %v1586 = vpack.c.b16 %v1250, %v1246
        %v1587 = vpack.c.b16 %v1251, %v1247
        %v1588 = vpack.c.b16 %v1252, %v1248
        %v1589 = vpack.c.b16 %v1253, %v1249
        %v1590 = vpack.c.b16 %v1258, %v1254
        %v1591 = vpack.c.b16 %v1259, %v1255
        %v1592 = vpack.c.b16 %v1260, %v1256
        %v1593 = vpack.c.b16 %v1261, %v1257
        %v1594 = vpack.c.b16 %v1266, %v1262
        %v1595 = vpack.c.b16 %v1267, %v1263
        %v1596 = vpack.c.b16 %v1268, %v1264
        %v1597 = vpack.c.b16 %v1269, %v1265
        %v1598 = vpack.c.b16 %v1274, %v1270
        %v1599 = vpack.c.b16 %v1275, %v1271
        %v1600 = vpack.c.b16 %v1276, %v1272
        %v1601 = vpack.c.b16 %v1277, %v1273
        %v1602 = vpack.c.b16 %v1282, %v1278
        %v1603 = vpack.c.b16 %v1283, %v1279
        %v1604 = vpack.c.b16 %v1284, %v1280
        %v1605 = vpack.c.b16 %v1285, %v1281
        %v1606 = vpack.c.b16 %v1290, %v1286
        %v1607 = vpack.c.b16 %v1291, %v1287
        %v1608 = vpack.c.b16 %v1292, %v1288
        %v1609 = vpack.c.b16 %v1293, %v1289
        %v1610 = vpack.c.b16 %v1298, %v1294
        %v1611 = vpack.c.b16 %v1299, %v1295
        %v1612 = vpack.c.b16 %v1300, %v1296
        %v1613 = vpack.c.b16 %v1301, %v1297
        %v1614 = vpack.c.b16 %v1306, %v1302
        %v1615 = vpack.c.b16 %v1307, %v1303
        %v1616 = vpack.c.b16 %v1308, %v1304
        %v1617 = vpack.c.b16 %v1309, %v1305
        %v1618 = vpack.c.b16 %v1314, %v1310
        %v1619 = vpack.c.b16 %v1315, %v1311
        %v1620 = vpack.c.b16 %v1316, %v1312
        %v1621 = vpack.c.b16 %v1317, %v1313
        %v1622 = vpack.c.b16 %v1322, %v1318
        %v1623 = vpack.c.b16 %v1323, %v1319
        %v1624 = vpack.c.b16 %v1324, %v1320
        %v1625 = vpack.c.b16 %v1325, %v1321
        %v1626 = vpack.c.b16 %v1330, %v1326
        %v1627 = vpack.c.b16 %v1331, %v1327
        %v1628 = vpack.c.b16 %v1332, %v1328
        %v1629 = vpack.c.b16 %v1333, %v1329
        %v1630 = vpack.c.b16 %v1338, %v1334
        %v1631 = vpack.c.b16 %v1339, %v1335
        %v1632 = vpack.c.b16 %v1340, %v1336
        %v1633 = vpack.c.b16 %v1341, %v1337
        %v1634 = vpack.c.b16 %v1346, %v1342
        %v1635 = vpack.c.b16 %v1347, %v1343
        %v1636 = vpack.c.b16 %v1348, %v1344
        %v1637 = vpack.c.b16 %v1349, %v1345
        %v1638 = vpack.c.b16 %v1354, %v1350
        %v1639 = vpack.c.b16 %v1355, %v1351
        %v1640 = vpack.c.b16 %v1356, %v1352
        %v1641 = vpack.c.b16 %v1357, %v1353
        %v1642 = vpack.c.b16 %v1362, %v1358
        %v1643 = vpack.c.b16 %v1363, %v1359
        %v1644 = vpack.c.b16 %v1364, %v1360
        %v1645 = vpack.c.b16 %v1365, %v1361
        %v1646 = vpack.c.b16 %v1370, %v1366
        %v1647 = vpack.c.b16 %v1371, %v1367
        %v1648 = vpack.c.b16 %v1372, %v1368
        %v1649 = vpack.c.b16 %v1373, %v1369
        %v1650 = vpack.c.b16 %v1378, %v1374
        %v1651 = vpack.c.b16 %v1379, %v1375
        %v1652 = vpack.c.b16 %v1380, %v1376
        %v1653 = vpack.c.b16 %v1381, %v1377
        %v1654 = vpack.c.b16 %v1386, %v1382
        %v1655 = vpack.c.b16 %v1387, %v1383
        %v1656 = vpack.c.b16 %v1388, %v1384
        %v1657 = vpack.c.b16 %v1389, %v1385
        %v1658 = vpack.c.b16 %v1394, %v1390
        %v1659 = vpack.c.b16 %v1395, %v1391
        %v1660 = vpack.c.b16 %v1396, %v1392
        %v1661 = vpack.c.b16 %v1397, %v1393
        %v1662 = vpack.c.b16 %v1402, %v1398
        %v1663 = vpack.c.b16 %v1403, %v1399
        %v1664 = vpack.c.b16 %v1404, %v1400
        %v1665 = vpack.c.b16 %v1405, %v1401
        %v1666 = vpack.c.b16 %v1410, %v1406
        %v1667 = vpack.c.b16 %v1411, %v1407
        %v1668 = vpack.c.b16 %v1412, %v1408
        %v1669 = vpack.c.b16 %v1413, %v1409
        %v1670 = vpack.c.b16 %v1418, %v1414
        %v1671 = vpack.c.b16 %v1419, %v1415
        %v1672 = vpack.c.b16 %v1420, %v1416
        %v1673 = vpack.c.b16 %v1421, %v1417
        %v1674 = vpack.c.b16 %v1426, %v1422
        %v1675 = vpack.c.b16 %v1427, %v1423
        %v1676 = vpack.c.b16 %v1428, %v1424
        %v1677 = vpack.c.b16 %v1429, %v1425
        %v1678 = vpack.c.b16 %v1434, %v1430
        %v1679 = vpack.c.b16 %v1435, %v1431
        %v1680 = vpack.c.b16 %v1436, %v1432
        %v1681 = vpack.c.b16 %v1437, %v1433
        %v1682 = vpack.c.b16 %v1442, %v1438
        %v1683 = vpack.c.b16 %v1443, %v1439
        %v1684 = vpack.c.b16 %v1444, %v1440
        %v1685 = vpack.c.b16 %v1445, %v1441
        %v1686 = vpack.c.b16 %v1450, %v1446
        %v1687 = vpack.c.b16 %v1451, %v1447
        %v1688 = vpack.c.b16 %v1452, %v1448
        %v1689 = vpack.c.b16 %v1453, %v1449
        %v1690 = vpack.c.b16 %v1458, %v1454
        %v1691 = vpack.c.b16 %v1459, %v1455
        %v1692 = vpack.c.b16 %v1460, %v1456
        %v1693 = vpack.c.b16 %v1461, %v1457
        %v1694 = vpack.c.b16 %v1466, %v1462
        %v1695 = vpack.c.b16 %v1467, %v1463
        %v1696 = vpack.c.b16 %v1468, %v1464
        %v1697 = vpack.c.b16 %v1469, %v1465
        %v1698 = vpack.c.b16 %v1474, %v1470
        %v1699 = vpack.c.b16 %v1475, %v1471
        %v1700 = vpack.c.b16 %v1476, %v1472
        %v1701 = vpack.c.b16 %v1477, %v1473
        %1926 = vmatpush.bf16.msra.mxu0 %v1506
        %1927 = vmatpush.bf16.msra.mxu0 %v1502
        %1928 = vmatpush.bf16.msra.mxu0 %v1498
        %1929 = vmatpush.bf16.msra.mxu0 %v1494
        %1930 = vmatpush.bf16.msra.mxu0 %v1490
        %1931 = vmatpush.bf16.msra.mxu0 %v1486
        %1932 = vmatpush.bf16.msra.mxu0 %v1482
        %1933 = vmatpush.bf16.msra.mxu0 %v1478
        %1934 = vmatmul.bf16.gmra.mxu0 %v792
        %v1935 = vpop.f32.mrf.mxu0
        %v1936 = vadd.f32 %v773, %v1935
        %v1937 = vpop.f32.mrf.mxu0
        %1938 = vdwg.mxu0
        %1939 = vmatpush.bf16.msra.mxu0 %v1538
        %1940 = vmatpush.bf16.msra.mxu0 %v1534
        %1941 = vmatpush.bf16.msra.mxu0 %v1530
        %1942 = vmatpush.bf16.msra.mxu0 %v1526
        %1943 = vmatpush.bf16.msra.mxu0 %v1522
        %1944 = vmatpush.bf16.msra.mxu0 %v1518
        %1945 = vmatpush.bf16.msra.mxu0 %v1514
        %1946 = vmatpush.bf16.msra.mxu0 %v1510
        %1947 = vmatmul.bf16.gmra.mxu0 %v793
        %v1948 = vpop.f32.mrf.mxu0
        %v1949 = vadd.f32 %v1936, %v1948
        %v1950 = vpop.f32.mrf.mxu0
        %1951 = vdwg.mxu0
        %1952 = vmatpush.bf16.msra.mxu0 %v1570
        %1953 = vmatpush.bf16.msra.mxu0 %v1566
        %1954 = vmatpush.bf16.msra.mxu0 %v1562
        %1955 = vmatpush.bf16.msra.mxu0 %v1558
        %1956 = vmatpush.bf16.msra.mxu0 %v1554
        %1957 = vmatpush.bf16.msra.mxu0 %v1550
        %1958 = vmatpush.bf16.msra.mxu0 %v1546
        %1959 = vmatpush.bf16.msra.mxu0 %v1542
        %1960 = vmatmul.bf16.gmra.mxu0 %v794
        %v1961 = vpop.f32.mrf.mxu0
        %v1962 = vadd.f32 %v1949, %v1961
        %v1963 = vpop.f32.mrf.mxu0
        %1964 = vdwg.mxu0
        %1965 = vmatpush.bf16.msra.mxu0 %v1602
        %1966 = vmatpush.bf16.msra.mxu0 %v1598
        %1967 = vmatpush.bf16.msra.mxu0 %v1594
        %1968 = vmatpush.bf16.msra.mxu0 %v1590
        %1969 = vmatpush.bf16.msra.mxu0 %v1586
        %1970 = vmatpush.bf16.msra.mxu0 %v1582
        %1971 = vmatpush.bf16.msra.mxu0 %v1578
        %1972 = vmatpush.bf16.msra.mxu0 %v1574
        %1973 = vmatmul.bf16.gmra.mxu0 %v795
        %v1974 = vpop.f32.mrf.mxu0
        %v1975 = vadd.f32 %v1962, %v1974
        %v1976 = vpop.f32.mrf.mxu0
        %1977 = vdwg.mxu0
        %1978 = vmatpush.bf16.msra.mxu0 %v1634
        %1979 = vmatpush.bf16.msra.mxu0 %v1630
        %1980 = vmatpush.bf16.msra.mxu0 %v1626
        %1981 = vmatpush.bf16.msra.mxu0 %v1622
        %1982 = vmatpush.bf16.msra.mxu0 %v1618
        %1983 = vmatpush.bf16.msra.mxu0 %v1614
        %1984 = vmatpush.bf16.msra.mxu0 %v1610
        %1985 = vmatpush.bf16.msra.mxu0 %v1606
        %1986 = vmatmul.bf16.gmra.mxu0 %v796
        %v1987 = vpop.f32.mrf.mxu0
        %v1988 = vadd.f32 %v1975, %v1987
        %v1989 = vpop.f32.mrf.mxu0
        %1990 = vdwg.mxu0
        %1991 = vmatpush.bf16.msra.mxu0 %v1666
        %1992 = vmatpush.bf16.msra.mxu0 %v1662
        %1993 = vmatpush.bf16.msra.mxu0 %v1658
        %1994 = vmatpush.bf16.msra.mxu0 %v1654
        %1995 = vmatpush.bf16.msra.mxu0 %v1650
        %1996 = vmatpush.bf16.msra.mxu0 %v1646
        %1997 = vmatpush.bf16.msra.mxu0 %v1642
        %1998 = vmatpush.bf16.msra.mxu0 %v1638
        %1999 = vmatmul.bf16.gmra.mxu0 %v797
        %v2000 = vpop.f32.mrf.mxu0
        %v2001 = vadd.f32 %v1988, %v2000
        %v2002 = vpop.f32.mrf.mxu0
        %2003 = vdwg.mxu0
        %2004 = vmatpush.bf16.msra.mxu0 %v1698
        %2005 = vmatpush.bf16.msra.mxu0 %v1694
        %2006 = vmatpush.bf16.msra.mxu0 %v1690
        %2007 = vmatpush.bf16.msra.mxu0 %v1686
        %2008 = vmatpush.bf16.msra.mxu0 %v1682
        %2009 = vmatpush.bf16.msra.mxu0 %v1678
        %2010 = vmatpush.bf16.msra.mxu0 %v1674
        %2011 = vmatpush.bf16.msra.mxu0 %v1670
        %2012 = vmatmul.bf16.gmra.mxu0 %v798
        %v2013 = vpop.f32.mrf.mxu0
        %v2014 = vadd.f32 %v2001, %v2013
        %v2015 = vpop.f32.mrf.mxu0
        %2016 = vdwg.mxu0
        %2017 = vmatpush.bf16.msra.mxu0 %v1507
        %2018 = vmatpush.bf16.msra.mxu0 %v1503
        %2019 = vmatpush.bf16.msra.mxu0 %v1499
        %2020 = vmatpush.bf16.msra.mxu0 %v1495
        %2021 = vmatpush.bf16.msra.mxu0 %v1491
        %2022 = vmatpush.bf16.msra.mxu0 %v1487
        %2023 = vmatpush.bf16.msra.mxu0 %v1483
        %2024 = vmatpush.bf16.msra.mxu0 %v1479
        %2025 = vmatmul.bf16.gmra.mxu0 %v792
        %v2026 = vpop.f32.mrf.mxu0
        %v2027 = vadd.f32 %v774, %v2026
        %v2028 = vpop.f32.mrf.mxu0
        %2029 = vdwg.mxu0
        %2030 = vmatpush.bf16.msra.mxu0 %v1539
        %2031 = vmatpush.bf16.msra.mxu0 %v1535
        %2032 = vmatpush.bf16.msra.mxu0 %v1531
        %2033 = vmatpush.bf16.msra.mxu0 %v1527
        %2034 = vmatpush.bf16.msra.mxu0 %v1523
        %2035 = vmatpush.bf16.msra.mxu0 %v1519
        %2036 = vmatpush.bf16.msra.mxu0 %v1515
        %2037 = vmatpush.bf16.msra.mxu0 %v1511
        %2038 = vmatmul.bf16.gmra.mxu0 %v793
        %v2039 = vpop.f32.mrf.mxu0
        %v2040 = vadd.f32 %v2027, %v2039
        %v2041 = vpop.f32.mrf.mxu0
        %2042 = vdwg.mxu0
        %2043 = vmatpush.bf16.msra.mxu0 %v1571
        %2044 = vmatpush.bf16.msra.mxu0 %v1567
        %2045 = vmatpush.bf16.msra.mxu0 %v1563
        %2046 = vmatpush.bf16.msra.mxu0 %v1559
        %2047 = vmatpush.bf16.msra.mxu0 %v1555
        %2048 = vmatpush.bf16.msra.mxu0 %v1551
        %2049 = vmatpush.bf16.msra.mxu0 %v1547
        %2050 = vmatpush.bf16.msra.mxu0 %v1543
        %2051 = vmatmul.bf16.gmra.mxu0 %v794
        %v2052 = vpop.f32.mrf.mxu0
        %v2053 = vadd.f32 %v2040, %v2052
        %v2054 = vpop.f32.mrf.mxu0
        %2055 = vdwg.mxu0
        %2056 = vmatpush.bf16.msra.mxu0 %v1603
        %2057 = vmatpush.bf16.msra.mxu0 %v1599
        %2058 = vmatpush.bf16.msra.mxu0 %v1595
        %2059 = vmatpush.bf16.msra.mxu0 %v1591
        %2060 = vmatpush.bf16.msra.mxu0 %v1587
        %2061 = vmatpush.bf16.msra.mxu0 %v1583
        %2062 = vmatpush.bf16.msra.mxu0 %v1579
        %2063 = vmatpush.bf16.msra.mxu0 %v1575
        %2064 = vmatmul.bf16.gmra.mxu0 %v795
        %v2065 = vpop.f32.mrf.mxu0
        %v2066 = vadd.f32 %v2053, %v2065
        %v2067 = vpop.f32.mrf.mxu0
        %2068 = vdwg.mxu0
        %2069 = vmatpush.bf16.msra.mxu0 %v1635
        %2070 = vmatpush.bf16.msra.mxu0 %v1631
        %2071 = vmatpush.bf16.msra.mxu0 %v1627
        %2072 = vmatpush.bf16.msra.mxu0 %v1623
        %2073 = vmatpush.bf16.msra.mxu0 %v1619
        %2074 = vmatpush.bf16.msra.mxu0 %v1615
        %2075 = vmatpush.bf16.msra.mxu0 %v1611
        %2076 = vmatpush.bf16.msra.mxu0 %v1607
        %2077 = vmatmul.bf16.gmra.mxu0 %v796
        %v2078 = vpop.f32.mrf.mxu0
        %v2079 = vadd.f32 %v2066, %v2078
        %v2080 = vpop.f32.mrf.mxu0
        %2081 = vdwg.mxu0
        %2082 = vmatpush.bf16.msra.mxu0 %v1667
        %2083 = vmatpush.bf16.msra.mxu0 %v1663
        %2084 = vmatpush.bf16.msra.mxu0 %v1659
        %2085 = vmatpush.bf16.msra.mxu0 %v1655
        %2086 = vmatpush.bf16.msra.mxu0 %v1651
        %2087 = vmatpush.bf16.msra.mxu0 %v1647
        %2088 = vmatpush.bf16.msra.mxu0 %v1643
        %2089 = vmatpush.bf16.msra.mxu0 %v1639
        %2090 = vmatmul.bf16.gmra.mxu0 %v797
        %v2091 = vpop.f32.mrf.mxu0
        %v2092 = vadd.f32 %v2079, %v2091
        %v2093 = vpop.f32.mrf.mxu0
        %2094 = vdwg.mxu0
        %2095 = vmatpush.bf16.msra.mxu0 %v1699
        %2096 = vmatpush.bf16.msra.mxu0 %v1695
        %2097 = vmatpush.bf16.msra.mxu0 %v1691
        %2098 = vmatpush.bf16.msra.mxu0 %v1687
        %2099 = vmatpush.bf16.msra.mxu0 %v1683
        %2100 = vmatpush.bf16.msra.mxu0 %v1679
        %2101 = vmatpush.bf16.msra.mxu0 %v1675
        %2102 = vmatpush.bf16.msra.mxu0 %v1671
        %2103 = vmatmul.bf16.gmra.mxu0 %v798
        %v2104 = vpop.f32.mrf.mxu0
        %v2105 = vadd.f32 %v2092, %v2104
        %v2106 = vpop.f32.mrf.mxu0
        %2107 = vdwg.mxu0
        %2108 = vmatpush.bf16.msra.mxu0 %v1508
        %2109 = vmatpush.bf16.msra.mxu0 %v1504
        %2110 = vmatpush.bf16.msra.mxu0 %v1500
        %2111 = vmatpush.bf16.msra.mxu0 %v1496
        %2112 = vmatpush.bf16.msra.mxu0 %v1492
        %2113 = vmatpush.bf16.msra.mxu0 %v1488
        %2114 = vmatpush.bf16.msra.mxu0 %v1484
        %2115 = vmatpush.bf16.msra.mxu0 %v1480
        %2116 = vmatmul.bf16.gmra.mxu0 %v792
        %v2117 = vpop.f32.mrf.mxu0
        %v2118 = vadd.f32 %v775, %v2117
        %v2119 = vpop.f32.mrf.mxu0
        %2120 = vdwg.mxu0
        %2121 = vmatpush.bf16.msra.mxu0 %v1540
        %2122 = vmatpush.bf16.msra.mxu0 %v1536
        %2123 = vmatpush.bf16.msra.mxu0 %v1532
        %2124 = vmatpush.bf16.msra.mxu0 %v1528
        %2125 = vmatpush.bf16.msra.mxu0 %v1524
        %2126 = vmatpush.bf16.msra.mxu0 %v1520
        %2127 = vmatpush.bf16.msra.mxu0 %v1516
        %2128 = vmatpush.bf16.msra.mxu0 %v1512
        %2129 = vmatmul.bf16.gmra.mxu0 %v793
        %v2130 = vpop.f32.mrf.mxu0
        %v2131 = vadd.f32 %v2118, %v2130
        %v2132 = vpop.f32.mrf.mxu0
        %2133 = vdwg.mxu0
        %2134 = vmatpush.bf16.msra.mxu0 %v1572
        %2135 = vmatpush.bf16.msra.mxu0 %v1568
        %2136 = vmatpush.bf16.msra.mxu0 %v1564
        %2137 = vmatpush.bf16.msra.mxu0 %v1560
        %2138 = vmatpush.bf16.msra.mxu0 %v1556
        %2139 = vmatpush.bf16.msra.mxu0 %v1552
        %2140 = vmatpush.bf16.msra.mxu0 %v1548
        %2141 = vmatpush.bf16.msra.mxu0 %v1544
        %2142 = vmatmul.bf16.gmra.mxu0 %v794
        %v2143 = vpop.f32.mrf.mxu0
        %v2144 = vadd.f32 %v2131, %v2143
        %v2145 = vpop.f32.mrf.mxu0
        %2146 = vdwg.mxu0
        %2147 = vmatpush.bf16.msra.mxu0 %v1604
        %2148 = vmatpush.bf16.msra.mxu0 %v1600
        %2149 = vmatpush.bf16.msra.mxu0 %v1596
        %2150 = vmatpush.bf16.msra.mxu0 %v1592
        %2151 = vmatpush.bf16.msra.mxu0 %v1588
        %2152 = vmatpush.bf16.msra.mxu0 %v1584
        %2153 = vmatpush.bf16.msra.mxu0 %v1580
        %2154 = vmatpush.bf16.msra.mxu0 %v1576
        %2155 = vmatmul.bf16.gmra.mxu0 %v795
        %v2156 = vpop.f32.mrf.mxu0
        %v2157 = vadd.f32 %v2144, %v2156
        %v2158 = vpop.f32.mrf.mxu0
        %2159 = vdwg.mxu0
        %2160 = vmatpush.bf16.msra.mxu0 %v1636
        %2161 = vmatpush.bf16.msra.mxu0 %v1632
        %2162 = vmatpush.bf16.msra.mxu0 %v1628
        %2163 = vmatpush.bf16.msra.mxu0 %v1624
        %2164 = vmatpush.bf16.msra.mxu0 %v1620
        %2165 = vmatpush.bf16.msra.mxu0 %v1616
        %2166 = vmatpush.bf16.msra.mxu0 %v1612
        %2167 = vmatpush.bf16.msra.mxu0 %v1608
        %2168 = vmatmul.bf16.gmra.mxu0 %v796
        %v2169 = vpop.f32.mrf.mxu0
        %v2170 = vadd.f32 %v2157, %v2169
        %v2171 = vpop.f32.mrf.mxu0
        %2172 = vdwg.mxu0
        %2173 = vmatpush.bf16.msra.mxu0 %v1668
        %2174 = vmatpush.bf16.msra.mxu0 %v1664
        %2175 = vmatpush.bf16.msra.mxu0 %v1660
        %2176 = vmatpush.bf16.msra.mxu0 %v1656
        %2177 = vmatpush.bf16.msra.mxu0 %v1652
        %2178 = vmatpush.bf16.msra.mxu0 %v1648
        %2179 = vmatpush.bf16.msra.mxu0 %v1644
        %2180 = vmatpush.bf16.msra.mxu0 %v1640
        %2181 = vmatmul.bf16.gmra.mxu0 %v797
        %v2182 = vpop.f32.mrf.mxu0
        %v2183 = vadd.f32 %v2170, %v2182
        %v2184 = vpop.f32.mrf.mxu0
        %2185 = vdwg.mxu0
        %2186 = vmatpush.bf16.msra.mxu0 %v1700
        %2187 = vmatpush.bf16.msra.mxu0 %v1696
        %2188 = vmatpush.bf16.msra.mxu0 %v1692
        %2189 = vmatpush.bf16.msra.mxu0 %v1688
        %2190 = vmatpush.bf16.msra.mxu0 %v1684
        %2191 = vmatpush.bf16.msra.mxu0 %v1680
        %2192 = vmatpush.bf16.msra.mxu0 %v1676
        %2193 = vmatpush.bf16.msra.mxu0 %v1672
        %2194 = vmatmul.bf16.gmra.mxu0 %v798
        %v2195 = vpop.f32.mrf.mxu0
        %v2196 = vadd.f32 %v2183, %v2195
        %v2197 = vpop.f32.mrf.mxu0
        %2198 = vdwg.mxu0
        %2199 = vmatpush.bf16.msra.mxu0 %v1509
        %2200 = vmatpush.bf16.msra.mxu0 %v1505
        %2201 = vmatpush.bf16.msra.mxu0 %v1501
        %2202 = vmatpush.bf16.msra.mxu0 %v1497
        %2203 = vmatpush.bf16.msra.mxu0 %v1493
        %2204 = vmatpush.bf16.msra.mxu0 %v1489
        %2205 = vmatpush.bf16.msra.mxu0 %v1485
        %2206 = vmatpush.bf16.msra.mxu0 %v1481
        %2207 = vmatmul.bf16.gmra.mxu0 %v792
        %v2208 = vpop.f32.mrf.mxu0
        %v2209 = vadd.f32 %v776, %v2208
        %v2210 = vpop.f32.mrf.mxu0
        %2211 = vdwg.mxu0
        %2212 = vmatpush.bf16.msra.mxu0 %v1541
        %2213 = vmatpush.bf16.msra.mxu0 %v1537
        %2214 = vmatpush.bf16.msra.mxu0 %v1533
        %2215 = vmatpush.bf16.msra.mxu0 %v1529
        %2216 = vmatpush.bf16.msra.mxu0 %v1525
        %2217 = vmatpush.bf16.msra.mxu0 %v1521
        %2218 = vmatpush.bf16.msra.mxu0 %v1517
        %2219 = vmatpush.bf16.msra.mxu0 %v1513
        %2220 = vmatmul.bf16.gmra.mxu0 %v793
        %v2221 = vpop.f32.mrf.mxu0
        %v2222 = vadd.f32 %v2209, %v2221
        %v2223 = vpop.f32.mrf.mxu0
        %2224 = vdwg.mxu0
        %2225 = vmatpush.bf16.msra.mxu0 %v1573
        %2226 = vmatpush.bf16.msra.mxu0 %v1569
        %2227 = vmatpush.bf16.msra.mxu0 %v1565
        %2228 = vmatpush.bf16.msra.mxu0 %v1561
        %2229 = vmatpush.bf16.msra.mxu0 %v1557
        %2230 = vmatpush.bf16.msra.mxu0 %v1553
        %2231 = vmatpush.bf16.msra.mxu0 %v1549
        %2232 = vmatpush.bf16.msra.mxu0 %v1545
        %2233 = vmatmul.bf16.gmra.mxu0 %v794
        %v2234 = vpop.f32.mrf.mxu0
        %v2235 = vadd.f32 %v2222, %v2234
        %v2236 = vpop.f32.mrf.mxu0
        %2237 = vdwg.mxu0
        %2238 = vmatpush.bf16.msra.mxu0 %v1605
        %2239 = vmatpush.bf16.msra.mxu0 %v1601
        %2240 = vmatpush.bf16.msra.mxu0 %v1597
        %2241 = vmatpush.bf16.msra.mxu0 %v1593
        %2242 = vmatpush.bf16.msra.mxu0 %v1589
        %2243 = vmatpush.bf16.msra.mxu0 %v1585
        %2244 = vmatpush.bf16.msra.mxu0 %v1581
        %2245 = vmatpush.bf16.msra.mxu0 %v1577
        %2246 = vmatmul.bf16.gmra.mxu0 %v795
        %v2247 = vpop.f32.mrf.mxu0
        %v2248 = vadd.f32 %v2235, %v2247
        %v2249 = vpop.f32.mrf.mxu0
        %2250 = vdwg.mxu0
        %2251 = vmatpush.bf16.msra.mxu0 %v1637
        %2252 = vmatpush.bf16.msra.mxu0 %v1633
        %2253 = vmatpush.bf16.msra.mxu0 %v1629
        %2254 = vmatpush.bf16.msra.mxu0 %v1625
        %2255 = vmatpush.bf16.msra.mxu0 %v1621
        %2256 = vmatpush.bf16.msra.mxu0 %v1617
        %2257 = vmatpush.bf16.msra.mxu0 %v1613
        %2258 = vmatpush.bf16.msra.mxu0 %v1609
        %2259 = vmatmul.bf16.gmra.mxu0 %v796
        %v2260 = vpop.f32.mrf.mxu0
        %v2261 = vadd.f32 %v2248, %v2260
        %v2262 = vpop.f32.mrf.mxu0
        %2263 = vdwg.mxu0
        %2264 = vmatpush.bf16.msra.mxu0 %v1669
        %2265 = vmatpush.bf16.msra.mxu0 %v1665
        %2266 = vmatpush.bf16.msra.mxu0 %v1661
        %2267 = vmatpush.bf16.msra.mxu0 %v1657
        %2268 = vmatpush.bf16.msra.mxu0 %v1653
        %2269 = vmatpush.bf16.msra.mxu0 %v1649
        %2270 = vmatpush.bf16.msra.mxu0 %v1645
        %2271 = vmatpush.bf16.msra.mxu0 %v1641
        %2272 = vmatmul.bf16.gmra.mxu0 %v797
        %v2273 = vpop.f32.mrf.mxu0
        %v2274 = vadd.f32 %v2261, %v2273
        %v2275 = vpop.f32.mrf.mxu0
        %2276 = vdwg.mxu0
        %2277 = vmatpush.bf16.msra.mxu0 %v1701
        %2278 = vmatpush.bf16.msra.mxu0 %v1697
        %2279 = vmatpush.bf16.msra.mxu0 %v1693
        %2280 = vmatpush.bf16.msra.mxu0 %v1689
        %2281 = vmatpush.bf16.msra.mxu0 %v1685
        %2282 = vmatpush.bf16.msra.mxu0 %v1681
        %2283 = vmatpush.bf16.msra.mxu0 %v1677
        %2284 = vmatpush.bf16.msra.mxu0 %v1673
        %2285 = vmatmul.bf16.gmra.mxu0 %v798
        %v2286 = vpop.f32.mrf.mxu0
        %v2287 = vadd.f32 %v2274, %v2286
        %v2288 = vpop.f32.mrf.mxu0
        %2289 = vdwg.mxu0
        %v2290 = vld [vmem:[%s3] sm:$0xf]
        %v2291 = vld [vmem:[%s4] sm:$0xf]
        %v2292 = vadd.f32 %v2014, %v2105
        %v2293 = vadd.f32 %v2292, %v2196
        %v2294 = vadd.f32 %v2293, %v2287
        %2295 = vadd.xlane.f32.xlu0 %v2294
        %v2296 = vpop.xlane.xlu0 %2295
        %v2297 = vmul.f32 %v2014, %v2014
        %v2298 = vmul.f32 %v2105, %v2105
        %v2299 = vmul.f32 %v2196, %v2196
        %v2300 = vmul.f32 %v2287, %v2287
        %v2301 = vadd.f32 %v2297, %v2298
        %v2302 = vadd.f32 %v2301, %v2299
        %v2303 = vadd.f32 %v2302, %v2300
        %2304 = vadd.xlane.f32.xlu0 %v2303
        %v2305 = vpop.xlane.xlu0 %2304
        %v2306 = vmul.f32 %v2296, 0.001953125
        %v2307 = vmul.f32 %v2305, 0.001953125
        %v2308 = vmul.f32 %v2306, %v2306
        %v2309 = vsub.f32 %v2307, %v2308
        %v2310 = vadd.f32 %v2309, 1e-05
        %v2311 = vrsqrt.pop %v2310
        %v2312 = vmul.f32 %v2311, %v2310
        %v2313 = vmul.f32 %v2312, %v2311
        %v2314 = vmul.f32 0.5, %v2313
        %v2315 = vsub.f32 1.5, %v2314
        %v2316 = vmul.f32 %v2311, %v2315
        %vm2317 = vweird.f32 %v2310
        %vm2318 = vweird.f32 %v2311
        %vm2319 = vmor %vm2317, %vm2318
        %v2320 = vsel %vm2319, %v2311, %v2316
        %v2321 = vsub.f32 %v2014, %v2306
        %v2322 = vsub.f32 %v2105, %v2306
        %v2323 = vsub.f32 %v2196, %v2306
        %v2324 = vsub.f32 %v2287, %v2306
        %v2325 = vmul.f32 %v2321, %v2320
        %v2326 = vmul.f32 %v2322, %v2320
        %v2327 = vmul.f32 %v2323, %v2320
        %v2328 = vmul.f32 %v2324, %v2320
        %v2330 = vperm.slane %v2290, 0
        %v2331 = vperm.slane %v2290, 1
        %v2332 = vperm.slane %v2290, 2
        %v2333 = vperm.slane %v2290, 3
        %v2338 = vmul.f32 %v2325, %v2330
        %v2339 = vmul.f32 %v2326, %v2331
        %v2340 = vmul.f32 %v2327, %v2332
        %v2341 = vmul.f32 %v2328, %v2333
        %v2343 = vperm.slane %v2291, 0
        %v2344 = vperm.slane %v2291, 1
        %v2345 = vperm.slane %v2291, 2
        %v2346 = vperm.slane %v2291, 3
        %v2351 = vadd.f32 %v2338, %v2343
        %v2352 = vadd.f32 %v2339, %v2344
        %v2353 = vadd.f32 %v2340, %v2345
        %v2354 = vadd.f32 %v2341, %v2346
        %v2355 = vmax.f32 %v2351, 0.0
        %v2356 = vmax.f32 %v2352, 0.0
        %v2357 = vmax.f32 %v2353, 0.0
        %v2358 = vmax.f32 %v2354, 0.0
        %v2359 = vpack.c.bf16 %v2355, %v2355
        %v2360 = vpack.c.bf16 %v2356, %v2356
        %v2361 = vpack.c.bf16 %v2357, %v2357
        %v2362 = vpack.c.bf16 %v2358, %v2358
        %v2363 = vld [vmem:[#allocation5] sm:$0xff]
        %v2364 = vld [vmem:[#allocation5 + $0x8] sm:$0xff]
        %v2365 = vld [vmem:[#allocation5 + $0x10] sm:$0xff]
        %v2366 = vld [vmem:[#allocation5 + $0x18] sm:$0xff]
        %v2367 = vld [vmem:[#allocation5 + $0x20] sm:$0xff]
        %v2368 = vld [vmem:[#allocation5 + $0x28] sm:$0xff]
        %v2369 = vld [vmem:[#allocation5 + $0x30] sm:$0xff]
        %v2370 = vld [vmem:[#allocation5 + $0x38] sm:$0xff]
        %v2371 = vld [vmem:[#allocation5 + $0x40] sm:$0xff]
        %v2372 = vld [vmem:[#allocation5 + $0x48] sm:$0xff]
        %v2373 = vld [vmem:[#allocation5 + $0x50] sm:$0xff]
        %v2374 = vld [vmem:[#allocation5 + $0x58] sm:$0xff]
        %v2375 = vld [vmem:[#allocation5 + $0x60] sm:$0xff]
        %v2376 = vld [vmem:[#allocation5 + $0x68] sm:$0xff]
        %v2377 = vld [vmem:[#allocation5 + $0x70] sm:$0xff]
        %v2378 = vld [vmem:[#allocation5 + $0x78] sm:$0xff]
        %v2379 = vld [vmem:[#allocation5 + $0x80] sm:$0xff]
        %v2380 = vld [vmem:[#allocation5 + $0x88] sm:$0xff]
        %v2381 = vld [vmem:[#allocation5 + $0x90] sm:$0xff]
        %v2382 = vld [vmem:[#allocation5 + $0x98] sm:$0xff]
        %v2383 = vld [vmem:[#allocation5 + $0xa0] sm:$0xff]
        %v2384 = vld [vmem:[#allocation5 + $0xa8] sm:$0xff]
        %v2385 = vld [vmem:[#allocation5 + $0xb0] sm:$0xff]
        %v2386 = vld [vmem:[#allocation5 + $0xb8] sm:$0xff]
        %v2387 = vld [vmem:[#allocation5 + $0xc0] sm:$0xff]
        %v2388 = vld [vmem:[#allocation5 + $0xc8] sm:$0xff]
        %v2389 = vld [vmem:[#allocation5 + $0xd0] sm:$0xff]
        %v2390 = vld [vmem:[#allocation5 + $0xd8] sm:$0xff]
        %v2391 = vld [vmem:[#allocation5 + $0xe0] sm:$0xff]
        %v2392 = vld [vmem:[#allocation5 + $0xe8] sm:$0xff]
        %v2393 = vld [vmem:[#allocation5 + $0xf0] sm:$0xff]
        %v2394 = vld [vmem:[#allocation5 + $0xf8] sm:$0xff]
        %v2395 = vld [vmem:[#allocation5 + $0x100] sm:$0xff]
        %v2396 = vld [vmem:[#allocation5 + $0x108] sm:$0xff]
        %v2397 = vld [vmem:[#allocation5 + $0x110] sm:$0xff]
        %v2398 = vld [vmem:[#allocation5 + $0x118] sm:$0xff]
        %v2399 = vld [vmem:[#allocation5 + $0x120] sm:$0xff]
        %v2400 = vld [vmem:[#allocation5 + $0x128] sm:$0xff]
        %v2401 = vld [vmem:[#allocation5 + $0x130] sm:$0xff]
        %v2402 = vld [vmem:[#allocation5 + $0x138] sm:$0xff]
        %v2403 = vld [vmem:[#allocation5 + $0x140] sm:$0xff]
        %v2404 = vld [vmem:[#allocation5 + $0x148] sm:$0xff]
        %v2405 = vld [vmem:[#allocation5 + $0x150] sm:$0xff]
        %v2406 = vld [vmem:[#allocation5 + $0x158] sm:$0xff]
        %v2407 = vld [vmem:[#allocation5 + $0x160] sm:$0xff]
        %v2408 = vld [vmem:[#allocation5 + $0x168] sm:$0xff]
        %v2409 = vld [vmem:[#allocation5 + $0x170] sm:$0xff]
        %v2410 = vld [vmem:[#allocation5 + $0x178] sm:$0xff]
        %v2411 = vld [vmem:[#allocation5 + $0x180] sm:$0xff]
        %v2412 = vld [vmem:[#allocation5 + $0x188] sm:$0xff]
        %v2413 = vld [vmem:[#allocation5 + $0x190] sm:$0xff]
        %v2414 = vld [vmem:[#allocation5 + $0x198] sm:$0xff]
        %v2415 = vld [vmem:[#allocation5 + $0x1a0] sm:$0xff]
        %v2416 = vld [vmem:[#allocation5 + $0x1a8] sm:$0xff]
        %v2417 = vld [vmem:[#allocation5 + $0x1b0] sm:$0xff]
        %v2418 = vld [vmem:[#allocation5 + $0x1b8] sm:$0xff]
        %v2419 = vld [vmem:[#allocation5 + $0x1c0] sm:$0xff]
        %v2420 = vld [vmem:[#allocation5 + $0x1c8] sm:$0xff]
        %v2421 = vld [vmem:[#allocation5 + $0x1d0] sm:$0xff]
        %v2422 = vld [vmem:[#allocation5 + $0x1d8] sm:$0xff]
        %v2423 = vld [vmem:[#allocation5 + $0x1e0] sm:$0xff]
        %v2424 = vld [vmem:[#allocation5 + $0x1e8] sm:$0xff]
        %v2425 = vld [vmem:[#allocation5 + $0x1f0] sm:$0xff]
        %v2426 = vld [vmem:[#allocation5 + $0x1f8] sm:$0xff]
        %v2427 = vld [vmem:[#allocation5 + $0x200] sm:$0xff]
        %v2428 = vld [vmem:[#allocation5 + $0x208] sm:$0xff]
        %v2429 = vld [vmem:[#allocation5 + $0x210] sm:$0xff]
        %v2430 = vld [vmem:[#allocation5 + $0x218] sm:$0xff]
        %v2431 = vld [vmem:[#allocation5 + $0x220] sm:$0xff]
        %v2432 = vld [vmem:[#allocation5 + $0x228] sm:$0xff]
        %v2433 = vld [vmem:[#allocation5 + $0x230] sm:$0xff]
        %v2434 = vld [vmem:[#allocation5 + $0x238] sm:$0xff]
        %v2435 = vld [vmem:[#allocation5 + $0x240] sm:$0xff]
        %v2436 = vld [vmem:[#allocation5 + $0x248] sm:$0xff]
        %v2437 = vld [vmem:[#allocation5 + $0x250] sm:$0xff]
        %v2438 = vld [vmem:[#allocation5 + $0x258] sm:$0xff]
        %v2439 = vld [vmem:[#allocation5 + $0x260] sm:$0xff]
        %v2440 = vld [vmem:[#allocation5 + $0x268] sm:$0xff]
        %v2441 = vld [vmem:[#allocation5 + $0x270] sm:$0xff]
        %v2442 = vld [vmem:[#allocation5 + $0x278] sm:$0xff]
        %v2443 = vld [vmem:[#allocation5 + $0x280] sm:$0xff]
        %v2444 = vld [vmem:[#allocation5 + $0x288] sm:$0xff]
        %v2445 = vld [vmem:[#allocation5 + $0x290] sm:$0xff]
        %v2446 = vld [vmem:[#allocation5 + $0x298] sm:$0xff]
        %v2447 = vld [vmem:[#allocation5 + $0x2a0] sm:$0xff]
        %v2448 = vld [vmem:[#allocation5 + $0x2a8] sm:$0xff]
        %v2449 = vld [vmem:[#allocation5 + $0x2b0] sm:$0xff]
        %v2450 = vld [vmem:[#allocation5 + $0x2b8] sm:$0xff]
        %v2451 = vld [vmem:[#allocation5 + $0x2c0] sm:$0xff]
        %v2452 = vld [vmem:[#allocation5 + $0x2c8] sm:$0xff]
        %v2453 = vld [vmem:[#allocation5 + $0x2d0] sm:$0xff]
        %v2454 = vld [vmem:[#allocation5 + $0x2d8] sm:$0xff]
        %v2455 = vld [vmem:[#allocation5 + $0x2e0] sm:$0xff]
        %v2456 = vld [vmem:[#allocation5 + $0x2e8] sm:$0xff]
        %v2457 = vld [vmem:[#allocation5 + $0x2f0] sm:$0xff]
        %v2458 = vld [vmem:[#allocation5 + $0x2f8] sm:$0xff]
        %v2459 = vld [vmem:[#allocation5 + $0x300] sm:$0xff]
        %v2460 = vld [vmem:[#allocation5 + $0x308] sm:$0xff]
        %v2461 = vld [vmem:[#allocation5 + $0x310] sm:$0xff]
        %v2462 = vld [vmem:[#allocation5 + $0x318] sm:$0xff]
        %v2463 = vld [vmem:[#allocation5 + $0x320] sm:$0xff]
        %v2464 = vld [vmem:[#allocation5 + $0x328] sm:$0xff]
        %v2465 = vld [vmem:[#allocation5 + $0x330] sm:$0xff]
        %v2466 = vld [vmem:[#allocation5 + $0x338] sm:$0xff]
        %v2467 = vld [vmem:[#allocation5 + $0x340] sm:$0xff]
        %v2468 = vld [vmem:[#allocation5 + $0x348] sm:$0xff]
        %v2469 = vld [vmem:[#allocation5 + $0x350] sm:$0xff]
        %v2470 = vld [vmem:[#allocation5 + $0x358] sm:$0xff]
        %v2471 = vld [vmem:[#allocation5 + $0x360] sm:$0xff]
        %v2472 = vld [vmem:[#allocation5 + $0x368] sm:$0xff]
        %v2473 = vld [vmem:[#allocation5 + $0x370] sm:$0xff]
        %v2474 = vld [vmem:[#allocation5 + $0x378] sm:$0xff]
        %v2475 = vld [vmem:[#allocation5 + $0x380] sm:$0xff]
        %v2476 = vld [vmem:[#allocation5 + $0x388] sm:$0xff]
        %v2477 = vld [vmem:[#allocation5 + $0x390] sm:$0xff]
        %v2478 = vld [vmem:[#allocation5 + $0x398] sm:$0xff]
        %v2479 = vld [vmem:[#allocation5 + $0x3a0] sm:$0xff]
        %v2480 = vld [vmem:[#allocation5 + $0x3a8] sm:$0xff]
        %v2481 = vld [vmem:[#allocation5 + $0x3b0] sm:$0xff]
        %v2482 = vld [vmem:[#allocation5 + $0x3b8] sm:$0xff]
        %v2483 = vld [vmem:[#allocation5 + $0x3c0] sm:$0xff]
        %v2484 = vld [vmem:[#allocation5 + $0x3c8] sm:$0xff]
        %v2485 = vld [vmem:[#allocation5 + $0x3d0] sm:$0xff]
        %v2486 = vld [vmem:[#allocation5 + $0x3d8] sm:$0xff]
        %v2487 = vld [vmem:[#allocation5 + $0x3e0] sm:$0xff]
        %v2488 = vld [vmem:[#allocation5 + $0x3e8] sm:$0xff]
        %v2489 = vld [vmem:[#allocation5 + $0x3f0] sm:$0xff]
        %v2490 = vld [vmem:[#allocation5 + $0x3f8] sm:$0xff]
        %v2491 = vld [vmem:[%s6] sm:$0xf]
        %v2493 = vperm.slane %v2491, 0
        %v2494 = vperm.slane %v2491, 1
        %v2495 = vperm.slane %v2491, 2
        %v2496 = vperm.slane %v2491, 3
        %v2629 = vunpack.c.l.b16 %v2363
        %v2630 = vunpack.c.h.b16 %v2363
        %v2631 = vunpack.c.l.b16 %v2364
        %v2632 = vunpack.c.h.b16 %v2364
        %v2633 = vunpack.c.l.b16 %v2365
        %v2634 = vunpack.c.h.b16 %v2365
        %v2635 = vunpack.c.l.b16 %v2366
        %v2636 = vunpack.c.h.b16 %v2366
        %v2637 = vunpack.c.l.b16 %v2367
        %v2638 = vunpack.c.h.b16 %v2367
        %v2639 = vunpack.c.l.b16 %v2368
        %v2640 = vunpack.c.h.b16 %v2368
        %v2641 = vunpack.c.l.b16 %v2369
        %v2642 = vunpack.c.h.b16 %v2369
        %v2643 = vunpack.c.l.b16 %v2370
        %v2644 = vunpack.c.h.b16 %v2370
        %v2645 = vunpack.c.l.b16 %v2371
        %v2646 = vunpack.c.h.b16 %v2371
        %v2647 = vunpack.c.l.b16 %v2372
        %v2648 = vunpack.c.h.b16 %v2372
        %v2649 = vunpack.c.l.b16 %v2373
        %v2650 = vunpack.c.h.b16 %v2373
        %v2651 = vunpack.c.l.b16 %v2374
        %v2652 = vunpack.c.h.b16 %v2374
        %v2653 = vunpack.c.l.b16 %v2375
        %v2654 = vunpack.c.h.b16 %v2375
        %v2655 = vunpack.c.l.b16 %v2376
        %v2656 = vunpack.c.h.b16 %v2376
        %v2657 = vunpack.c.l.b16 %v2377
        %v2658 = vunpack.c.h.b16 %v2377
        %v2659 = vunpack.c.l.b16 %v2378
        %v2660 = vunpack.c.h.b16 %v2378
        %v2661 = vunpack.c.l.b16 %v2379
        %v2662 = vunpack.c.h.b16 %v2379
        %v2663 = vunpack.c.l.b16 %v2380
        %v2664 = vunpack.c.h.b16 %v2380
        %v2665 = vunpack.c.l.b16 %v2381
        %v2666 = vunpack.c.h.b16 %v2381
        %v2667 = vunpack.c.l.b16 %v2382
        %v2668 = vunpack.c.h.b16 %v2382
        %v2669 = vunpack.c.l.b16 %v2383
        %v2670 = vunpack.c.h.b16 %v2383
        %v2671 = vunpack.c.l.b16 %v2384
        %v2672 = vunpack.c.h.b16 %v2384
        %v2673 = vunpack.c.l.b16 %v2385
        %v2674 = vunpack.c.h.b16 %v2385
        %v2675 = vunpack.c.l.b16 %v2386
        %v2676 = vunpack.c.h.b16 %v2386
        %v2677 = vunpack.c.l.b16 %v2387
        %v2678 = vunpack.c.h.b16 %v2387
        %v2679 = vunpack.c.l.b16 %v2388
        %v2680 = vunpack.c.h.b16 %v2388
        %v2681 = vunpack.c.l.b16 %v2389
        %v2682 = vunpack.c.h.b16 %v2389
        %v2683 = vunpack.c.l.b16 %v2390
        %v2684 = vunpack.c.h.b16 %v2390
        %v2685 = vunpack.c.l.b16 %v2391
        %v2686 = vunpack.c.h.b16 %v2391
        %v2687 = vunpack.c.l.b16 %v2392
        %v2688 = vunpack.c.h.b16 %v2392
        %v2689 = vunpack.c.l.b16 %v2393
        %v2690 = vunpack.c.h.b16 %v2393
        %v2691 = vunpack.c.l.b16 %v2394
        %v2692 = vunpack.c.h.b16 %v2394
        %v2693 = vunpack.c.l.b16 %v2395
        %v2694 = vunpack.c.h.b16 %v2395
        %v2695 = vunpack.c.l.b16 %v2396
        %v2696 = vunpack.c.h.b16 %v2396
        %v2697 = vunpack.c.l.b16 %v2397
        %v2698 = vunpack.c.h.b16 %v2397
        %v2699 = vunpack.c.l.b16 %v2398
        %v2700 = vunpack.c.h.b16 %v2398
        %v2701 = vunpack.c.l.b16 %v2399
        %v2702 = vunpack.c.h.b16 %v2399
        %v2703 = vunpack.c.l.b16 %v2400
        %v2704 = vunpack.c.h.b16 %v2400
        %v2705 = vunpack.c.l.b16 %v2401
        %v2706 = vunpack.c.h.b16 %v2401
        %v2707 = vunpack.c.l.b16 %v2402
        %v2708 = vunpack.c.h.b16 %v2402
        %v2709 = vunpack.c.l.b16 %v2403
        %v2710 = vunpack.c.h.b16 %v2403
        %v2711 = vunpack.c.l.b16 %v2404
        %v2712 = vunpack.c.h.b16 %v2404
        %v2713 = vunpack.c.l.b16 %v2405
        %v2714 = vunpack.c.h.b16 %v2405
        %v2715 = vunpack.c.l.b16 %v2406
        %v2716 = vunpack.c.h.b16 %v2406
        %v2717 = vunpack.c.l.b16 %v2407
        %v2718 = vunpack.c.h.b16 %v2407
        %v2719 = vunpack.c.l.b16 %v2408
        %v2720 = vunpack.c.h.b16 %v2408
        %v2721 = vunpack.c.l.b16 %v2409
        %v2722 = vunpack.c.h.b16 %v2409
        %v2723 = vunpack.c.l.b16 %v2410
        %v2724 = vunpack.c.h.b16 %v2410
        %v2725 = vunpack.c.l.b16 %v2411
        %v2726 = vunpack.c.h.b16 %v2411
        %v2727 = vunpack.c.l.b16 %v2412
        %v2728 = vunpack.c.h.b16 %v2412
        %v2729 = vunpack.c.l.b16 %v2413
        %v2730 = vunpack.c.h.b16 %v2413
        %v2731 = vunpack.c.l.b16 %v2414
        %v2732 = vunpack.c.h.b16 %v2414
        %v2733 = vunpack.c.l.b16 %v2415
        %v2734 = vunpack.c.h.b16 %v2415
        %v2735 = vunpack.c.l.b16 %v2416
        %v2736 = vunpack.c.h.b16 %v2416
        %v2737 = vunpack.c.l.b16 %v2417
        %v2738 = vunpack.c.h.b16 %v2417
        %v2739 = vunpack.c.l.b16 %v2418
        %v2740 = vunpack.c.h.b16 %v2418
        %v2741 = vunpack.c.l.b16 %v2419
        %v2742 = vunpack.c.h.b16 %v2419
        %v2743 = vunpack.c.l.b16 %v2420
        %v2744 = vunpack.c.h.b16 %v2420
        %v2745 = vunpack.c.l.b16 %v2421
        %v2746 = vunpack.c.h.b16 %v2421
        %v2747 = vunpack.c.l.b16 %v2422
        %v2748 = vunpack.c.h.b16 %v2422
        %v2749 = vunpack.c.l.b16 %v2423
        %v2750 = vunpack.c.h.b16 %v2423
        %v2751 = vunpack.c.l.b16 %v2424
        %v2752 = vunpack.c.h.b16 %v2424
        %v2753 = vunpack.c.l.b16 %v2425
        %v2754 = vunpack.c.h.b16 %v2425
        %v2755 = vunpack.c.l.b16 %v2426
        %v2756 = vunpack.c.h.b16 %v2426
        %v2757 = vunpack.c.l.b16 %v2427
        %v2758 = vunpack.c.h.b16 %v2427
        %v2759 = vunpack.c.l.b16 %v2428
        %v2760 = vunpack.c.h.b16 %v2428
        %v2761 = vunpack.c.l.b16 %v2429
        %v2762 = vunpack.c.h.b16 %v2429
        %v2763 = vunpack.c.l.b16 %v2430
        %v2764 = vunpack.c.h.b16 %v2430
        %v2765 = vunpack.c.l.b16 %v2431
        %v2766 = vunpack.c.h.b16 %v2431
        %v2767 = vunpack.c.l.b16 %v2432
        %v2768 = vunpack.c.h.b16 %v2432
        %v2769 = vunpack.c.l.b16 %v2433
        %v2770 = vunpack.c.h.b16 %v2433
        %v2771 = vunpack.c.l.b16 %v2434
        %v2772 = vunpack.c.h.b16 %v2434
        %v2773 = vunpack.c.l.b16 %v2435
        %v2774 = vunpack.c.h.b16 %v2435
        %v2775 = vunpack.c.l.b16 %v2436
        %v2776 = vunpack.c.h.b16 %v2436
        %v2777 = vunpack.c.l.b16 %v2437
        %v2778 = vunpack.c.h.b16 %v2437
        %v2779 = vunpack.c.l.b16 %v2438
        %v2780 = vunpack.c.h.b16 %v2438
        %v2781 = vunpack.c.l.b16 %v2439
        %v2782 = vunpack.c.h.b16 %v2439
        %v2783 = vunpack.c.l.b16 %v2440
        %v2784 = vunpack.c.h.b16 %v2440
        %v2785 = vunpack.c.l.b16 %v2441
        %v2786 = vunpack.c.h.b16 %v2441
        %v2787 = vunpack.c.l.b16 %v2442
        %v2788 = vunpack.c.h.b16 %v2442
        %v2789 = vunpack.c.l.b16 %v2443
        %v2790 = vunpack.c.h.b16 %v2443
        %v2791 = vunpack.c.l.b16 %v2444
        %v2792 = vunpack.c.h.b16 %v2444
        %v2793 = vunpack.c.l.b16 %v2445
        %v2794 = vunpack.c.h.b16 %v2445
        %v2795 = vunpack.c.l.b16 %v2446
        %v2796 = vunpack.c.h.b16 %v2446
        %v2797 = vunpack.c.l.b16 %v2447
        %v2798 = vunpack.c.h.b16 %v2447
        %v2799 = vunpack.c.l.b16 %v2448
        %v2800 = vunpack.c.h.b16 %v2448
        %v2801 = vunpack.c.l.b16 %v2449
        %v2802 = vunpack.c.h.b16 %v2449
        %v2803 = vunpack.c.l.b16 %v2450
        %v2804 = vunpack.c.h.b16 %v2450
        %v2805 = vunpack.c.l.b16 %v2451
        %v2806 = vunpack.c.h.b16 %v2451
        %v2807 = vunpack.c.l.b16 %v2452
        %v2808 = vunpack.c.h.b16 %v2452
        %v2809 = vunpack.c.l.b16 %v2453
        %v2810 = vunpack.c.h.b16 %v2453
        %v2811 = vunpack.c.l.b16 %v2454
        %v2812 = vunpack.c.h.b16 %v2454
        %v2813 = vunpack.c.l.b16 %v2455
        %v2814 = vunpack.c.h.b16 %v2455
        %v2815 = vunpack.c.l.b16 %v2456
        %v2816 = vunpack.c.h.b16 %v2456
        %v2817 = vunpack.c.l.b16 %v2457
        %v2818 = vunpack.c.h.b16 %v2457
        %v2819 = vunpack.c.l.b16 %v2458
        %v2820 = vunpack.c.h.b16 %v2458
        %v2821 = vunpack.c.l.b16 %v2459
        %v2822 = vunpack.c.h.b16 %v2459
        %v2823 = vunpack.c.l.b16 %v2460
        %v2824 = vunpack.c.h.b16 %v2460
        %v2825 = vunpack.c.l.b16 %v2461
        %v2826 = vunpack.c.h.b16 %v2461
        %v2827 = vunpack.c.l.b16 %v2462
        %v2828 = vunpack.c.h.b16 %v2462
        %v2829 = vunpack.c.l.b16 %v2463
        %v2830 = vunpack.c.h.b16 %v2463
        %v2831 = vunpack.c.l.b16 %v2464
        %v2832 = vunpack.c.h.b16 %v2464
        %v2833 = vunpack.c.l.b16 %v2465
        %v2834 = vunpack.c.h.b16 %v2465
        %v2835 = vunpack.c.l.b16 %v2466
        %v2836 = vunpack.c.h.b16 %v2466
        %v2837 = vunpack.c.l.b16 %v2467
        %v2838 = vunpack.c.h.b16 %v2467
        %v2839 = vunpack.c.l.b16 %v2468
        %v2840 = vunpack.c.h.b16 %v2468
        %v2841 = vunpack.c.l.b16 %v2469
        %v2842 = vunpack.c.h.b16 %v2469
        %v2843 = vunpack.c.l.b16 %v2470
        %v2844 = vunpack.c.h.b16 %v2470
        %v2845 = vunpack.c.l.b16 %v2471
        %v2846 = vunpack.c.h.b16 %v2471
        %v2847 = vunpack.c.l.b16 %v2472
        %v2848 = vunpack.c.h.b16 %v2472
        %v2849 = vunpack.c.l.b16 %v2473
        %v2850 = vunpack.c.h.b16 %v2473
        %v2851 = vunpack.c.l.b16 %v2474
        %v2852 = vunpack.c.h.b16 %v2474
        %v2853 = vunpack.c.l.b16 %v2475
        %v2854 = vunpack.c.h.b16 %v2475
        %v2855 = vunpack.c.l.b16 %v2476
        %v2856 = vunpack.c.h.b16 %v2476
        %v2857 = vunpack.c.l.b16 %v2477
        %v2858 = vunpack.c.h.b16 %v2477
        %v2859 = vunpack.c.l.b16 %v2478
        %v2860 = vunpack.c.h.b16 %v2478
        %v2861 = vunpack.c.l.b16 %v2479
        %v2862 = vunpack.c.h.b16 %v2479
        %v2863 = vunpack.c.l.b16 %v2480
        %v2864 = vunpack.c.h.b16 %v2480
        %v2865 = vunpack.c.l.b16 %v2481
        %v2866 = vunpack.c.h.b16 %v2481
        %v2867 = vunpack.c.l.b16 %v2482
        %v2868 = vunpack.c.h.b16 %v2482
        %v2869 = vunpack.c.l.b16 %v2483
        %v2870 = vunpack.c.h.b16 %v2483
        %v2871 = vunpack.c.l.b16 %v2484
        %v2872 = vunpack.c.h.b16 %v2484
        %v2873 = vunpack.c.l.b16 %v2485
        %v2874 = vunpack.c.h.b16 %v2485
        %v2875 = vunpack.c.l.b16 %v2486
        %v2876 = vunpack.c.h.b16 %v2486
        %v2877 = vunpack.c.l.b16 %v2487
        %v2878 = vunpack.c.h.b16 %v2487
        %v2879 = vunpack.c.l.b16 %v2488
        %v2880 = vunpack.c.h.b16 %v2488
        %v2881 = vunpack.c.l.b16 %v2489
        %v2882 = vunpack.c.h.b16 %v2489
        %v2883 = vunpack.c.l.b16 %v2490
        %v2884 = vunpack.c.h.b16 %v2490
        %v2885 = vpack.c.b16 %v2633, %v2629
        %v2886 = vpack.c.b16 %v2634, %v2630
        %v2887 = vpack.c.b16 %v2635, %v2631
        %v2888 = vpack.c.b16 %v2636, %v2632
        %v2889 = vpack.c.b16 %v2641, %v2637
        %v2890 = vpack.c.b16 %v2642, %v2638
        %v2891 = vpack.c.b16 %v2643, %v2639
        %v2892 = vpack.c.b16 %v2644, %v2640
        %v2893 = vpack.c.b16 %v2649, %v2645
        %v2894 = vpack.c.b16 %v2650, %v2646
        %v2895 = vpack.c.b16 %v2651, %v2647
        %v2896 = vpack.c.b16 %v2652, %v2648
        %v2897 = vpack.c.b16 %v2657, %v2653
        %v2898 = vpack.c.b16 %v2658, %v2654
        %v2899 = vpack.c.b16 %v2659, %v2655
        %v2900 = vpack.c.b16 %v2660, %v2656
        %v2901 = vpack.c.b16 %v2665, %v2661
        %v2902 = vpack.c.b16 %v2666, %v2662
        %v2903 = vpack.c.b16 %v2667, %v2663
        %v2904 = vpack.c.b16 %v2668, %v2664
        %v2905 = vpack.c.b16 %v2673, %v2669
        %v2906 = vpack.c.b16 %v2674, %v2670
        %v2907 = vpack.c.b16 %v2675, %v2671
        %v2908 = vpack.c.b16 %v2676, %v2672
        %v2909 = vpack.c.b16 %v2681, %v2677
        %v2910 = vpack.c.b16 %v2682, %v2678
        %v2911 = vpack.c.b16 %v2683, %v2679
        %v2912 = vpack.c.b16 %v2684, %v2680
        %v2913 = vpack.c.b16 %v2689, %v2685
        %v2914 = vpack.c.b16 %v2690, %v2686
        %v2915 = vpack.c.b16 %v2691, %v2687
        %v2916 = vpack.c.b16 %v2692, %v2688
        %v2917 = vpack.c.b16 %v2697, %v2693
        %v2918 = vpack.c.b16 %v2698, %v2694
        %v2919 = vpack.c.b16 %v2699, %v2695
        %v2920 = vpack.c.b16 %v2700, %v2696
        %v2921 = vpack.c.b16 %v2705, %v2701
        %v2922 = vpack.c.b16 %v2706, %v2702
        %v2923 = vpack.c.b16 %v2707, %v2703
        %v2924 = vpack.c.b16 %v2708, %v2704
        %v2925 = vpack.c.b16 %v2713, %v2709
        %v2926 = vpack.c.b16 %v2714, %v2710
        %v2927 = vpack.c.b16 %v2715, %v2711
        %v2928 = vpack.c.b16 %v2716, %v2712
        %v2929 = vpack.c.b16 %v2721, %v2717
        %v2930 = vpack.c.b16 %v2722, %v2718
        %v2931 = vpack.c.b16 %v2723, %v2719
        %v2932 = vpack.c.b16 %v2724, %v2720
        %v2933 = vpack.c.b16 %v2729, %v2725
        %v2934 = vpack.c.b16 %v2730, %v2726
        %v2935 = vpack.c.b16 %v2731, %v2727
        %v2936 = vpack.c.b16 %v2732, %v2728
        %v2937 = vpack.c.b16 %v2737, %v2733
        %v2938 = vpack.c.b16 %v2738, %v2734
        %v2939 = vpack.c.b16 %v2739, %v2735
        %v2940 = vpack.c.b16 %v2740, %v2736
        %v2941 = vpack.c.b16 %v2745, %v2741
        %v2942 = vpack.c.b16 %v2746, %v2742
        %v2943 = vpack.c.b16 %v2747, %v2743
        %v2944 = vpack.c.b16 %v2748, %v2744
        %v2945 = vpack.c.b16 %v2753, %v2749
        %v2946 = vpack.c.b16 %v2754, %v2750
        %v2947 = vpack.c.b16 %v2755, %v2751
        %v2948 = vpack.c.b16 %v2756, %v2752
        %v2949 = vpack.c.b16 %v2761, %v2757
        %v2950 = vpack.c.b16 %v2762, %v2758
        %v2951 = vpack.c.b16 %v2763, %v2759
        %v2952 = vpack.c.b16 %v2764, %v2760
        %v2953 = vpack.c.b16 %v2769, %v2765
        %v2954 = vpack.c.b16 %v2770, %v2766
        %v2955 = vpack.c.b16 %v2771, %v2767
        %v2956 = vpack.c.b16 %v2772, %v2768
        %v2957 = vpack.c.b16 %v2777, %v2773
        %v2958 = vpack.c.b16 %v2778, %v2774
        %v2959 = vpack.c.b16 %v2779, %v2775
        %v2960 = vpack.c.b16 %v2780, %v2776
        %v2961 = vpack.c.b16 %v2785, %v2781
        %v2962 = vpack.c.b16 %v2786, %v2782
        %v2963 = vpack.c.b16 %v2787, %v2783
        %v2964 = vpack.c.b16 %v2788, %v2784
        %v2965 = vpack.c.b16 %v2793, %v2789
        %v2966 = vpack.c.b16 %v2794, %v2790
        %v2967 = vpack.c.b16 %v2795, %v2791
        %v2968 = vpack.c.b16 %v2796, %v2792
        %v2969 = vpack.c.b16 %v2801, %v2797
        %v2970 = vpack.c.b16 %v2802, %v2798
        %v2971 = vpack.c.b16 %v2803, %v2799
        %v2972 = vpack.c.b16 %v2804, %v2800
        %v2973 = vpack.c.b16 %v2809, %v2805
        %v2974 = vpack.c.b16 %v2810, %v2806
        %v2975 = vpack.c.b16 %v2811, %v2807
        %v2976 = vpack.c.b16 %v2812, %v2808
        %v2977 = vpack.c.b16 %v2817, %v2813
        %v2978 = vpack.c.b16 %v2818, %v2814
        %v2979 = vpack.c.b16 %v2819, %v2815
        %v2980 = vpack.c.b16 %v2820, %v2816
        %v2981 = vpack.c.b16 %v2825, %v2821
        %v2982 = vpack.c.b16 %v2826, %v2822
        %v2983 = vpack.c.b16 %v2827, %v2823
        %v2984 = vpack.c.b16 %v2828, %v2824
        %v2985 = vpack.c.b16 %v2833, %v2829
        %v2986 = vpack.c.b16 %v2834, %v2830
        %v2987 = vpack.c.b16 %v2835, %v2831
        %v2988 = vpack.c.b16 %v2836, %v2832
        %v2989 = vpack.c.b16 %v2841, %v2837
        %v2990 = vpack.c.b16 %v2842, %v2838
        %v2991 = vpack.c.b16 %v2843, %v2839
        %v2992 = vpack.c.b16 %v2844, %v2840
        %v2993 = vpack.c.b16 %v2849, %v2845
        %v2994 = vpack.c.b16 %v2850, %v2846
        %v2995 = vpack.c.b16 %v2851, %v2847
        %v2996 = vpack.c.b16 %v2852, %v2848
        %v2997 = vpack.c.b16 %v2857, %v2853
        %v2998 = vpack.c.b16 %v2858, %v2854
        %v2999 = vpack.c.b16 %v2859, %v2855
        %v3000 = vpack.c.b16 %v2860, %v2856
        %v3001 = vpack.c.b16 %v2865, %v2861
        %v3002 = vpack.c.b16 %v2866, %v2862
        %v3003 = vpack.c.b16 %v2867, %v2863
        %v3004 = vpack.c.b16 %v2868, %v2864
        %v3005 = vpack.c.b16 %v2873, %v2869
        %v3006 = vpack.c.b16 %v2874, %v2870
        %v3007 = vpack.c.b16 %v2875, %v2871
        %v3008 = vpack.c.b16 %v2876, %v2872
        %v3009 = vpack.c.b16 %v2881, %v2877
        %v3010 = vpack.c.b16 %v2882, %v2878
        %v3011 = vpack.c.b16 %v2883, %v2879
        %v3012 = vpack.c.b16 %v2884, %v2880
        %3141 = vmatpush.bf16.msra.mxu0 %v2913
        %3142 = vmatpush.bf16.msra.mxu0 %v2909
        %3143 = vmatpush.bf16.msra.mxu0 %v2905
        %3144 = vmatpush.bf16.msra.mxu0 %v2901
        %3145 = vmatpush.bf16.msra.mxu0 %v2897
        %3146 = vmatpush.bf16.msra.mxu0 %v2893
        %3147 = vmatpush.bf16.msra.mxu0 %v2889
        %3148 = vmatpush.bf16.msra.mxu0 %v2885
        %3149 = vmatmul.bf16.gmra.mxu0 %v2359
        %v3150 = vpop.f32.mrf.mxu0
        %v3151 = vadd.f32 %v2493, %v3150
        %v3152 = vpop.f32.mrf.mxu0
        %3153 = vdwg.mxu0
        %3154 = vmatpush.bf16.msra.mxu0 %v2945
        %3155 = vmatpush.bf16.msra.mxu0 %v2941
        %3156 = vmatpush.bf16.msra.mxu0 %v2937
        %3157 = vmatpush.bf16.msra.mxu0 %v2933
        %3158 = vmatpush.bf16.msra.mxu0 %v2929
        %3159 = vmatpush.bf16.msra.mxu0 %v2925
        %3160 = vmatpush.bf16.msra.mxu0 %v2921
        %3161 = vmatpush.bf16.msra.mxu0 %v2917
        %3162 = vmatmul.bf16.gmra.mxu0 %v2360
        %v3163 = vpop.f32.mrf.mxu0
        %v3164 = vadd.f32 %v3151, %v3163
        %v3165 = vpop.f32.mrf.mxu0
        %3166 = vdwg.mxu0
        %3167 = vmatpush.bf16.msra.mxu0 %v2977
        %3168 = vmatpush.bf16.msra.mxu0 %v2973
        %3169 = vmatpush.bf16.msra.mxu0 %v2969
        %3170 = vmatpush.bf16.msra.mxu0 %v2965
        %3171 = vmatpush.bf16.msra.mxu0 %v2961
        %3172 = vmatpush.bf16.msra.mxu0 %v2957
        %3173 = vmatpush.bf16.msra.mxu0 %v2953
        %3174 = vmatpush.bf16.msra.mxu0 %v2949
        %3175 = vmatmul.bf16.gmra.mxu0 %v2361
        %v3176 = vpop.f32.mrf.mxu0
        %v3177 = vadd.f32 %v3164, %v3176
        %v3178 = vpop.f32.mrf.mxu0
        %3179 = vdwg.mxu0
        %3180 = vmatpush.bf16.msra.mxu0 %v3009
        %3181 = vmatpush.bf16.msra.mxu0 %v3005
        %3182 = vmatpush.bf16.msra.mxu0 %v3001
        %3183 = vmatpush.bf16.msra.mxu0 %v2997
        %3184 = vmatpush.bf16.msra.mxu0 %v2993
        %3185 = vmatpush.bf16.msra.mxu0 %v2989
        %3186 = vmatpush.bf16.msra.mxu0 %v2985
        %3187 = vmatpush.bf16.msra.mxu0 %v2981
        %3188 = vmatmul.bf16.gmra.mxu0 %v2362
        %v3189 = vpop.f32.mrf.mxu0
        %v3190 = vadd.f32 %v3177, %v3189
        %v3191 = vpop.f32.mrf.mxu0
        %3192 = vdwg.mxu0
        %3193 = vmatpush.bf16.msra.mxu0 %v2914
        %3194 = vmatpush.bf16.msra.mxu0 %v2910
        %3195 = vmatpush.bf16.msra.mxu0 %v2906
        %3196 = vmatpush.bf16.msra.mxu0 %v2902
        %3197 = vmatpush.bf16.msra.mxu0 %v2898
        %3198 = vmatpush.bf16.msra.mxu0 %v2894
        %3199 = vmatpush.bf16.msra.mxu0 %v2890
        %3200 = vmatpush.bf16.msra.mxu0 %v2886
        %3201 = vmatmul.bf16.gmra.mxu0 %v2359
        %v3202 = vpop.f32.mrf.mxu0
        %v3203 = vadd.f32 %v2494, %v3202
        %v3204 = vpop.f32.mrf.mxu0
        %3205 = vdwg.mxu0
        %3206 = vmatpush.bf16.msra.mxu0 %v2946
        %3207 = vmatpush.bf16.msra.mxu0 %v2942
        %3208 = vmatpush.bf16.msra.mxu0 %v2938
        %3209 = vmatpush.bf16.msra.mxu0 %v2934
        %3210 = vmatpush.bf16.msra.mxu0 %v2930
        %3211 = vmatpush.bf16.msra.mxu0 %v2926
        %3212 = vmatpush.bf16.msra.mxu0 %v2922
        %3213 = vmatpush.bf16.msra.mxu0 %v2918
        %3214 = vmatmul.bf16.gmra.mxu0 %v2360
        %v3215 = vpop.f32.mrf.mxu0
        %v3216 = vadd.f32 %v3203, %v3215
        %v3217 = vpop.f32.mrf.mxu0
        %3218 = vdwg.mxu0
        %3219 = vmatpush.bf16.msra.mxu0 %v2978
        %3220 = vmatpush.bf16.msra.mxu0 %v2974
        %3221 = vmatpush.bf16.msra.mxu0 %v2970
        %3222 = vmatpush.bf16.msra.mxu0 %v2966
        %3223 = vmatpush.bf16.msra.mxu0 %v2962
        %3224 = vmatpush.bf16.msra.mxu0 %v2958
        %3225 = vmatpush.bf16.msra.mxu0 %v2954
        %3226 = vmatpush.bf16.msra.mxu0 %v2950
        %3227 = vmatmul.bf16.gmra.mxu0 %v2361
        %v3228 = vpop.f32.mrf.mxu0
        %v3229 = vadd.f32 %v3216, %v3228
        %v3230 = vpop.f32.mrf.mxu0
        %3231 = vdwg.mxu0
        %3232 = vmatpush.bf16.msra.mxu0 %v3010
        %3233 = vmatpush.bf16.msra.mxu0 %v3006
        %3234 = vmatpush.bf16.msra.mxu0 %v3002
        %3235 = vmatpush.bf16.msra.mxu0 %v2998
        %3236 = vmatpush.bf16.msra.mxu0 %v2994
        %3237 = vmatpush.bf16.msra.mxu0 %v2990
        %3238 = vmatpush.bf16.msra.mxu0 %v2986
        %3239 = vmatpush.bf16.msra.mxu0 %v2982
        %3240 = vmatmul.bf16.gmra.mxu0 %v2362
        %v3241 = vpop.f32.mrf.mxu0
        %v3242 = vadd.f32 %v3229, %v3241
        %v3243 = vpop.f32.mrf.mxu0
        %3244 = vdwg.mxu0
        %3245 = vmatpush.bf16.msra.mxu0 %v2915
        %3246 = vmatpush.bf16.msra.mxu0 %v2911
        %3247 = vmatpush.bf16.msra.mxu0 %v2907
        %3248 = vmatpush.bf16.msra.mxu0 %v2903
        %3249 = vmatpush.bf16.msra.mxu0 %v2899
        %3250 = vmatpush.bf16.msra.mxu0 %v2895
        %3251 = vmatpush.bf16.msra.mxu0 %v2891
        %3252 = vmatpush.bf16.msra.mxu0 %v2887
        %3253 = vmatmul.bf16.gmra.mxu0 %v2359
        %v3254 = vpop.f32.mrf.mxu0
        %v3255 = vadd.f32 %v2495, %v3254
        %v3256 = vpop.f32.mrf.mxu0
        %3257 = vdwg.mxu0
        %3258 = vmatpush.bf16.msra.mxu0 %v2947
        %3259 = vmatpush.bf16.msra.mxu0 %v2943
        %3260 = vmatpush.bf16.msra.mxu0 %v2939
        %3261 = vmatpush.bf16.msra.mxu0 %v2935
        %3262 = vmatpush.bf16.msra.mxu0 %v2931
        %3263 = vmatpush.bf16.msra.mxu0 %v2927
        %3264 = vmatpush.bf16.msra.mxu0 %v2923
        %3265 = vmatpush.bf16.msra.mxu0 %v2919
        %3266 = vmatmul.bf16.gmra.mxu0 %v2360
        %v3267 = vpop.f32.mrf.mxu0
        %v3268 = vadd.f32 %v3255, %v3267
        %v3269 = vpop.f32.mrf.mxu0
        %3270 = vdwg.mxu0
        %3271 = vmatpush.bf16.msra.mxu0 %v2979
        %3272 = vmatpush.bf16.msra.mxu0 %v2975
        %3273 = vmatpush.bf16.msra.mxu0 %v2971
        %3274 = vmatpush.bf16.msra.mxu0 %v2967
        %3275 = vmatpush.bf16.msra.mxu0 %v2963
        %3276 = vmatpush.bf16.msra.mxu0 %v2959
        %3277 = vmatpush.bf16.msra.mxu0 %v2955
        %3278 = vmatpush.bf16.msra.mxu0 %v2951
        %3279 = vmatmul.bf16.gmra.mxu0 %v2361
        %v3280 = vpop.f32.mrf.mxu0
        %v3281 = vadd.f32 %v3268, %v3280
        %v3282 = vpop.f32.mrf.mxu0
        %3283 = vdwg.mxu0
        %3284 = vmatpush.bf16.msra.mxu0 %v3011
        %3285 = vmatpush.bf16.msra.mxu0 %v3007
        %3286 = vmatpush.bf16.msra.mxu0 %v3003
        %3287 = vmatpush.bf16.msra.mxu0 %v2999
        %3288 = vmatpush.bf16.msra.mxu0 %v2995
        %3289 = vmatpush.bf16.msra.mxu0 %v2991
        %3290 = vmatpush.bf16.msra.mxu0 %v2987
        %3291 = vmatpush.bf16.msra.mxu0 %v2983
        %3292 = vmatmul.bf16.gmra.mxu0 %v2362
        %v3293 = vpop.f32.mrf.mxu0
        %v3294 = vadd.f32 %v3281, %v3293
        %v3295 = vpop.f32.mrf.mxu0
        %3296 = vdwg.mxu0
        %3297 = vmatpush.bf16.msra.mxu0 %v2916
        %3298 = vmatpush.bf16.msra.mxu0 %v2912
        %3299 = vmatpush.bf16.msra.mxu0 %v2908
        %3300 = vmatpush.bf16.msra.mxu0 %v2904
        %3301 = vmatpush.bf16.msra.mxu0 %v2900
        %3302 = vmatpush.bf16.msra.mxu0 %v2896
        %3303 = vmatpush.bf16.msra.mxu0 %v2892
        %3304 = vmatpush.bf16.msra.mxu0 %v2888
        %3305 = vmatmul.bf16.gmra.mxu0 %v2359
        %v3306 = vpop.f32.mrf.mxu0
        %v3307 = vadd.f32 %v2496, %v3306
        %v3308 = vpop.f32.mrf.mxu0
        %3309 = vdwg.mxu0
        %3310 = vmatpush.bf16.msra.mxu0 %v2948
        %3311 = vmatpush.bf16.msra.mxu0 %v2944
        %3312 = vmatpush.bf16.msra.mxu0 %v2940
        %3313 = vmatpush.bf16.msra.mxu0 %v2936
        %3314 = vmatpush.bf16.msra.mxu0 %v2932
        %3315 = vmatpush.bf16.msra.mxu0 %v2928
        %3316 = vmatpush.bf16.msra.mxu0 %v2924
        %3317 = vmatpush.bf16.msra.mxu0 %v2920
        %3318 = vmatmul.bf16.gmra.mxu0 %v2360
        %v3319 = vpop.f32.mrf.mxu0
        %v3320 = vadd.f32 %v3307, %v3319
        %v3321 = vpop.f32.mrf.mxu0
        %3322 = vdwg.mxu0
        %3323 = vmatpush.bf16.msra.mxu0 %v2980
        %3324 = vmatpush.bf16.msra.mxu0 %v2976
        %3325 = vmatpush.bf16.msra.mxu0 %v2972
        %3326 = vmatpush.bf16.msra.mxu0 %v2968
        %3327 = vmatpush.bf16.msra.mxu0 %v2964
        %3328 = vmatpush.bf16.msra.mxu0 %v2960
        %3329 = vmatpush.bf16.msra.mxu0 %v2956
        %3330 = vmatpush.bf16.msra.mxu0 %v2952
        %3331 = vmatmul.bf16.gmra.mxu0 %v2361
        %v3332 = vpop.f32.mrf.mxu0
        %v3333 = vadd.f32 %v3320, %v3332
        %v3334 = vpop.f32.mrf.mxu0
        %3335 = vdwg.mxu0
        %3336 = vmatpush.bf16.msra.mxu0 %v3012
        %3337 = vmatpush.bf16.msra.mxu0 %v3008
        %3338 = vmatpush.bf16.msra.mxu0 %v3004
        %3339 = vmatpush.bf16.msra.mxu0 %v3000
        %3340 = vmatpush.bf16.msra.mxu0 %v2996
        %3341 = vmatpush.bf16.msra.mxu0 %v2992
        %3342 = vmatpush.bf16.msra.mxu0 %v2988
        %3343 = vmatpush.bf16.msra.mxu0 %v2984
        %3344 = vmatmul.bf16.gmra.mxu0 %v2362
        %v3345 = vpop.f32.mrf.mxu0
        %v3346 = vadd.f32 %v3333, %v3345
        %v3347 = vpop.f32.mrf.mxu0
        %3348 = vdwg.mxu0
        %v3349 = vld [vmem:[%s7] sm:$0xf]
        %v3350 = vld [vmem:[%s8] sm:$0xf]
        %v3351 = vadd.f32 %v3190, %v3242
        %v3352 = vadd.f32 %v3351, %v3294
        %v3353 = vadd.f32 %v3352, %v3346
        %3354 = vadd.xlane.f32.xlu0 %v3353
        %v3355 = vpop.xlane.xlu0 %3354
        %v3356 = vmul.f32 %v3190, %v3190
        %v3357 = vmul.f32 %v3242, %v3242
        %v3358 = vmul.f32 %v3294, %v3294
        %v3359 = vmul.f32 %v3346, %v3346
        %v3360 = vadd.f32 %v3356, %v3357
        %v3361 = vadd.f32 %v3360, %v3358
        %v3362 = vadd.f32 %v3361, %v3359
        %3363 = vadd.xlane.f32.xlu0 %v3362
        %v3364 = vpop.xlane.xlu0 %3363
        %v3365 = vmul.f32 %v3355, 0.001953125
        %v3366 = vmul.f32 %v3364, 0.001953125
        %v3367 = vmul.f32 %v3365, %v3365
        %v3368 = vsub.f32 %v3366, %v3367
        %v3369 = vadd.f32 %v3368, 1e-05
        %v3370 = vrsqrt.pop %v3369
        %v3371 = vmul.f32 %v3370, %v3369
        %v3372 = vmul.f32 %v3371, %v3370
        %v3373 = vmul.f32 0.5, %v3372
        %v3374 = vsub.f32 1.5, %v3373
        %v3375 = vmul.f32 %v3370, %v3374
        %vm3376 = vweird.f32 %v3369
        %vm3377 = vweird.f32 %v3370
        %vm3378 = vmor %vm3376, %vm3377
        %v3379 = vsel %vm3378, %v3370, %v3375
        %v3380 = vsub.f32 %v3190, %v3365
        %v3381 = vsub.f32 %v3242, %v3365
        %v3382 = vsub.f32 %v3294, %v3365
        %v3383 = vsub.f32 %v3346, %v3365
        %v3384 = vmul.f32 %v3380, %v3379
        %v3385 = vmul.f32 %v3381, %v3379
        %v3386 = vmul.f32 %v3382, %v3379
        %v3387 = vmul.f32 %v3383, %v3379
        %v3389 = vperm.slane %v3349, 0
        %v3390 = vperm.slane %v3349, 1
        %v3391 = vperm.slane %v3349, 2
        %v3392 = vperm.slane %v3349, 3
        %v3397 = vmul.f32 %v3384, %v3389
        %v3398 = vmul.f32 %v3385, %v3390
        %v3399 = vmul.f32 %v3386, %v3391
        %v3400 = vmul.f32 %v3387, %v3392
        %v3402 = vperm.slane %v3350, 0
        %v3403 = vperm.slane %v3350, 1
        %v3404 = vperm.slane %v3350, 2
        %v3405 = vperm.slane %v3350, 3
        %v3410 = vadd.f32 %v3397, %v3402
        %v3411 = vadd.f32 %v3398, %v3403
        %v3412 = vadd.f32 %v3399, %v3404
        %v3413 = vadd.f32 %v3400, %v3405
        %v3414 = vmax.f32 %v3410, 0.0
        %v3415 = vmax.f32 %v3411, 0.0
        %v3416 = vmax.f32 %v3412, 0.0
        %v3417 = vmax.f32 %v3413, 0.0
        %v3418 = vpack.c.bf16 %v3414, %v3414
        %v3419 = vpack.c.bf16 %v3415, %v3415
        %v3420 = vpack.c.bf16 %v3416, %v3416
        %v3421 = vpack.c.bf16 %v3417, %v3417
        %v3422 = vld [vmem:[#allocation7] sm:$0xff]
        %v3423 = vld [vmem:[#allocation7 + $0x8] sm:$0xff]
        %v3424 = vld [vmem:[#allocation7 + $0x10] sm:$0xff]
        %v3425 = vld [vmem:[#allocation7 + $0x18] sm:$0xff]
        %v3426 = vld [vmem:[#allocation7 + $0x20] sm:$0xff]
        %v3427 = vld [vmem:[#allocation7 + $0x28] sm:$0xff]
        %v3428 = vld [vmem:[#allocation7 + $0x30] sm:$0xff]
        %v3429 = vld [vmem:[#allocation7 + $0x38] sm:$0xff]
        %v3430 = vld [vmem:[#allocation7 + $0x40] sm:$0xff]
        %v3431 = vld [vmem:[#allocation7 + $0x48] sm:$0xff]
        %v3432 = vld [vmem:[#allocation7 + $0x50] sm:$0xff]
        %v3433 = vld [vmem:[#allocation7 + $0x58] sm:$0xff]
        %v3434 = vld [vmem:[#allocation7 + $0x60] sm:$0xff]
        %v3435 = vld [vmem:[#allocation7 + $0x68] sm:$0xff]
        %v3436 = vld [vmem:[#allocation7 + $0x70] sm:$0xff]
        %v3437 = vld [vmem:[#allocation7 + $0x78] sm:$0xff]
        %v3438 = vld [vmem:[#allocation7 + $0x80] sm:$0xff]
        %v3439 = vld [vmem:[#allocation7 + $0x88] sm:$0xff]
        %v3440 = vld [vmem:[#allocation7 + $0x90] sm:$0xff]
        %v3441 = vld [vmem:[#allocation7 + $0x98] sm:$0xff]
        %v3442 = vld [vmem:[#allocation7 + $0xa0] sm:$0xff]
        %v3443 = vld [vmem:[#allocation7 + $0xa8] sm:$0xff]
        %v3444 = vld [vmem:[#allocation7 + $0xb0] sm:$0xff]
        %v3445 = vld [vmem:[#allocation7 + $0xb8] sm:$0xff]
        %v3446 = vld [vmem:[#allocation7 + $0xc0] sm:$0xff]
        %v3447 = vld [vmem:[#allocation7 + $0xc8] sm:$0xff]
        %v3448 = vld [vmem:[#allocation7 + $0xd0] sm:$0xff]
        %v3449 = vld [vmem:[#allocation7 + $0xd8] sm:$0xff]
        %v3450 = vld [vmem:[#allocation7 + $0xe0] sm:$0xff]
        %v3451 = vld [vmem:[#allocation7 + $0xe8] sm:$0xff]
        %v3452 = vld [vmem:[#allocation7 + $0xf0] sm:$0xff]
        %v3453 = vld [vmem:[#allocation7 + $0xf8] sm:$0xff]
        %v3454 = vld [vmem:[#allocation7 + $0x100] sm:$0xff]
        %v3455 = vld [vmem:[#allocation7 + $0x108] sm:$0xff]
        %v3456 = vld [vmem:[#allocation7 + $0x110] sm:$0xff]
        %v3457 = vld [vmem:[#allocation7 + $0x118] sm:$0xff]
        %v3458 = vld [vmem:[#allocation7 + $0x120] sm:$0xff]
        %v3459 = vld [vmem:[#allocation7 + $0x128] sm:$0xff]
        %v3460 = vld [vmem:[#allocation7 + $0x130] sm:$0xff]
        %v3461 = vld [vmem:[#allocation7 + $0x138] sm:$0xff]
        %v3462 = vld [vmem:[#allocation7 + $0x140] sm:$0xff]
        %v3463 = vld [vmem:[#allocation7 + $0x148] sm:$0xff]
        %v3464 = vld [vmem:[#allocation7 + $0x150] sm:$0xff]
        %v3465 = vld [vmem:[#allocation7 + $0x158] sm:$0xff]
        %v3466 = vld [vmem:[#allocation7 + $0x160] sm:$0xff]
        %v3467 = vld [vmem:[#allocation7 + $0x168] sm:$0xff]
        %v3468 = vld [vmem:[#allocation7 + $0x170] sm:$0xff]
        %v3469 = vld [vmem:[#allocation7 + $0x178] sm:$0xff]
        %v3470 = vld [vmem:[#allocation7 + $0x180] sm:$0xff]
        %v3471 = vld [vmem:[#allocation7 + $0x188] sm:$0xff]
        %v3472 = vld [vmem:[#allocation7 + $0x190] sm:$0xff]
        %v3473 = vld [vmem:[#allocation7 + $0x198] sm:$0xff]
        %v3474 = vld [vmem:[#allocation7 + $0x1a0] sm:$0xff]
        %v3475 = vld [vmem:[#allocation7 + $0x1a8] sm:$0xff]
        %v3476 = vld [vmem:[#allocation7 + $0x1b0] sm:$0xff]
        %v3477 = vld [vmem:[#allocation7 + $0x1b8] sm:$0xff]
        %v3478 = vld [vmem:[#allocation7 + $0x1c0] sm:$0xff]
        %v3479 = vld [vmem:[#allocation7 + $0x1c8] sm:$0xff]
        %v3480 = vld [vmem:[#allocation7 + $0x1d0] sm:$0xff]
        %v3481 = vld [vmem:[#allocation7 + $0x1d8] sm:$0xff]
        %v3482 = vld [vmem:[#allocation7 + $0x1e0] sm:$0xff]
        %v3483 = vld [vmem:[#allocation7 + $0x1e8] sm:$0xff]
        %v3484 = vld [vmem:[#allocation7 + $0x1f0] sm:$0xff]
        %v3485 = vld [vmem:[#allocation7 + $0x1f8] sm:$0xff]
        %v3486 = vld [vmem:[#allocation7 + $0x200] sm:$0xff]
        %v3487 = vld [vmem:[#allocation7 + $0x208] sm:$0xff]
        %v3488 = vld [vmem:[#allocation7 + $0x210] sm:$0xff]
        %v3489 = vld [vmem:[#allocation7 + $0x218] sm:$0xff]
        %v3490 = vld [vmem:[#allocation7 + $0x220] sm:$0xff]
        %v3491 = vld [vmem:[#allocation7 + $0x228] sm:$0xff]
        %v3492 = vld [vmem:[#allocation7 + $0x230] sm:$0xff]
        %v3493 = vld [vmem:[#allocation7 + $0x238] sm:$0xff]
        %v3494 = vld [vmem:[#allocation7 + $0x240] sm:$0xff]
        %v3495 = vld [vmem:[#allocation7 + $0x248] sm:$0xff]
        %v3496 = vld [vmem:[#allocation7 + $0x250] sm:$0xff]
        %v3497 = vld [vmem:[#allocation7 + $0x258] sm:$0xff]
        %v3498 = vld [vmem:[#allocation7 + $0x260] sm:$0xff]
        %v3499 = vld [vmem:[#allocation7 + $0x268] sm:$0xff]
        %v3500 = vld [vmem:[#allocation7 + $0x270] sm:$0xff]
        %v3501 = vld [vmem:[#allocation7 + $0x278] sm:$0xff]
        %v3502 = vld [vmem:[#allocation7 + $0x280] sm:$0xff]
        %v3503 = vld [vmem:[#allocation7 + $0x288] sm:$0xff]
        %v3504 = vld [vmem:[#allocation7 + $0x290] sm:$0xff]
        %v3505 = vld [vmem:[#allocation7 + $0x298] sm:$0xff]
        %v3506 = vld [vmem:[#allocation7 + $0x2a0] sm:$0xff]
        %v3507 = vld [vmem:[#allocation7 + $0x2a8] sm:$0xff]
        %v3508 = vld [vmem:[#allocation7 + $0x2b0] sm:$0xff]
        %v3509 = vld [vmem:[#allocation7 + $0x2b8] sm:$0xff]
        %v3510 = vld [vmem:[#allocation7 + $0x2c0] sm:$0xff]
        %v3511 = vld [vmem:[#allocation7 + $0x2c8] sm:$0xff]
        %v3512 = vld [vmem:[#allocation7 + $0x2d0] sm:$0xff]
        %v3513 = vld [vmem:[#allocation7 + $0x2d8] sm:$0xff]
        %v3514 = vld [vmem:[#allocation7 + $0x2e0] sm:$0xff]
        %v3515 = vld [vmem:[#allocation7 + $0x2e8] sm:$0xff]
        %v3516 = vld [vmem:[#allocation7 + $0x2f0] sm:$0xff]
        %v3517 = vld [vmem:[#allocation7 + $0x2f8] sm:$0xff]
        %v3518 = vld [vmem:[#allocation7 + $0x300] sm:$0xff]
        %v3519 = vld [vmem:[#allocation7 + $0x308] sm:$0xff]
        %v3520 = vld [vmem:[#allocation7 + $0x310] sm:$0xff]
        %v3521 = vld [vmem:[#allocation7 + $0x318] sm:$0xff]
        %v3522 = vld [vmem:[#allocation7 + $0x320] sm:$0xff]
        %v3523 = vld [vmem:[#allocation7 + $0x328] sm:$0xff]
        %v3524 = vld [vmem:[#allocation7 + $0x330] sm:$0xff]
        %v3525 = vld [vmem:[#allocation7 + $0x338] sm:$0xff]
        %v3526 = vld [vmem:[#allocation7 + $0x340] sm:$0xff]
        %v3527 = vld [vmem:[#allocation7 + $0x348] sm:$0xff]
        %v3528 = vld [vmem:[#allocation7 + $0x350] sm:$0xff]
        %v3529 = vld [vmem:[#allocation7 + $0x358] sm:$0xff]
        %v3530 = vld [vmem:[#allocation7 + $0x360] sm:$0xff]
        %v3531 = vld [vmem:[#allocation7 + $0x368] sm:$0xff]
        %v3532 = vld [vmem:[#allocation7 + $0x370] sm:$0xff]
        %v3533 = vld [vmem:[#allocation7 + $0x378] sm:$0xff]
        %v3534 = vld [vmem:[#allocation7 + $0x380] sm:$0xff]
        %v3535 = vld [vmem:[#allocation7 + $0x388] sm:$0xff]
        %v3536 = vld [vmem:[#allocation7 + $0x390] sm:$0xff]
        %v3537 = vld [vmem:[#allocation7 + $0x398] sm:$0xff]
        %v3538 = vld [vmem:[#allocation7 + $0x3a0] sm:$0xff]
        %v3539 = vld [vmem:[#allocation7 + $0x3a8] sm:$0xff]
        %v3540 = vld [vmem:[#allocation7 + $0x3b0] sm:$0xff]
        %v3541 = vld [vmem:[#allocation7 + $0x3b8] sm:$0xff]
        %v3542 = vld [vmem:[#allocation7 + $0x3c0] sm:$0xff]
        %v3543 = vld [vmem:[#allocation7 + $0x3c8] sm:$0xff]
        %v3544 = vld [vmem:[#allocation7 + $0x3d0] sm:$0xff]
        %v3545 = vld [vmem:[#allocation7 + $0x3d8] sm:$0xff]
        %v3546 = vld [vmem:[#allocation7 + $0x3e0] sm:$0xff]
        %v3547 = vld [vmem:[#allocation7 + $0x3e8] sm:$0xff]
        %v3548 = vld [vmem:[#allocation7 + $0x3f0] sm:$0xff]
        %v3549 = vld [vmem:[#allocation7 + $0x3f8] sm:$0xff]
        %v3550 = vld [vmem:[%s10] sm:$0xf]
        %v3552 = vperm.slane %v3550, 0
        %v3553 = vperm.slane %v3550, 1
        %v3554 = vperm.slane %v3550, 2
        %v3555 = vperm.slane %v3550, 3
        %v3688 = vunpack.c.l.b16 %v3422
        %v3689 = vunpack.c.h.b16 %v3422
        %v3690 = vunpack.c.l.b16 %v3423
        %v3691 = vunpack.c.h.b16 %v3423
        %v3692 = vunpack.c.l.b16 %v3424
        %v3693 = vunpack.c.h.b16 %v3424
        %v3694 = vunpack.c.l.b16 %v3425
        %v3695 = vunpack.c.h.b16 %v3425
        %v3696 = vunpack.c.l.b16 %v3426
        %v3697 = vunpack.c.h.b16 %v3426
        %v3698 = vunpack.c.l.b16 %v3427
        %v3699 = vunpack.c.h.b16 %v3427
        %v3700 = vunpack.c.l.b16 %v3428
        %v3701 = vunpack.c.h.b16 %v3428
        %v3702 = vunpack.c.l.b16 %v3429
        %v3703 = vunpack.c.h.b16 %v3429
        %v3704 = vunpack.c.l.b16 %v3430
        %v3705 = vunpack.c.h.b16 %v3430
        %v3706 = vunpack.c.l.b16 %v3431
        %v3707 = vunpack.c.h.b16 %v3431
        %v3708 = vunpack.c.l.b16 %v3432
        %v3709 = vunpack.c.h.b16 %v3432
        %v3710 = vunpack.c.l.b16 %v3433
        %v3711 = vunpack.c.h.b16 %v3433
        %v3712 = vunpack.c.l.b16 %v3434
        %v3713 = vunpack.c.h.b16 %v3434
        %v3714 = vunpack.c.l.b16 %v3435
        %v3715 = vunpack.c.h.b16 %v3435
        %v3716 = vunpack.c.l.b16 %v3436
        %v3717 = vunpack.c.h.b16 %v3436
        %v3718 = vunpack.c.l.b16 %v3437
        %v3719 = vunpack.c.h.b16 %v3437
        %v3720 = vunpack.c.l.b16 %v3438
        %v3721 = vunpack.c.h.b16 %v3438
        %v3722 = vunpack.c.l.b16 %v3439
        %v3723 = vunpack.c.h.b16 %v3439
        %v3724 = vunpack.c.l.b16 %v3440
        %v3725 = vunpack.c.h.b16 %v3440
        %v3726 = vunpack.c.l.b16 %v3441
        %v3727 = vunpack.c.h.b16 %v3441
        %v3728 = vunpack.c.l.b16 %v3442
        %v3729 = vunpack.c.h.b16 %v3442
        %v3730 = vunpack.c.l.b16 %v3443
        %v3731 = vunpack.c.h.b16 %v3443
        %v3732 = vunpack.c.l.b16 %v3444
        %v3733 = vunpack.c.h.b16 %v3444
        %v3734 = vunpack.c.l.b16 %v3445
        %v3735 = vunpack.c.h.b16 %v3445
        %v3736 = vunpack.c.l.b16 %v3446
        %v3737 = vunpack.c.h.b16 %v3446
        %v3738 = vunpack.c.l.b16 %v3447
        %v3739 = vunpack.c.h.b16 %v3447
        %v3740 = vunpack.c.l.b16 %v3448
        %v3741 = vunpack.c.h.b16 %v3448
        %v3742 = vunpack.c.l.b16 %v3449
        %v3743 = vunpack.c.h.b16 %v3449
        %v3744 = vunpack.c.l.b16 %v3450
        %v3745 = vunpack.c.h.b16 %v3450
        %v3746 = vunpack.c.l.b16 %v3451
        %v3747 = vunpack.c.h.b16 %v3451
        %v3748 = vunpack.c.l.b16 %v3452
        %v3749 = vunpack.c.h.b16 %v3452
        %v3750 = vunpack.c.l.b16 %v3453
        %v3751 = vunpack.c.h.b16 %v3453
        %v3752 = vunpack.c.l.b16 %v3454
        %v3753 = vunpack.c.h.b16 %v3454
        %v3754 = vunpack.c.l.b16 %v3455
        %v3755 = vunpack.c.h.b16 %v3455
        %v3756 = vunpack.c.l.b16 %v3456
        %v3757 = vunpack.c.h.b16 %v3456
        %v3758 = vunpack.c.l.b16 %v3457
        %v3759 = vunpack.c.h.b16 %v3457
        %v3760 = vunpack.c.l.b16 %v3458
        %v3761 = vunpack.c.h.b16 %v3458
        %v3762 = vunpack.c.l.b16 %v3459
        %v3763 = vunpack.c.h.b16 %v3459
        %v3764 = vunpack.c.l.b16 %v3460
        %v3765 = vunpack.c.h.b16 %v3460
        %v3766 = vunpack.c.l.b16 %v3461
        %v3767 = vunpack.c.h.b16 %v3461
        %v3768 = vunpack.c.l.b16 %v3462
        %v3769 = vunpack.c.h.b16 %v3462
        %v3770 = vunpack.c.l.b16 %v3463
        %v3771 = vunpack.c.h.b16 %v3463
        %v3772 = vunpack.c.l.b16 %v3464
        %v3773 = vunpack.c.h.b16 %v3464
        %v3774 = vunpack.c.l.b16 %v3465
        %v3775 = vunpack.c.h.b16 %v3465
        %v3776 = vunpack.c.l.b16 %v3466
        %v3777 = vunpack.c.h.b16 %v3466
        %v3778 = vunpack.c.l.b16 %v3467
        %v3779 = vunpack.c.h.b16 %v3467
        %v3780 = vunpack.c.l.b16 %v3468
        %v3781 = vunpack.c.h.b16 %v3468
        %v3782 = vunpack.c.l.b16 %v3469
        %v3783 = vunpack.c.h.b16 %v3469
        %v3784 = vunpack.c.l.b16 %v3470
        %v3785 = vunpack.c.h.b16 %v3470
        %v3786 = vunpack.c.l.b16 %v3471
        %v3787 = vunpack.c.h.b16 %v3471
        %v3788 = vunpack.c.l.b16 %v3472
        %v3789 = vunpack.c.h.b16 %v3472
        %v3790 = vunpack.c.l.b16 %v3473
        %v3791 = vunpack.c.h.b16 %v3473
        %v3792 = vunpack.c.l.b16 %v3474
        %v3793 = vunpack.c.h.b16 %v3474
        %v3794 = vunpack.c.l.b16 %v3475
        %v3795 = vunpack.c.h.b16 %v3475
        %v3796 = vunpack.c.l.b16 %v3476
        %v3797 = vunpack.c.h.b16 %v3476
        %v3798 = vunpack.c.l.b16 %v3477
        %v3799 = vunpack.c.h.b16 %v3477
        %v3800 = vunpack.c.l.b16 %v3478
        %v3801 = vunpack.c.h.b16 %v3478
        %v3802 = vunpack.c.l.b16 %v3479
        %v3803 = vunpack.c.h.b16 %v3479
        %v3804 = vunpack.c.l.b16 %v3480
        %v3805 = vunpack.c.h.b16 %v3480
        %v3806 = vunpack.c.l.b16 %v3481
        %v3807 = vunpack.c.h.b16 %v3481
        %v3808 = vunpack.c.l.b16 %v3482
        %v3809 = vunpack.c.h.b16 %v3482
        %v3810 = vunpack.c.l.b16 %v3483
        %v3811 = vunpack.c.h.b16 %v3483
        %v3812 = vunpack.c.l.b16 %v3484
        %v3813 = vunpack.c.h.b16 %v3484
        %v3814 = vunpack.c.l.b16 %v3485
        %v3815 = vunpack.c.h.b16 %v3485
        %v3816 = vunpack.c.l.b16 %v3486
        %v3817 = vunpack.c.h.b16 %v3486
        %v3818 = vunpack.c.l.b16 %v3487
        %v3819 = vunpack.c.h.b16 %v3487
        %v3820 = vunpack.c.l.b16 %v3488
        %v3821 = vunpack.c.h.b16 %v3488
        %v3822 = vunpack.c.l.b16 %v3489
        %v3823 = vunpack.c.h.b16 %v3489
        %v3824 = vunpack.c.l.b16 %v3490
        %v3825 = vunpack.c.h.b16 %v3490
        %v3826 = vunpack.c.l.b16 %v3491
        %v3827 = vunpack.c.h.b16 %v3491
        %v3828 = vunpack.c.l.b16 %v3492
        %v3829 = vunpack.c.h.b16 %v3492
        %v3830 = vunpack.c.l.b16 %v3493
        %v3831 = vunpack.c.h.b16 %v3493
        %v3832 = vunpack.c.l.b16 %v3494
        %v3833 = vunpack.c.h.b16 %v3494
        %v3834 = vunpack.c.l.b16 %v3495
        %v3835 = vunpack.c.h.b16 %v3495
        %v3836 = vunpack.c.l.b16 %v3496
        %v3837 = vunpack.c.h.b16 %v3496
        %v3838 = vunpack.c.l.b16 %v3497
        %v3839 = vunpack.c.h.b16 %v3497
        %v3840 = vunpack.c.l.b16 %v3498
        %v3841 = vunpack.c.h.b16 %v3498
        %v3842 = vunpack.c.l.b16 %v3499
        %v3843 = vunpack.c.h.b16 %v3499
        %v3844 = vunpack.c.l.b16 %v3500
        %v3845 = vunpack.c.h.b16 %v3500
        %v3846 = vunpack.c.l.b16 %v3501
        %v3847 = vunpack.c.h.b16 %v3501
        %v3848 = vunpack.c.l.b16 %v3502
        %v3849 = vunpack.c.h.b16 %v3502
        %v3850 = vunpack.c.l.b16 %v3503
        %v3851 = vunpack.c.h.b16 %v3503
        %v3852 = vunpack.c.l.b16 %v3504
        %v3853 = vunpack.c.h.b16 %v3504
        %v3854 = vunpack.c.l.b16 %v3505
        %v3855 = vunpack.c.h.b16 %v3505
        %v3856 = vunpack.c.l.b16 %v3506
        %v3857 = vunpack.c.h.b16 %v3506
        %v3858 = vunpack.c.l.b16 %v3507
        %v3859 = vunpack.c.h.b16 %v3507
        %v3860 = vunpack.c.l.b16 %v3508
        %v3861 = vunpack.c.h.b16 %v3508
        %v3862 = vunpack.c.l.b16 %v3509
        %v3863 = vunpack.c.h.b16 %v3509
        %v3864 = vunpack.c.l.b16 %v3510
        %v3865 = vunpack.c.h.b16 %v3510
        %v3866 = vunpack.c.l.b16 %v3511
        %v3867 = vunpack.c.h.b16 %v3511
        %v3868 = vunpack.c.l.b16 %v3512
        %v3869 = vunpack.c.h.b16 %v3512
        %v3870 = vunpack.c.l.b16 %v3513
        %v3871 = vunpack.c.h.b16 %v3513
        %v3872 = vunpack.c.l.b16 %v3514
        %v3873 = vunpack.c.h.b16 %v3514
        %v3874 = vunpack.c.l.b16 %v3515
        %v3875 = vunpack.c.h.b16 %v3515
        %v3876 = vunpack.c.l.b16 %v3516
        %v3877 = vunpack.c.h.b16 %v3516
        %v3878 = vunpack.c.l.b16 %v3517
        %v3879 = vunpack.c.h.b16 %v3517
        %v3880 = vunpack.c.l.b16 %v3518
        %v3881 = vunpack.c.h.b16 %v3518
        %v3882 = vunpack.c.l.b16 %v3519
        %v3883 = vunpack.c.h.b16 %v3519
        %v3884 = vunpack.c.l.b16 %v3520
        %v3885 = vunpack.c.h.b16 %v3520
        %v3886 = vunpack.c.l.b16 %v3521
        %v3887 = vunpack.c.h.b16 %v3521
        %v3888 = vunpack.c.l.b16 %v3522
        %v3889 = vunpack.c.h.b16 %v3522
        %v3890 = vunpack.c.l.b16 %v3523
        %v3891 = vunpack.c.h.b16 %v3523
        %v3892 = vunpack.c.l.b16 %v3524
        %v3893 = vunpack.c.h.b16 %v3524
        %v3894 = vunpack.c.l.b16 %v3525
        %v3895 = vunpack.c.h.b16 %v3525
        %v3896 = vunpack.c.l.b16 %v3526
        %v3897 = vunpack.c.h.b16 %v3526
        %v3898 = vunpack.c.l.b16 %v3527
        %v3899 = vunpack.c.h.b16 %v3527
        %v3900 = vunpack.c.l.b16 %v3528
        %v3901 = vunpack.c.h.b16 %v3528
        %v3902 = vunpack.c.l.b16 %v3529
        %v3903 = vunpack.c.h.b16 %v3529
        %v3904 = vunpack.c.l.b16 %v3530
        %v3905 = vunpack.c.h.b16 %v3530
        %v3906 = vunpack.c.l.b16 %v3531
        %v3907 = vunpack.c.h.b16 %v3531
        %v3908 = vunpack.c.l.b16 %v3532
        %v3909 = vunpack.c.h.b16 %v3532
        %v3910 = vunpack.c.l.b16 %v3533
        %v3911 = vunpack.c.h.b16 %v3533
        %v3912 = vunpack.c.l.b16 %v3534
        %v3913 = vunpack.c.h.b16 %v3534
        %v3914 = vunpack.c.l.b16 %v3535
        %v3915 = vunpack.c.h.b16 %v3535
        %v3916 = vunpack.c.l.b16 %v3536
        %v3917 = vunpack.c.h.b16 %v3536
        %v3918 = vunpack.c.l.b16 %v3537
        %v3919 = vunpack.c.h.b16 %v3537
        %v3920 = vunpack.c.l.b16 %v3538
        %v3921 = vunpack.c.h.b16 %v3538
        %v3922 = vunpack.c.l.b16 %v3539
        %v3923 = vunpack.c.h.b16 %v3539
        %v3924 = vunpack.c.l.b16 %v3540
        %v3925 = vunpack.c.h.b16 %v3540
        %v3926 = vunpack.c.l.b16 %v3541
        %v3927 = vunpack.c.h.b16 %v3541
        %v3928 = vunpack.c.l.b16 %v3542
        %v3929 = vunpack.c.h.b16 %v3542
        %v3930 = vunpack.c.l.b16 %v3543
        %v3931 = vunpack.c.h.b16 %v3543
        %v3932 = vunpack.c.l.b16 %v3544
        %v3933 = vunpack.c.h.b16 %v3544
        %v3934 = vunpack.c.l.b16 %v3545
        %v3935 = vunpack.c.h.b16 %v3545
        %v3936 = vunpack.c.l.b16 %v3546
        %v3937 = vunpack.c.h.b16 %v3546
        %v3938 = vunpack.c.l.b16 %v3547
        %v3939 = vunpack.c.h.b16 %v3547
        %v3940 = vunpack.c.l.b16 %v3548
        %v3941 = vunpack.c.h.b16 %v3548
        %v3942 = vunpack.c.l.b16 %v3549
        %v3943 = vunpack.c.h.b16 %v3549
        %v3944 = vpack.c.b16 %v3692, %v3688
        %v3945 = vpack.c.b16 %v3693, %v3689
        %v3946 = vpack.c.b16 %v3694, %v3690
        %v3947 = vpack.c.b16 %v3695, %v3691
        %v3948 = vpack.c.b16 %v3700, %v3696
        %v3949 = vpack.c.b16 %v3701, %v3697
        %v3950 = vpack.c.b16 %v3702, %v3698
        %v3951 = vpack.c.b16 %v3703, %v3699
        %v3952 = vpack.c.b16 %v3708, %v3704
        %v3953 = vpack.c.b16 %v3709, %v3705
        %v3954 = vpack.c.b16 %v3710, %v3706
        %v3955 = vpack.c.b16 %v3711, %v3707
        %v3956 = vpack.c.b16 %v3716, %v3712
        %v3957 = vpack.c.b16 %v3717, %v3713
        %v3958 = vpack.c.b16 %v3718, %v3714
        %v3959 = vpack.c.b16 %v3719, %v3715
        %v3960 = vpack.c.b16 %v3724, %v3720
        %v3961 = vpack.c.b16 %v3725, %v3721
        %v3962 = vpack.c.b16 %v3726, %v3722
        %v3963 = vpack.c.b16 %v3727, %v3723
        %v3964 = vpack.c.b16 %v3732, %v3728
        %v3965 = vpack.c.b16 %v3733, %v3729
        %v3966 = vpack.c.b16 %v3734, %v3730
        %v3967 = vpack.c.b16 %v3735, %v3731
        %v3968 = vpack.c.b16 %v3740, %v3736
        %v3969 = vpack.c.b16 %v3741, %v3737
        %v3970 = vpack.c.b16 %v3742, %v3738
        %v3971 = vpack.c.b16 %v3743, %v3739
        %v3972 = vpack.c.b16 %v3748, %v3744
        %v3973 = vpack.c.b16 %v3749, %v3745
        %v3974 = vpack.c.b16 %v3750, %v3746
        %v3975 = vpack.c.b16 %v3751, %v3747
        %v3976 = vpack.c.b16 %v3756, %v3752
        %v3977 = vpack.c.b16 %v3757, %v3753
        %v3978 = vpack.c.b16 %v3758, %v3754
        %v3979 = vpack.c.b16 %v3759, %v3755
        %v3980 = vpack.c.b16 %v3764, %v3760
        %v3981 = vpack.c.b16 %v3765, %v3761
        %v3982 = vpack.c.b16 %v3766, %v3762
        %v3983 = vpack.c.b16 %v3767, %v3763
        %v3984 = vpack.c.b16 %v3772, %v3768
        %v3985 = vpack.c.b16 %v3773, %v3769
        %v3986 = vpack.c.b16 %v3774, %v3770
        %v3987 = vpack.c.b16 %v3775, %v3771
        %v3988 = vpack.c.b16 %v3780, %v3776
        %v3989 = vpack.c.b16 %v3781, %v3777
        %v3990 = vpack.c.b16 %v3782, %v3778
        %v3991 = vpack.c.b16 %v3783, %v3779
        %v3992 = vpack.c.b16 %v3788, %v3784
        %v3993 = vpack.c.b16 %v3789, %v3785
        %v3994 = vpack.c.b16 %v3790, %v3786
        %v3995 = vpack.c.b16 %v3791, %v3787
        %v3996 = vpack.c.b16 %v3796, %v3792
        %v3997 = vpack.c.b16 %v3797, %v3793
        %v3998 = vpack.c.b16 %v3798, %v3794
        %v3999 = vpack.c.b16 %v3799, %v3795
        %v4000 = vpack.c.b16 %v3804, %v3800
        %v4001 = vpack.c.b16 %v3805, %v3801
        %v4002 = vpack.c.b16 %v3806, %v3802
        %v4003 = vpack.c.b16 %v3807, %v3803
        %v4004 = vpack.c.b16 %v3812, %v3808
        %v4005 = vpack.c.b16 %v3813, %v3809
        %v4006 = vpack.c.b16 %v3814, %v3810
        %v4007 = vpack.c.b16 %v3815, %v3811
        %v4008 = vpack.c.b16 %v3820, %v3816
        %v4009 = vpack.c.b16 %v3821, %v3817
        %v4010 = vpack.c.b16 %v3822, %v3818
        %v4011 = vpack.c.b16 %v3823, %v3819
        %v4012 = vpack.c.b16 %v3828, %v3824
        %v4013 = vpack.c.b16 %v3829, %v3825
        %v4014 = vpack.c.b16 %v3830, %v3826
        %v4015 = vpack.c.b16 %v3831, %v3827
        %v4016 = vpack.c.b16 %v3836, %v3832
        %v4017 = vpack.c.b16 %v3837, %v3833
        %v4018 = vpack.c.b16 %v3838, %v3834
        %v4019 = vpack.c.b16 %v3839, %v3835
        %v4020 = vpack.c.b16 %v3844, %v3840
        %v4021 = vpack.c.b16 %v3845, %v3841
        %v4022 = vpack.c.b16 %v3846, %v3842
        %v4023 = vpack.c.b16 %v3847, %v3843
        %v4024 = vpack.c.b16 %v3852, %v3848
        %v4025 = vpack.c.b16 %v3853, %v3849
        %v4026 = vpack.c.b16 %v3854, %v3850
        %v4027 = vpack.c.b16 %v3855, %v3851
        %v4028 = vpack.c.b16 %v3860, %v3856
        %v4029 = vpack.c.b16 %v3861, %v3857
        %v4030 = vpack.c.b16 %v3862, %v3858
        %v4031 = vpack.c.b16 %v3863, %v3859
        %v4032 = vpack.c.b16 %v3868, %v3864
        %v4033 = vpack.c.b16 %v3869, %v3865
        %v4034 = vpack.c.b16 %v3870, %v3866
        %v4035 = vpack.c.b16 %v3871, %v3867
        %v4036 = vpack.c.b16 %v3876, %v3872
        %v4037 = vpack.c.b16 %v3877, %v3873
        %v4038 = vpack.c.b16 %v3878, %v3874
        %v4039 = vpack.c.b16 %v3879, %v3875
        %v4040 = vpack.c.b16 %v3884, %v3880
        %v4041 = vpack.c.b16 %v3885, %v3881
        %v4042 = vpack.c.b16 %v3886, %v3882
        %v4043 = vpack.c.b16 %v3887, %v3883
        %v4044 = vpack.c.b16 %v3892, %v3888
        %v4045 = vpack.c.b16 %v3893, %v3889
        %v4046 = vpack.c.b16 %v3894, %v3890
        %v4047 = vpack.c.b16 %v3895, %v3891
        %v4048 = vpack.c.b16 %v3900, %v3896
        %v4049 = vpack.c.b16 %v3901, %v3897
        %v4050 = vpack.c.b16 %v3902, %v3898
        %v4051 = vpack.c.b16 %v3903, %v3899
        %v4052 = vpack.c.b16 %v3908, %v3904
        %v4053 = vpack.c.b16 %v3909, %v3905
        %v4054 = vpack.c.b16 %v3910, %v3906
        %v4055 = vpack.c.b16 %v3911, %v3907
        %v4056 = vpack.c.b16 %v3916, %v3912
        %v4057 = vpack.c.b16 %v3917, %v3913
        %v4058 = vpack.c.b16 %v3918, %v3914
        %v4059 = vpack.c.b16 %v3919, %v3915
        %v4060 = vpack.c.b16 %v3924, %v3920
        %v4061 = vpack.c.b16 %v3925, %v3921
        %v4062 = vpack.c.b16 %v3926, %v3922
        %v4063 = vpack.c.b16 %v3927, %v3923
        %v4064 = vpack.c.b16 %v3932, %v3928
        %v4065 = vpack.c.b16 %v3933, %v3929
        %v4066 = vpack.c.b16 %v3934, %v3930
        %v4067 = vpack.c.b16 %v3935, %v3931
        %v4068 = vpack.c.b16 %v3940, %v3936
        %v4069 = vpack.c.b16 %v3941, %v3937
        %v4070 = vpack.c.b16 %v3942, %v3938
        %v4071 = vpack.c.b16 %v3943, %v3939
        %4200 = vmatpush.bf16.msra.mxu0 %v3972
        %4201 = vmatpush.bf16.msra.mxu0 %v3968
        %4202 = vmatpush.bf16.msra.mxu0 %v3964
        %4203 = vmatpush.bf16.msra.mxu0 %v3960
        %4204 = vmatpush.bf16.msra.mxu0 %v3956
        %4205 = vmatpush.bf16.msra.mxu0 %v3952
        %4206 = vmatpush.bf16.msra.mxu0 %v3948
        %4207 = vmatpush.bf16.msra.mxu0 %v3944
        %4208 = vmatmul.bf16.gmra.mxu0 %v3418
        %v4209 = vpop.f32.mrf.mxu0
        %v4210 = vadd.f32 %v3552, %v4209
        %v4211 = vpop.f32.mrf.mxu0
        %4212 = vdwg.mxu0
        %4213 = vmatpush.bf16.msra.mxu0 %v4004
        %4214 = vmatpush.bf16.msra.mxu0 %v4000
        %4215 = vmatpush.bf16.msra.mxu0 %v3996
        %4216 = vmatpush.bf16.msra.mxu0 %v3992
        %4217 = vmatpush.bf16.msra.mxu0 %v3988
        %4218 = vmatpush.bf16.msra.mxu0 %v3984
        %4219 = vmatpush.bf16.msra.mxu0 %v3980
        %4220 = vmatpush.bf16.msra.mxu0 %v3976
        %4221 = vmatmul.bf16.gmra.mxu0 %v3419
        %v4222 = vpop.f32.mrf.mxu0
        %v4223 = vadd.f32 %v4210, %v4222
        %v4224 = vpop.f32.mrf.mxu0
        %4225 = vdwg.mxu0
        %4226 = vmatpush.bf16.msra.mxu0 %v4036
        %4227 = vmatpush.bf16.msra.mxu0 %v4032
        %4228 = vmatpush.bf16.msra.mxu0 %v4028
        %4229 = vmatpush.bf16.msra.mxu0 %v4024
        %4230 = vmatpush.bf16.msra.mxu0 %v4020
        %4231 = vmatpush.bf16.msra.mxu0 %v4016
        %4232 = vmatpush.bf16.msra.mxu0 %v4012
        %4233 = vmatpush.bf16.msra.mxu0 %v4008
        %4234 = vmatmul.bf16.gmra.mxu0 %v3420
        %v4235 = vpop.f32.mrf.mxu0
        %v4236 = vadd.f32 %v4223, %v4235
        %v4237 = vpop.f32.mrf.mxu0
        %4238 = vdwg.mxu0
        %4239 = vmatpush.bf16.msra.mxu0 %v4068
        %4240 = vmatpush.bf16.msra.mxu0 %v4064
        %4241 = vmatpush.bf16.msra.mxu0 %v4060
        %4242 = vmatpush.bf16.msra.mxu0 %v4056
        %4243 = vmatpush.bf16.msra.mxu0 %v4052
        %4244 = vmatpush.bf16.msra.mxu0 %v4048
        %4245 = vmatpush.bf16.msra.mxu0 %v4044
        %4246 = vmatpush.bf16.msra.mxu0 %v4040
        %4247 = vmatmul.bf16.gmra.mxu0 %v3421
        %v4248 = vpop.f32.mrf.mxu0
        %v4249 = vadd.f32 %v4236, %v4248
        %v4250 = vpop.f32.mrf.mxu0
        %4251 = vdwg.mxu0
        %4252 = vmatpush.bf16.msra.mxu0 %v3973
        %4253 = vmatpush.bf16.msra.mxu0 %v3969
        %4254 = vmatpush.bf16.msra.mxu0 %v3965
        %4255 = vmatpush.bf16.msra.mxu0 %v3961
        %4256 = vmatpush.bf16.msra.mxu0 %v3957
        %4257 = vmatpush.bf16.msra.mxu0 %v3953
        %4258 = vmatpush.bf16.msra.mxu0 %v3949
        %4259 = vmatpush.bf16.msra.mxu0 %v3945
        %4260 = vmatmul.bf16.gmra.mxu0 %v3418
        %v4261 = vpop.f32.mrf.mxu0
        %v4262 = vadd.f32 %v3553, %v4261
        %v4263 = vpop.f32.mrf.mxu0
        %4264 = vdwg.mxu0
        %4265 = vmatpush.bf16.msra.mxu0 %v4005
        %4266 = vmatpush.bf16.msra.mxu0 %v4001
        %4267 = vmatpush.bf16.msra.mxu0 %v3997
        %4268 = vmatpush.bf16.msra.mxu0 %v3993
        %4269 = vmatpush.bf16.msra.mxu0 %v3989
        %4270 = vmatpush.bf16.msra.mxu0 %v3985
        %4271 = vmatpush.bf16.msra.mxu0 %v3981
        %4272 = vmatpush.bf16.msra.mxu0 %v3977
        %4273 = vmatmul.bf16.gmra.mxu0 %v3419
        %v4274 = vpop.f32.mrf.mxu0
        %v4275 = vadd.f32 %v4262, %v4274
        %v4276 = vpop.f32.mrf.mxu0
        %4277 = vdwg.mxu0
        %4278 = vmatpush.bf16.msra.mxu0 %v4037
        %4279 = vmatpush.bf16.msra.mxu0 %v4033
        %4280 = vmatpush.bf16.msra.mxu0 %v4029
        %4281 = vmatpush.bf16.msra.mxu0 %v4025
        %4282 = vmatpush.bf16.msra.mxu0 %v4021
        %4283 = vmatpush.bf16.msra.mxu0 %v4017
        %4284 = vmatpush.bf16.msra.mxu0 %v4013
        %4285 = vmatpush.bf16.msra.mxu0 %v4009
        %4286 = vmatmul.bf16.gmra.mxu0 %v3420
        %v4287 = vpop.f32.mrf.mxu0
        %v4288 = vadd.f32 %v4275, %v4287
        %v4289 = vpop.f32.mrf.mxu0
        %4290 = vdwg.mxu0
        %4291 = vmatpush.bf16.msra.mxu0 %v4069
        %4292 = vmatpush.bf16.msra.mxu0 %v4065
        %4293 = vmatpush.bf16.msra.mxu0 %v4061
        %4294 = vmatpush.bf16.msra.mxu0 %v4057
        %4295 = vmatpush.bf16.msra.mxu0 %v4053
        %4296 = vmatpush.bf16.msra.mxu0 %v4049
        %4297 = vmatpush.bf16.msra.mxu0 %v4045
        %4298 = vmatpush.bf16.msra.mxu0 %v4041
        %4299 = vmatmul.bf16.gmra.mxu0 %v3421
        %v4300 = vpop.f32.mrf.mxu0
        %v4301 = vadd.f32 %v4288, %v4300
        %v4302 = vpop.f32.mrf.mxu0
        %4303 = vdwg.mxu0
        %4304 = vmatpush.bf16.msra.mxu0 %v3974
        %4305 = vmatpush.bf16.msra.mxu0 %v3970
        %4306 = vmatpush.bf16.msra.mxu0 %v3966
        %4307 = vmatpush.bf16.msra.mxu0 %v3962
        %4308 = vmatpush.bf16.msra.mxu0 %v3958
        %4309 = vmatpush.bf16.msra.mxu0 %v3954
        %4310 = vmatpush.bf16.msra.mxu0 %v3950
        %4311 = vmatpush.bf16.msra.mxu0 %v3946
        %4312 = vmatmul.bf16.gmra.mxu0 %v3418
        %v4313 = vpop.f32.mrf.mxu0
        %v4314 = vadd.f32 %v3554, %v4313
        %v4315 = vpop.f32.mrf.mxu0
        %4316 = vdwg.mxu0
        %4317 = vmatpush.bf16.msra.mxu0 %v4006
        %4318 = vmatpush.bf16.msra.mxu0 %v4002
        %4319 = vmatpush.bf16.msra.mxu0 %v3998
        %4320 = vmatpush.bf16.msra.mxu0 %v3994
        %4321 = vmatpush.bf16.msra.mxu0 %v3990
        %4322 = vmatpush.bf16.msra.mxu0 %v3986
        %4323 = vmatpush.bf16.msra.mxu0 %v3982
        %4324 = vmatpush.bf16.msra.mxu0 %v3978
        %4325 = vmatmul.bf16.gmra.mxu0 %v3419
        %v4326 = vpop.f32.mrf.mxu0
        %v4327 = vadd.f32 %v4314, %v4326
        %v4328 = vpop.f32.mrf.mxu0
        %4329 = vdwg.mxu0
        %4330 = vmatpush.bf16.msra.mxu0 %v4038
        %4331 = vmatpush.bf16.msra.mxu0 %v4034
        %4332 = vmatpush.bf16.msra.mxu0 %v4030
        %4333 = vmatpush.bf16.msra.mxu0 %v4026
        %4334 = vmatpush.bf16.msra.mxu0 %v4022
        %4335 = vmatpush.bf16.msra.mxu0 %v4018
        %4336 = vmatpush.bf16.msra.mxu0 %v4014
        %4337 = vmatpush.bf16.msra.mxu0 %v4010
        %4338 = vmatmul.bf16.gmra.mxu0 %v3420
        %v4339 = vpop.f32.mrf.mxu0
        %v4340 = vadd.f32 %v4327, %v4339
        %v4341 = vpop.f32.mrf.mxu0
        %4342 = vdwg.mxu0
        %4343 = vmatpush.bf16.msra.mxu0 %v4070
        %4344 = vmatpush.bf16.msra.mxu0 %v4066
        %4345 = vmatpush.bf16.msra.mxu0 %v4062
        %4346 = vmatpush.bf16.msra.mxu0 %v4058
        %4347 = vmatpush.bf16.msra.mxu0 %v4054
        %4348 = vmatpush.bf16.msra.mxu0 %v4050
        %4349 = vmatpush.bf16.msra.mxu0 %v4046
        %4350 = vmatpush.bf16.msra.mxu0 %v4042
        %4351 = vmatmul.bf16.gmra.mxu0 %v3421
        %v4352 = vpop.f32.mrf.mxu0
        %v4353 = vadd.f32 %v4340, %v4352
        %v4354 = vpop.f32.mrf.mxu0
        %4355 = vdwg.mxu0
        %4356 = vmatpush.bf16.msra.mxu0 %v3975
        %4357 = vmatpush.bf16.msra.mxu0 %v3971
        %4358 = vmatpush.bf16.msra.mxu0 %v3967
        %4359 = vmatpush.bf16.msra.mxu0 %v3963
        %4360 = vmatpush.bf16.msra.mxu0 %v3959
        %4361 = vmatpush.bf16.msra.mxu0 %v3955
        %4362 = vmatpush.bf16.msra.mxu0 %v3951
        %4363 = vmatpush.bf16.msra.mxu0 %v3947
        %4364 = vmatmul.bf16.gmra.mxu0 %v3418
        %v4365 = vpop.f32.mrf.mxu0
        %v4366 = vadd.f32 %v3555, %v4365
        %v4367 = vpop.f32.mrf.mxu0
        %4368 = vdwg.mxu0
        %4369 = vmatpush.bf16.msra.mxu0 %v4007
        %4370 = vmatpush.bf16.msra.mxu0 %v4003
        %4371 = vmatpush.bf16.msra.mxu0 %v3999
        %4372 = vmatpush.bf16.msra.mxu0 %v3995
        %4373 = vmatpush.bf16.msra.mxu0 %v3991
        %4374 = vmatpush.bf16.msra.mxu0 %v3987
        %4375 = vmatpush.bf16.msra.mxu0 %v3983
        %4376 = vmatpush.bf16.msra.mxu0 %v3979
        %4377 = vmatmul.bf16.gmra.mxu0 %v3419
        %v4378 = vpop.f32.mrf.mxu0
        %v4379 = vadd.f32 %v4366, %v4378
        %v4380 = vpop.f32.mrf.mxu0
        %4381 = vdwg.mxu0
        %4382 = vmatpush.bf16.msra.mxu0 %v4039
        %4383 = vmatpush.bf16.msra.mxu0 %v4035
        %4384 = vmatpush.bf16.msra.mxu0 %v4031
        %4385 = vmatpush.bf16.msra.mxu0 %v4027
        %4386 = vmatpush.bf16.msra.mxu0 %v4023
        %4387 = vmatpush.bf16.msra.mxu0 %v4019
        %4388 = vmatpush.bf16.msra.mxu0 %v4015
        %4389 = vmatpush.bf16.msra.mxu0 %v4011
        %4390 = vmatmul.bf16.gmra.mxu0 %v3420
        %v4391 = vpop.f32.mrf.mxu0
        %v4392 = vadd.f32 %v4379, %v4391
        %v4393 = vpop.f32.mrf.mxu0
        %4394 = vdwg.mxu0
        %4395 = vmatpush.bf16.msra.mxu0 %v4071
        %4396 = vmatpush.bf16.msra.mxu0 %v4067
        %4397 = vmatpush.bf16.msra.mxu0 %v4063
        %4398 = vmatpush.bf16.msra.mxu0 %v4059
        %4399 = vmatpush.bf16.msra.mxu0 %v4055
        %4400 = vmatpush.bf16.msra.mxu0 %v4051
        %4401 = vmatpush.bf16.msra.mxu0 %v4047
        %4402 = vmatpush.bf16.msra.mxu0 %v4043
        %4403 = vmatmul.bf16.gmra.mxu0 %v3421
        %v4404 = vpop.f32.mrf.mxu0
        %v4405 = vadd.f32 %v4392, %v4404
        %v4406 = vpop.f32.mrf.mxu0
        %4407 = vdwg.mxu0
        %v4408 = vld [vmem:[%s11] sm:$0xf]
        %v4409 = vld [vmem:[%s12] sm:$0xf]
        %v4410 = vadd.f32 %v4249, %v4301
        %v4411 = vadd.f32 %v4410, %v4353
        %v4412 = vadd.f32 %v4411, %v4405
        %4413 = vadd.xlane.f32.xlu0 %v4412
        %v4414 = vpop.xlane.xlu0 %4413
        %v4415 = vmul.f32 %v4249, %v4249
        %v4416 = vmul.f32 %v4301, %v4301
        %v4417 = vmul.f32 %v4353, %v4353
        %v4418 = vmul.f32 %v4405, %v4405
        %v4419 = vadd.f32 %v4415, %v4416
        %v4420 = vadd.f32 %v4419, %v4417
        %v4421 = vadd.f32 %v4420, %v4418
        %4422 = vadd.xlane.f32.xlu0 %v4421
        %v4423 = vpop.xlane.xlu0 %4422
        %v4424 = vmul.f32 %v4414, 0.001953125
        %v4425 = vmul.f32 %v4423, 0.001953125
        %v4426 = vmul.f32 %v4424, %v4424
        %v4427 = vsub.f32 %v4425, %v4426
        %v4428 = vadd.f32 %v4427, 1e-05
        %v4429 = vrsqrt.pop %v4428
        %v4430 = vmul.f32 %v4429, %v4428
        %v4431 = vmul.f32 %v4430, %v4429
        %v4432 = vmul.f32 0.5, %v4431
        %v4433 = vsub.f32 1.5, %v4432
        %v4434 = vmul.f32 %v4429, %v4433
        %vm4435 = vweird.f32 %v4428
        %vm4436 = vweird.f32 %v4429
        %vm4437 = vmor %vm4435, %vm4436
        %v4438 = vsel %vm4437, %v4429, %v4434
        %v4439 = vsub.f32 %v4249, %v4424
        %v4440 = vsub.f32 %v4301, %v4424
        %v4441 = vsub.f32 %v4353, %v4424
        %v4442 = vsub.f32 %v4405, %v4424
        %v4443 = vmul.f32 %v4439, %v4438
        %v4444 = vmul.f32 %v4440, %v4438
        %v4445 = vmul.f32 %v4441, %v4438
        %v4446 = vmul.f32 %v4442, %v4438
        %v4448 = vperm.slane %v4408, 0
        %v4449 = vperm.slane %v4408, 1
        %v4450 = vperm.slane %v4408, 2
        %v4451 = vperm.slane %v4408, 3
        %v4456 = vmul.f32 %v4443, %v4448
        %v4457 = vmul.f32 %v4444, %v4449
        %v4458 = vmul.f32 %v4445, %v4450
        %v4459 = vmul.f32 %v4446, %v4451
        %v4461 = vperm.slane %v4409, 0
        %v4462 = vperm.slane %v4409, 1
        %v4463 = vperm.slane %v4409, 2
        %v4464 = vperm.slane %v4409, 3
        %v4469 = vadd.f32 %v4456, %v4461
        %v4470 = vadd.f32 %v4457, %v4462
        %v4471 = vadd.f32 %v4458, %v4463
        %v4472 = vadd.f32 %v4459, %v4464
        %v4473 = vmax.f32 %v4469, 0.0
        %v4474 = vmax.f32 %v4470, 0.0
        %v4475 = vmax.f32 %v4471, 0.0
        %v4476 = vmax.f32 %v4472, 0.0
        %v4477 = vpack.c.bf16 %v4473, %v4473
        %v4478 = vpack.c.bf16 %v4474, %v4474
        %v4479 = vpack.c.bf16 %v4475, %v4475
        %v4480 = vpack.c.bf16 %v4476, %v4476
        %v4481 = vld [vmem:[%s13] sm:$0xf]
        %v4482 = vld [vmem:[%s13 + $0x4] sm:$0xf]
        %v4483 = vld [vmem:[%s13 + $0x8] sm:$0xf]
        %v4484 = vld [vmem:[%s13 + $0xc] sm:$0xf]
        %v4485 = vld [vmem:[%s13 + $0x10] sm:$0xf]
        %v4486 = vld [vmem:[%s13 + $0x14] sm:$0xf]
        %v4487 = vld [vmem:[%s13 + $0x18] sm:$0xf]
        %v4488 = vld [vmem:[%s13 + $0x1c] sm:$0xf]
        %v4489 = vld [vmem:[%s13 + $0x20] sm:$0xf]
        %v4490 = vld [vmem:[%s13 + $0x24] sm:$0xf]
        %v4491 = vld [vmem:[%s13 + $0x28] sm:$0xf]
        %v4492 = vld [vmem:[%s13 + $0x2c] sm:$0xf]
        %v4493 = vld [vmem:[%s13 + $0x30] sm:$0xf]
        %v4494 = vld [vmem:[%s13 + $0x34] sm:$0xf]
        %v4495 = vld [vmem:[%s13 + $0x38] sm:$0xf]
        %v4496 = vld [vmem:[%s13 + $0x3c] sm:$0xf]
        %v4497 = vld [vmem:[%s13 + $0x40] sm:$0xf]
        %v4498 = vld [vmem:[%s13 + $0x44] sm:$0xf]
        %v4499 = vld [vmem:[%s13 + $0x48] sm:$0xf]
        %v4500 = vld [vmem:[%s13 + $0x4c] sm:$0xf]
        %v4501 = vld [vmem:[%s13 + $0x50] sm:$0xf]
        %v4502 = vld [vmem:[%s13 + $0x54] sm:$0xf]
        %v4503 = vld [vmem:[%s13 + $0x58] sm:$0xf]
        %v4504 = vld [vmem:[%s13 + $0x5c] sm:$0xf]
        %v4505 = vld [vmem:[%s13 + $0x60] sm:$0xf]
        %v4506 = vld [vmem:[%s13 + $0x64] sm:$0xf]
        %v4507 = vld [vmem:[%s13 + $0x68] sm:$0xf]
        %v4508 = vld [vmem:[%s13 + $0x6c] sm:$0xf]
        %v4509 = vld [vmem:[%s13 + $0x70] sm:$0xf]
        %v4510 = vld [vmem:[%s13 + $0x74] sm:$0xf]
        %v4511 = vld [vmem:[%s13 + $0x78] sm:$0xf]
        %v4512 = vld [vmem:[%s13 + $0x7c] sm:$0xf]
        %v4513 = vld [vmem:[%s13 + $0x80] sm:$0xf]
        %v4514 = vld [vmem:[%s13 + $0x84] sm:$0xf]
        %v4515 = vld [vmem:[%s13 + $0x88] sm:$0xf]
        %v4516 = vld [vmem:[%s13 + $0x8c] sm:$0xf]
        %v4517 = vld [vmem:[%s13 + $0x90] sm:$0xf]
        %v4518 = vld [vmem:[%s13 + $0x94] sm:$0xf]
        %v4519 = vld [vmem:[%s13 + $0x98] sm:$0xf]
        %v4520 = vld [vmem:[%s13 + $0x9c] sm:$0xf]
        %v4521 = vld [vmem:[%s13 + $0xa0] sm:$0xf]
        %v4522 = vld [vmem:[%s13 + $0xa4] sm:$0xf]
        %v4523 = vld [vmem:[%s13 + $0xa8] sm:$0xf]
        %v4524 = vld [vmem:[%s13 + $0xac] sm:$0xf]
        %v4525 = vld [vmem:[%s13 + $0xb0] sm:$0xf]
        %v4526 = vld [vmem:[%s13 + $0xb4] sm:$0xf]
        %v4527 = vld [vmem:[%s13 + $0xb8] sm:$0xf]
        %v4528 = vld [vmem:[%s13 + $0xbc] sm:$0xf]
        %v4529 = vld [vmem:[%s13 + $0xc0] sm:$0xf]
        %v4530 = vld [vmem:[%s13 + $0xc4] sm:$0xf]
        %v4531 = vld [vmem:[%s13 + $0xc8] sm:$0xf]
        %v4532 = vld [vmem:[%s13 + $0xcc] sm:$0xf]
        %v4533 = vld [vmem:[%s13 + $0xd0] sm:$0xf]
        %v4534 = vld [vmem:[%s13 + $0xd4] sm:$0xf]
        %v4535 = vld [vmem:[%s13 + $0xd8] sm:$0xf]
        %v4536 = vld [vmem:[%s13 + $0xdc] sm:$0xf]
        %v4537 = vld [vmem:[%s13 + $0xe0] sm:$0xf]
        %v4538 = vld [vmem:[%s13 + $0xe4] sm:$0xf]
        %v4539 = vld [vmem:[%s13 + $0xe8] sm:$0xf]
        %v4540 = vld [vmem:[%s13 + $0xec] sm:$0xf]
        %v4541 = vld [vmem:[%s13 + $0xf0] sm:$0xf]
        %v4542 = vld [vmem:[%s13 + $0xf4] sm:$0xf]
        %v4543 = vld [vmem:[%s13 + $0xf8] sm:$0xf]
        %v4544 = vld [vmem:[%s13 + $0xfc] sm:$0xf]
        %v4545 = vld [vmem:[%s14] sm:$0x1]
        %v4547 = vperm.slane %v4545, 0
        %v4613 = vunpack.c.l.b16 %v4481
        %v4614 = vunpack.c.l.b16 %v4482
        %v4615 = vunpack.c.l.b16 %v4483
        %v4616 = vunpack.c.l.b16 %v4484
        %v4617 = vunpack.c.l.b16 %v4485
        %v4618 = vunpack.c.l.b16 %v4486
        %v4619 = vunpack.c.l.b16 %v4487
        %v4620 = vunpack.c.l.b16 %v4488
        %v4621 = vunpack.c.l.b16 %v4489
        %v4622 = vunpack.c.l.b16 %v4490
        %v4623 = vunpack.c.l.b16 %v4491
        %v4624 = vunpack.c.l.b16 %v4492
        %v4625 = vunpack.c.l.b16 %v4493
        %v4626 = vunpack.c.l.b16 %v4494
        %v4627 = vunpack.c.l.b16 %v4495
        %v4628 = vunpack.c.l.b16 %v4496
        %v4629 = vunpack.c.l.b16 %v4497
        %v4630 = vunpack.c.l.b16 %v4498
        %v4631 = vunpack.c.l.b16 %v4499
        %v4632 = vunpack.c.l.b16 %v4500
        %v4633 = vunpack.c.l.b16 %v4501
        %v4634 = vunpack.c.l.b16 %v4502
        %v4635 = vunpack.c.l.b16 %v4503
        %v4636 = vunpack.c.l.b16 %v4504
        %v4637 = vunpack.c.l.b16 %v4505
        %v4638 = vunpack.c.l.b16 %v4506
        %v4639 = vunpack.c.l.b16 %v4507
        %v4640 = vunpack.c.l.b16 %v4508
        %v4641 = vunpack.c.l.b16 %v4509
        %v4642 = vunpack.c.l.b16 %v4510
        %v4643 = vunpack.c.l.b16 %v4511
        %v4644 = vunpack.c.l.b16 %v4512
        %v4645 = vunpack.c.l.b16 %v4513
        %v4646 = vunpack.c.l.b16 %v4514
        %v4647 = vunpack.c.l.b16 %v4515
        %v4648 = vunpack.c.l.b16 %v4516
        %v4649 = vunpack.c.l.b16 %v4517
        %v4650 = vunpack.c.l.b16 %v4518
        %v4651 = vunpack.c.l.b16 %v4519
        %v4652 = vunpack.c.l.b16 %v4520
        %v4653 = vunpack.c.l.b16 %v4521
        %v4654 = vunpack.c.l.b16 %v4522
        %v4655 = vunpack.c.l.b16 %v4523
        %v4656 = vunpack.c.l.b16 %v4524
        %v4657 = vunpack.c.l.b16 %v4525
        %v4658 = vunpack.c.l.b16 %v4526
        %v4659 = vunpack.c.l.b16 %v4527
        %v4660 = vunpack.c.l.b16 %v4528
        %v4661 = vunpack.c.l.b16 %v4529
        %v4662 = vunpack.c.l.b16 %v4530
        %v4663 = vunpack.c.l.b16 %v4531
        %v4664 = vunpack.c.l.b16 %v4532
        %v4665 = vunpack.c.l.b16 %v4533
        %v4666 = vunpack.c.l.b16 %v4534
        %v4667 = vunpack.c.l.b16 %v4535
        %v4668 = vunpack.c.l.b16 %v4536
        %v4669 = vunpack.c.l.b16 %v4537
        %v4670 = vunpack.c.l.b16 %v4538
        %v4671 = vunpack.c.l.b16 %v4539
        %v4672 = vunpack.c.l.b16 %v4540
        %v4673 = vunpack.c.l.b16 %v4541
        %v4674 = vunpack.c.l.b16 %v4542
        %v4675 = vunpack.c.l.b16 %v4543
        %v4676 = vunpack.c.l.b16 %v4544
        %v4677 = vpack.c.b16 %v4614, %v4613
        %v4678 = vpack.c.b16 %v4616, %v4615
        %v4679 = vpack.c.b16 %v4618, %v4617
        %v4680 = vpack.c.b16 %v4620, %v4619
        %v4681 = vpack.c.b16 %v4622, %v4621
        %v4682 = vpack.c.b16 %v4624, %v4623
        %v4683 = vpack.c.b16 %v4626, %v4625
        %v4684 = vpack.c.b16 %v4628, %v4627
        %v4685 = vpack.c.b16 %v4630, %v4629
        %v4686 = vpack.c.b16 %v4632, %v4631
        %v4687 = vpack.c.b16 %v4634, %v4633
        %v4688 = vpack.c.b16 %v4636, %v4635
        %v4689 = vpack.c.b16 %v4638, %v4637
        %v4690 = vpack.c.b16 %v4640, %v4639
        %v4691 = vpack.c.b16 %v4642, %v4641
        %v4692 = vpack.c.b16 %v4644, %v4643
        %v4693 = vpack.c.b16 %v4646, %v4645
        %v4694 = vpack.c.b16 %v4648, %v4647
        %v4695 = vpack.c.b16 %v4650, %v4649
        %v4696 = vpack.c.b16 %v4652, %v4651
        %v4697 = vpack.c.b16 %v4654, %v4653
        %v4698 = vpack.c.b16 %v4656, %v4655
        %v4699 = vpack.c.b16 %v4658, %v4657
        %v4700 = vpack.c.b16 %v4660, %v4659
        %v4701 = vpack.c.b16 %v4662, %v4661
        %v4702 = vpack.c.b16 %v4664, %v4663
        %v4703 = vpack.c.b16 %v4666, %v4665
        %v4704 = vpack.c.b16 %v4668, %v4667
        %v4705 = vpack.c.b16 %v4670, %v4669
        %v4706 = vpack.c.b16 %v4672, %v4671
        %v4707 = vpack.c.b16 %v4674, %v4673
        %v4708 = vpack.c.b16 %v4676, %v4675
        %4741 = vmatpush.bf16.msra.mxu0 %v4684
        %4742 = vmatpush.bf16.msra.mxu0 %v4683
        %4743 = vmatpush.bf16.msra.mxu0 %v4682
        %4744 = vmatpush.bf16.msra.mxu0 %v4681
        %4745 = vmatpush.bf16.msra.mxu0 %v4680
        %4746 = vmatpush.bf16.msra.mxu0 %v4679
        %4747 = vmatpush.bf16.msra.mxu0 %v4678
        %4748 = vmatpush.bf16.msra.mxu0 %v4677
        %4749 = vmatmul.bf16.gmra.mxu0 %v4477
        %v4750 = vpop.f32.mrf.mxu0
        %v4751 = vadd.f32 %v4547, %v4750
        %v4752 = vpop.f32.mrf.mxu0
        %4753 = vdwg.mxu0
        %4754 = vmatpush.bf16.msra.mxu0 %v4692
        %4755 = vmatpush.bf16.msra.mxu0 %v4691
        %4756 = vmatpush.bf16.msra.mxu0 %v4690
        %4757 = vmatpush.bf16.msra.mxu0 %v4689
        %4758 = vmatpush.bf16.msra.mxu0 %v4688
        %4759 = vmatpush.bf16.msra.mxu0 %v4687
        %4760 = vmatpush.bf16.msra.mxu0 %v4686
        %4761 = vmatpush.bf16.msra.mxu0 %v4685
        %4762 = vmatmul.bf16.gmra.mxu0 %v4478
        %v4763 = vpop.f32.mrf.mxu0
        %v4764 = vadd.f32 %v4751, %v4763
        %v4765 = vpop.f32.mrf.mxu0
        %4766 = vdwg.mxu0
        %4767 = vmatpush.bf16.msra.mxu0 %v4700
        %4768 = vmatpush.bf16.msra.mxu0 %v4699
        %4769 = vmatpush.bf16.msra.mxu0 %v4698
        %4770 = vmatpush.bf16.msra.mxu0 %v4697
        %4771 = vmatpush.bf16.msra.mxu0 %v4696
        %4772 = vmatpush.bf16.msra.mxu0 %v4695
        %4773 = vmatpush.bf16.msra.mxu0 %v4694
        %4774 = vmatpush.bf16.msra.mxu0 %v4693
        %4775 = vmatmul.bf16.gmra.mxu0 %v4479
        %v4776 = vpop.f32.mrf.mxu0
        %v4777 = vadd.f32 %v4764, %v4776
        %v4778 = vpop.f32.mrf.mxu0
        %4779 = vdwg.mxu0
        %4780 = vmatpush.bf16.msra.mxu0 %v4708
        %4781 = vmatpush.bf16.msra.mxu0 %v4707
        %4782 = vmatpush.bf16.msra.mxu0 %v4706
        %4783 = vmatpush.bf16.msra.mxu0 %v4705
        %4784 = vmatpush.bf16.msra.mxu0 %v4704
        %4785 = vmatpush.bf16.msra.mxu0 %v4703
        %4786 = vmatpush.bf16.msra.mxu0 %v4702
        %4787 = vmatpush.bf16.msra.mxu0 %v4701
        %4788 = vmatmul.bf16.gmra.mxu0 %v4480
        %v4789 = vpop.f32.mrf.mxu0
        %v4790 = vadd.f32 %v4777, %v4789
        %v4791 = vpop.f32.mrf.mxu0
        %4792 = vdwg.mxu0
        %4793 = vst [vmem:[%s537] sm:$0xff] %v4790
        %s4794 = sand.u32 %s359, 1
        %s4795 = scalar_lea.sflag [#allocation4], %s4794
        %s4796 = sand.u32 %s359, 1
        %s4797 = smul.addr %s4796, 8
        %s4798 = scalar_lea.vmem [#allocation8], %s4797
        // Predicated region
        $region93: #{_mlp_pallas.1} parent=79 // pred_check
          %p4799 = pneg %p369
        $region94: #{_mlp_pallas.1} parent=79 // pred_check_branch
          %4801 = sbr.rel (%p4799) target = $region96
        $region95: #{_mlp_pallas.1} parent=79 // pred_region
          %4803 = vsyncadd %s4795, 0
          %s4804 = smul.addr %s31, 8
          %s4805 = scalar_lea.hbm %s15, %s4804
          %s4807 = sshll.u32 %s4798, 4
          %s4808 = int_to_ptr.vmem [resolvable:$true] %s4807
          %s4809 = sshll.u32 %s4805, 4
          %s4810 = int_to_ptr.hbm [resolvable:$true] %s4809
          %4812 = dma.vmem_to_hbm [thread:$0]  %s4808, 128, %s4810, %s4795
        $region96: #{_mlp_pallas.1} parent=79 // pred_fallthru
          _
      $region80: #{_mlp_pallas.1} parent=5 // pred_fallthru
        _
      %p4813 = scmp.le.s32.totalorder 2, %s26
      // Predicated region
      $region97: #{_mlp_pallas.1} parent=5 // pred_check
        %p4814 = pneg %p4813
      $region98: #{_mlp_pallas.1} parent=5 // pred_check_branch
        %4816 = sbr.rel (%p4814) target = $region100
      $region99: #{_mlp_pallas.1} parent=5 // pred_region
        %s4817 = ssub.s32 %s26, 2
        // Predicated region
        $region101: #{_mlp_pallas.1} parent=99 // pred_check
          %p4818 = pneg %p375
        $region102: #{_mlp_pallas.1} parent=99 // pred_check_branch
          %4820 = sbr.rel (%p4818) target = $region104
        $region103: #{_mlp_pallas.1} parent=99 // pred_region
          %s4821 = sand.u32 %s360, 1
          %s4822 = scalar_lea.sflag [#allocation4], %s4821
          %s4823 = sand.u32 %s360, 1
          %s4824 = smul.addr %s4823, 8
          %s4825 = scalar_lea.vmem [#allocation8], %s4824
          %4827 = dma.done %s4822, 128
        $region104: #{_mlp_pallas.1} parent=99 // pred_fallthru
          _
      $region100: #{_mlp_pallas.1} parent=5 // pred_fallthru
        _
    $region6: #{_mlp_pallas.1} parent=1 // loop_footer
      %s30 = sadd.s32 1, %s26
    $region7: #{_mlp_pallas.1} parent=1 // loop_footer_branch
      %25 = sbr.rel target = $region3
    $region8: #{_mlp_pallas.1} parent=1 // loop_exit
      _
    %4828 = vsyncpa [#allocation3], 1
    %s4829 = scalar_lea.sflag [#allocation3], 1
    %4830 = vsyncpa %s4829, 1
    %4831 = vsyncpa [#allocation6], 1
    %4832 = vsyncpa [#allocation4], 1
    %s4833 = scalar_lea.sflag [#allocation4], 1
    %4834 = vsyncpa %s4833, 1

</llo_original>
